<compile_context>
chip_gen: v5e
topology: v5e:2x2
jax: 0.10.0
libtpu: 0.0.40
codegen_flags: <defaults>
</compile_context>

<pallas_src>
import functools

import jax
import jax.numpy as jnp
from jax.experimental import pallas as pl
from jax.experimental.pallas import tpu as pltpu


def _group_conv2d_kernel(x_ref, w_ref, o_ref, *, KH, KW, Cin_g, Cout_g, OH, OW):
    # x_ref: (1, Cin_g, H, W, Gp)        -- one batch element, groups on lanes
    # w_ref: (KH, KW, Cout_g, Cin_g, Gp) -- per-group filter taps, groups on lanes
    # o_ref: (1, Cout_g, OH, OW, Gp)
    Gp = o_ref.shape[-1]
    for co in range(Cout_g):
        acc = jnp.zeros((OH, OW, Gp), jnp.float32)
        for ci in range(Cin_g):
            for kh in range(KH):
                for kw in range(KW):
                    # Shifted input window, full-lane load (groups on lanes).
                    xs = x_ref[0, ci, pl.ds(kh, OH), pl.ds(kw, OW), :]
                    # One weight per group for this (co, ci, kh, kw) tap.
                    wv = w_ref[kh, kw, co, ci, :]
                    acc = acc + wv.astype(jnp.float32) * xs.astype(jnp.float32)
        o_ref[0, co, :, :, :] = acc.astype(o_ref.dtype)


def group_conv2d_pallas(x_nchw, weight_g):
    """Grouped conv, stride 1, VALID padding, no bias.

    x_nchw:   (N, G*Cin_g, H, W)              float32, NCHW (PyTorch layout)
    weight_g: (G, Cout_g, Cin_g, KH, KW)      stacked per-group conv weights
    returns:  (N, G*Cout_g, OH, OW)           group-major channel order
    """
    N, C_in, H, W = x_nchw.shape
    G, Cout_g, Cin_g, KH, KW = weight_g.shape
    assert C_in == G * Cin_g, "in_channels must equal groups * in_channel_per_group"
    OH, OW = H - KH + 1, W - KW + 1

    # Pad the group (lane) axis up to a multiple of 128; padded groups are
    # all-zero and sliced off afterwards.  (G=512 in the SRN model -> no pad.)
    Gp = ((G + 127) // 128) * 128

    # NCHW -> (N, Cin_g, H, W, G): group axis last (lanes).  Channel c of the
    # input maps to (g, ci) = (c // Cin_g, c % Cin_g), exactly as torch.split.
    x5 = x_nchw.reshape(N, G, Cin_g, H, W).transpose(0, 2, 3, 4, 1)
    w5 = weight_g.transpose(3, 4, 1, 2, 0)  # (KH, KW, Cout_g, Cin_g, G)
    if Gp != G:
        x5 = jnp.pad(x5, ((0, 0),) * 4 + ((0, Gp - G),))
        w5 = jnp.pad(w5, ((0, 0),) * 4 + ((0, Gp - G),))

    kernel = functools.partial(
        _group_conv2d_kernel,
        KH=KH, KW=KW, Cin_g=Cin_g, Cout_g=Cout_g, OH=OH, OW=OW,
    )

    out5 = pl.pallas_call(
        kernel,
        out_shape=jax.ShapeDtypeStruct((N, Cout_g, OH, OW, Gp), x_nchw.dtype),
        grid_spec=pltpu.PrefetchScalarGridSpec(
            num_scalar_prefetch=0,
            grid=(N,),
            in_specs=[
                # One batch element per grid step; groups-on-lanes slab.
                pl.BlockSpec((1, Cin_g, H, W, Gp), lambda n: (n, 0, 0, 0, 0)),
                # Whole weight tensor, constant index map -> VMEM resident.
                pl.BlockSpec((KH, KW, Cout_g, Cin_g, Gp),
                             lambda n: (0, 0, 0, 0, 0)),
            ],
            out_specs=pl.BlockSpec((1, Cout_g, OH, OW, Gp),
                                   lambda n: (n, 0, 0, 0, 0)),
        ),
        compiler_params=pltpu.CompilerParams(
            dimension_semantics=("parallel",),
        ),
    )(x5, w5)

    if Gp != G:
        out5 = out5[..., :G]
    # (N, Cout_g, OH, OW, G) -> (N, G, Cout_g, OH, OW) -> (N, G*Cout_g, OH, OW)
    return out5.transpose(0, 4, 1, 2, 3).reshape(N, G * Cout_g, OH, OW)


def group_conv2d_forward(x_nchw, weight_g):
    """Equivalent of GroupConv2d.forward (weights stacked over the ModuleList)."""
    return group_conv2d_pallas(x_nchw, weight_g)


if __name__ == "__main__":
    # Small but representative shapes: groups=128 so the lane axis is exactly
    # one full 128-wide vreg row (the real module uses groups=512).
    N, H, W = 2, 16, 16
    groups = 128
    in_channels, out_channels = 256, 256       # Cin_g = Cout_g = 2
    kernel_size = 3
    Cin_g = in_channels // groups
    Cout_g = out_channels // groups

    key = jax.random.PRNGKey(0)
    kx, kw = jax.random.split(key)
    x = jax.random.normal(kx, (N, in_channels, H, W), dtype=jnp.float32)
    bound = 1.0 / jnp.sqrt(jnp.float32(Cin_g * kernel_size * kernel_size))
    weight = jax.random.uniform(
        kw, (groups, Cout_g, Cin_g, kernel_size, kernel_size),
        jnp.float32, -bound, bound)

    out = jax.jit(group_conv2d_forward)(x, weight)
    out = jax.block_until_ready(out)

    # Reference: XLA grouped convolution (same semantics as the per-group
    # Conv2d list + channel concat in the PyTorch module).
    ref = jax.lax.conv_general_dilated(
        x,
        weight.reshape(groups * Cout_g, Cin_g, kernel_size, kernel_size),
        window_strides=(1, 1),
        padding="VALID",
        feature_group_count=groups,
        dimension_numbers=("NCHW", "OIHW", "NCHW"),
    )

    OH = H - kernel_size + 1
    OW = W - kernel_size + 1
    assert out.shape == (N, out_channels, OH, OW)
    assert jnp.allclose(out, ref, atol=1e-4, rtol=1e-4)

    print("KERNEL_OK")
</pallas_src>

<mosaic_0001>
module attributes {stable_mosaic.version = 11 : i64} {
  func.func @_group_conv2d_kernel(%arg0: i32, %arg1: memref<1x2x16x16x128xf32, #tpu.memory_space<vmem>>, %arg2: memref<3x3x2x2x128xf32, #tpu.memory_space<vmem>>, %arg3: memref<1x2x14x14x128xf32, #tpu.memory_space<vmem>>) attributes {dimension_semantics = [#tpu.dimension_semantics<parallel>], iteration_bounds = array<i64: 2>, scalar_prefetch = 0 : i64, scratch_operands = 0 : i64, tpu.core_type = #tpu.core_type<tc>, window_params = [{transform_indices = @transform_0, window_bounds = array<i64: 1, 2, 16, 16, 128>}, {pipeline_mode = #tpu.pipeline_mode<synchronous>, transform_indices = @transform_1, window_bounds = array<i64: 3, 3, 2, 2, 128>}, {transform_indices = @transform_2, window_bounds = array<i64: 1, 2, 14, 14, 128>}]} {
    %cst = arith.constant 0.000000e+00 : f32
    %0 = vector.broadcast %cst : f32 to vector<14x14x128xf32>
    %c0 = arith.constant 0 : index
    %c0_0 = arith.constant 0 : index
    %c0_1 = arith.constant 0 : index
    %c0_2 = arith.constant 0 : index
    %c0_3 = arith.constant 0 : index
    %1 = vector.load %arg1[%c0, %c0_0, %c0_1, %c0_2, %c0_3] : memref<1x2x16x16x128xf32, #tpu.memory_space<vmem>>, vector<1x1x14x14x128xf32>
    %2 = vector.shape_cast %1 : vector<1x1x14x14x128xf32> to vector<14x14x128xf32>
    %c0_4 = arith.constant 0 : index
    %c0_5 = arith.constant 0 : index
    %c0_6 = arith.constant 0 : index
    %c0_7 = arith.constant 0 : index
    %c0_8 = arith.constant 0 : index
    %3 = vector.load %arg2[%c0_4, %c0_5, %c0_6, %c0_7, %c0_8] : memref<3x3x2x2x128xf32, #tpu.memory_space<vmem>>, vector<1x1x1x1x128xf32>
    %4 = vector.shape_cast %3 : vector<1x1x1x1x128xf32> to vector<128xf32>
    %5 = vector.shape_cast %4 : vector<128xf32> to vector<1x1x128xf32>
    %6 = vector.broadcast %5 : vector<1x1x128xf32> to vector<14x14x128xf32>
    %7 = arith.mulf %6, %2 : vector<14x14x128xf32>
    %8 = arith.addf %0, %7 : vector<14x14x128xf32>
    %c0_9 = arith.constant 0 : index
    %c0_10 = arith.constant 0 : index
    %c0_11 = arith.constant 0 : index
    %c1 = arith.constant 1 : index
    %c0_12 = arith.constant 0 : index
    %9 = vector.load %arg1[%c0_9, %c0_10, %c0_11, %c1, %c0_12] : memref<1x2x16x16x128xf32, #tpu.memory_space<vmem>>, vector<1x1x14x14x128xf32>
    %10 = vector.shape_cast %9 : vector<1x1x14x14x128xf32> to vector<14x14x128xf32>
    %c0_13 = arith.constant 0 : index
    %c1_14 = arith.constant 1 : index
    %c0_15 = arith.constant 0 : index
    %c0_16 = arith.constant 0 : index
    %c0_17 = arith.constant 0 : index
    %11 = vector.load %arg2[%c0_13, %c1_14, %c0_15, %c0_16, %c0_17] : memref<3x3x2x2x128xf32, #tpu.memory_space<vmem>>, vector<1x1x1x1x128xf32>
    %12 = vector.shape_cast %11 : vector<1x1x1x1x128xf32> to vector<128xf32>
    %13 = vector.shape_cast %12 : vector<128xf32> to vector<1x1x128xf32>
    %14 = vector.broadcast %13 : vector<1x1x128xf32> to vector<14x14x128xf32>
    %15 = arith.mulf %14, %10 : vector<14x14x128xf32>
    %16 = arith.addf %8, %15 : vector<14x14x128xf32>
    %c0_18 = arith.constant 0 : index
    %c0_19 = arith.constant 0 : index
    %c0_20 = arith.constant 0 : index
    %c2 = arith.constant 2 : index
    %c0_21 = arith.constant 0 : index
    %17 = vector.load %arg1[%c0_18, %c0_19, %c0_20, %c2, %c0_21] : memref<1x2x16x16x128xf32, #tpu.memory_space<vmem>>, vector<1x1x14x14x128xf32>
    %18 = vector.shape_cast %17 : vector<1x1x14x14x128xf32> to vector<14x14x128xf32>
    %c0_22 = arith.constant 0 : index
    %c2_23 = arith.constant 2 : index
    %c0_24 = arith.constant 0 : index
    %c0_25 = arith.constant 0 : index
    %c0_26 = arith.constant 0 : index
    %19 = vector.load %arg2[%c0_22, %c2_23, %c0_24, %c0_25, %c0_26] : memref<3x3x2x2x128xf32, #tpu.memory_space<vmem>>, vector<1x1x1x1x128xf32>
    %20 = vector.shape_cast %19 : vector<1x1x1x1x128xf32> to vector<128xf32>
    %21 = vector.shape_cast %20 : vector<128xf32> to vector<1x1x128xf32>
    %22 = vector.broadcast %21 : vector<1x1x128xf32> to vector<14x14x128xf32>
    %23 = arith.mulf %22, %18 : vector<14x14x128xf32>
    %24 = arith.addf %16, %23 : vector<14x14x128xf32>
    %c0_27 = arith.constant 0 : index
    %c0_28 = arith.constant 0 : index
    %c1_29 = arith.constant 1 : index
    %c0_30 = arith.constant 0 : index
    %c0_31 = arith.constant 0 : index
    %25 = vector.load %arg1[%c0_27, %c0_28, %c1_29, %c0_30, %c0_31] : memref<1x2x16x16x128xf32, #tpu.memory_space<vmem>>, vector<1x1x14x14x128xf32>
    %26 = vector.shape_cast %25 : vector<1x1x14x14x128xf32> to vector<14x14x128xf32>
    %c1_32 = arith.constant 1 : index
    %c0_33 = arith.constant 0 : index
    %c0_34 = arith.constant 0 : index
    %c0_35 = arith.constant 0 : index
    %c0_36 = arith.constant 0 : index
    %27 = vector.load %arg2[%c1_32, %c0_33, %c0_34, %c0_35, %c0_36] : memref<3x3x2x2x128xf32, #tpu.memory_space<vmem>>, vector<1x1x1x1x128xf32>
    %28 = vector.shape_cast %27 : vector<1x1x1x1x128xf32> to vector<128xf32>
    %29 = vector.shape_cast %28 : vector<128xf32> to vector<1x1x128xf32>
    %30 = vector.broadcast %29 : vector<1x1x128xf32> to vector<14x14x128xf32>
    %31 = arith.mulf %30, %26 : vector<14x14x128xf32>
    %32 = arith.addf %24, %31 : vector<14x14x128xf32>
    %c0_37 = arith.constant 0 : index
    %c0_38 = arith.constant 0 : index
    %c1_39 = arith.constant 1 : index
    %c1_40 = arith.constant 1 : index
    %c0_41 = arith.constant 0 : index
    %33 = vector.load %arg1[%c0_37, %c0_38, %c1_39, %c1_40, %c0_41] : memref<1x2x16x16x128xf32, #tpu.memory_space<vmem>>, vector<1x1x14x14x128xf32>
    %34 = vector.shape_cast %33 : vector<1x1x14x14x128xf32> to vector<14x14x128xf32>
    %c1_42 = arith.constant 1 : index
    %c1_43 = arith.constant 1 : index
    %c0_44 = arith.constant 0 : index
    %c0_45 = arith.constant 0 : index
    %c0_46 = arith.constant 0 : index
    %35 = vector.load %arg2[%c1_42, %c1_43, %c0_44, %c0_45, %c0_46] : memref<3x3x2x2x128xf32, #tpu.memory_space<vmem>>, vector<1x1x1x1x128xf32>
    %36 = vector.shape_cast %35 : vector<1x1x1x1x128xf32> to vector<128xf32>
    %37 = vector.shape_cast %36 : vector<128xf32> to vector<1x1x128xf32>
    %38 = vector.broadcast %37 : vector<1x1x128xf32> to vector<14x14x128xf32>
    %39 = arith.mulf %38, %34 : vector<14x14x128xf32>
    %40 = arith.addf %32, %39 : vector<14x14x128xf32>
    %c0_47 = arith.constant 0 : index
    %c0_48 = arith.constant 0 : index
    %c1_49 = arith.constant 1 : index
    %c2_50 = arith.constant 2 : index
    %c0_51 = arith.constant 0 : index
    %41 = vector.load %arg1[%c0_47, %c0_48, %c1_49, %c2_50, %c0_51] : memref<1x2x16x16x128xf32, #tpu.memory_space<vmem>>, vector<1x1x14x14x128xf32>
    %42 = vector.shape_cast %41 : vector<1x1x14x14x128xf32> to vector<14x14x128xf32>
    %c1_52 = arith.constant 1 : index
    %c2_53 = arith.constant 2 : index
    %c0_54 = arith.constant 0 : index
    %c0_55 = arith.constant 0 : index
    %c0_56 = arith.constant 0 : index
    %43 = vector.load %arg2[%c1_52, %c2_53, %c0_54, %c0_55, %c0_56] : memref<3x3x2x2x128xf32, #tpu.memory_space<vmem>>, vector<1x1x1x1x128xf32>
    %44 = vector.shape_cast %43 : vector<1x1x1x1x128xf32> to vector<128xf32>
    %45 = vector.shape_cast %44 : vector<128xf32> to vector<1x1x128xf32>
    %46 = vector.broadcast %45 : vector<1x1x128xf32> to vector<14x14x128xf32>
    %47 = arith.mulf %46, %42 : vector<14x14x128xf32>
    %48 = arith.addf %40, %47 : vector<14x14x128xf32>
    %c0_57 = arith.constant 0 : index
    %c0_58 = arith.constant 0 : index
    %c2_59 = arith.constant 2 : index
    %c0_60 = arith.constant 0 : index
    %c0_61 = arith.constant 0 : index
    %49 = vector.load %arg1[%c0_57, %c0_58, %c2_59, %c0_60, %c0_61] : memref<1x2x16x16x128xf32, #tpu.memory_space<vmem>>, vector<1x1x14x14x128xf32>
    %50 = vector.shape_cast %49 : vector<1x1x14x14x128xf32> to vector<14x14x128xf32>
    %c2_62 = arith.constant 2 : index
    %c0_63 = arith.constant 0 : index
    %c0_64 = arith.constant 0 : index
    %c0_65 = arith.constant 0 : index
    %c0_66 = arith.constant 0 : index
    %51 = vector.load %arg2[%c2_62, %c0_63, %c0_64, %c0_65, %c0_66] : memref<3x3x2x2x128xf32, #tpu.memory_space<vmem>>, vector<1x1x1x1x128xf32>
    %52 = vector.shape_cast %51 : vector<1x1x1x1x128xf32> to vector<128xf32>
    %53 = vector.shape_cast %52 : vector<128xf32> to vector<1x1x128xf32>
    %54 = vector.broadcast %53 : vector<1x1x128xf32> to vector<14x14x128xf32>
    %55 = arith.mulf %54, %50 : vector<14x14x128xf32>
    %56 = arith.addf %48, %55 : vector<14x14x128xf32>
    %c0_67 = arith.constant 0 : index
    %c0_68 = arith.constant 0 : index
    %c2_69 = arith.constant 2 : index
    %c1_70 = arith.constant 1 : index
    %c0_71 = arith.constant 0 : index
    %57 = vector.load %arg1[%c0_67, %c0_68, %c2_69, %c1_70, %c0_71] : memref<1x2x16x16x128xf32, #tpu.memory_space<vmem>>, vector<1x1x14x14x128xf32>
    %58 = vector.shape_cast %57 : vector<1x1x14x14x128xf32> to vector<14x14x128xf32>
    %c2_72 = arith.constant 2 : index
    %c1_73 = arith.constant 1 : index
    %c0_74 = arith.constant 0 : index
    %c0_75 = arith.constant 0 : index
    %c0_76 = arith.constant 0 : index
    %59 = vector.load %arg2[%c2_72, %c1_73, %c0_74, %c0_75, %c0_76] : memref<3x3x2x2x128xf32, #tpu.memory_space<vmem>>, vector<1x1x1x1x128xf32>
    %60 = vector.shape_cast %59 : vector<1x1x1x1x128xf32> to vector<128xf32>
    %61 = vector.shape_cast %60 : vector<128xf32> to vector<1x1x128xf32>
    %62 = vector.broadcast %61 : vector<1x1x128xf32> to vector<14x14x128xf32>
    %63 = arith.mulf %62, %58 : vector<14x14x128xf32>
    %64 = arith.addf %56, %63 : vector<14x14x128xf32>
    %c0_77 = arith.constant 0 : index
    %c0_78 = arith.constant 0 : index
    %c2_79 = arith.constant 2 : index
    %c2_80 = arith.constant 2 : index
    %c0_81 = arith.constant 0 : index
    %65 = vector.load %arg1[%c0_77, %c0_78, %c2_79, %c2_80, %c0_81] : memref<1x2x16x16x128xf32, #tpu.memory_space<vmem>>, vector<1x1x14x14x128xf32>
    %66 = vector.shape_cast %65 : vector<1x1x14x14x128xf32> to vector<14x14x128xf32>
    %c2_82 = arith.constant 2 : index
    %c2_83 = arith.constant 2 : index
    %c0_84 = arith.constant 0 : index
    %c0_85 = arith.constant 0 : index
    %c0_86 = arith.constant 0 : index
    %67 = vector.load %arg2[%c2_82, %c2_83, %c0_84, %c0_85, %c0_86] : memref<3x3x2x2x128xf32, #tpu.memory_space<vmem>>, vector<1x1x1x1x128xf32>
    %68 = vector.shape_cast %67 : vector<1x1x1x1x128xf32> to vector<128xf32>
    %69 = vector.shape_cast %68 : vector<128xf32> to vector<1x1x128xf32>
    %70 = vector.broadcast %69 : vector<1x1x128xf32> to vector<14x14x128xf32>
    %71 = arith.mulf %70, %66 : vector<14x14x128xf32>
    %72 = arith.addf %64, %71 : vector<14x14x128xf32>
    %c0_87 = arith.constant 0 : index
    %c1_88 = arith.constant 1 : index
    %c0_89 = arith.constant 0 : index
    %c0_90 = arith.constant 0 : index
    %c0_91 = arith.constant 0 : index
    %73 = vector.load %arg1[%c0_87, %c1_88, %c0_89, %c0_90, %c0_91] : memref<1x2x16x16x128xf32, #tpu.memory_space<vmem>>, vector<1x1x14x14x128xf32>
    %74 = vector.shape_cast %73 : vector<1x1x14x14x128xf32> to vector<14x14x128xf32>
    %c0_92 = arith.constant 0 : index
    %c0_93 = arith.constant 0 : index
    %c0_94 = arith.constant 0 : index
    %c1_95 = arith.constant 1 : index
    %c0_96 = arith.constant 0 : index
    %75 = vector.load %arg2[%c0_92, %c0_93, %c0_94, %c1_95, %c0_96] : memref<3x3x2x2x128xf32, #tpu.memory_space<vmem>>, vector<1x1x1x1x128xf32>
    %76 = vector.shape_cast %75 : vector<1x1x1x1x128xf32> to vector<128xf32>
    %77 = vector.shape_cast %76 : vector<128xf32> to vector<1x1x128xf32>
    %78 = vector.broadcast %77 : vector<1x1x128xf32> to vector<14x14x128xf32>
    %79 = arith.mulf %78, %74 : vector<14x14x128xf32>
    %80 = arith.addf %72, %79 : vector<14x14x128xf32>
    %c0_97 = arith.constant 0 : index
    %c1_98 = arith.constant 1 : index
    %c0_99 = arith.constant 0 : index
    %c1_100 = arith.constant 1 : index
    %c0_101 = arith.constant 0 : index
    %81 = vector.load %arg1[%c0_97, %c1_98, %c0_99, %c1_100, %c0_101] : memref<1x2x16x16x128xf32, #tpu.memory_space<vmem>>, vector<1x1x14x14x128xf32>
    %82 = vector.shape_cast %81 : vector<1x1x14x14x128xf32> to vector<14x14x128xf32>
    %c0_102 = arith.constant 0 : index
    %c1_103 = arith.constant 1 : index
    %c0_104 = arith.constant 0 : index
    %c1_105 = arith.constant 1 : index
    %c0_106 = arith.constant 0 : index
    %83 = vector.load %arg2[%c0_102, %c1_103, %c0_104, %c1_105, %c0_106] : memref<3x3x2x2x128xf32, #tpu.memory_space<vmem>>, vector<1x1x1x1x128xf32>
    %84 = vector.shape_cast %83 : vector<1x1x1x1x128xf32> to vector<128xf32>
    %85 = vector.shape_cast %84 : vector<128xf32> to vector<1x1x128xf32>
    %86 = vector.broadcast %85 : vector<1x1x128xf32> to vector<14x14x128xf32>
    %87 = arith.mulf %86, %82 : vector<14x14x128xf32>
    %88 = arith.addf %80, %87 : vector<14x14x128xf32>
    %c0_107 = arith.constant 0 : index
    %c1_108 = arith.constant 1 : index
    %c0_109 = arith.constant 0 : index
    %c2_110 = arith.constant 2 : index
    %c0_111 = arith.constant 0 : index
    %89 = vector.load %arg1[%c0_107, %c1_108, %c0_109, %c2_110, %c0_111] : memref<1x2x16x16x128xf32, #tpu.memory_space<vmem>>, vector<1x1x14x14x128xf32>
    %90 = vector.shape_cast %89 : vector<1x1x14x14x128xf32> to vector<14x14x128xf32>
    %c0_112 = arith.constant 0 : index
    %c2_113 = arith.constant 2 : index
    %c0_114 = arith.constant 0 : index
    %c1_115 = arith.constant 1 : index
    %c0_116 = arith.constant 0 : index
    %91 = vector.load %arg2[%c0_112, %c2_113, %c0_114, %c1_115, %c0_116] : memref<3x3x2x2x128xf32, #tpu.memory_space<vmem>>, vector<1x1x1x1x128xf32>
    %92 = vector.shape_cast %91 : vector<1x1x1x1x128xf32> to vector<128xf32>
    %93 = vector.shape_cast %92 : vector<128xf32> to vector<1x1x128xf32>
    %94 = vector.broadcast %93 : vector<1x1x128xf32> to vector<14x14x128xf32>
    %95 = arith.mulf %94, %90 : vector<14x14x128xf32>
    %96 = arith.addf %88, %95 : vector<14x14x128xf32>
    %c0_117 = arith.constant 0 : index
    %c1_118 = arith.constant 1 : index
    %c1_119 = arith.constant 1 : index
    %c0_120 = arith.constant 0 : index
    %c0_121 = arith.constant 0 : index
    %97 = vector.load %arg1[%c0_117, %c1_118, %c1_119, %c0_120, %c0_121] : memref<1x2x16x16x128xf32, #tpu.memory_space<vmem>>, vector<1x1x14x14x128xf32>
    %98 = vector.shape_cast %97 : vector<1x1x14x14x128xf32> to vector<14x14x128xf32>
    %c1_122 = arith.constant 1 : index
    %c0_123 = arith.constant 0 : index
    %c0_124 = arith.constant 0 : index
    %c1_125 = arith.constant 1 : index
    %c0_126 = arith.constant 0 : index
    %99 = vector.load %arg2[%c1_122, %c0_123, %c0_124, %c1_125, %c0_126] : memref<3x3x2x2x128xf32, #tpu.memory_space<vmem>>, vector<1x1x1x1x128xf32>
    %100 = vector.shape_cast %99 : vector<1x1x1x1x128xf32> to vector<128xf32>
    %101 = vector.shape_cast %100 : vector<128xf32> to vector<1x1x128xf32>
    %102 = vector.broadcast %101 : vector<1x1x128xf32> to vector<14x14x128xf32>
    %103 = arith.mulf %102, %98 : vector<14x14x128xf32>
    %104 = arith.addf %96, %103 : vector<14x14x128xf32>
    %c0_127 = arith.constant 0 : index
    %c1_128 = arith.constant 1 : index
    %c1_129 = arith.constant 1 : index
    %c1_130 = arith.constant 1 : index
    %c0_131 = arith.constant 0 : index
    %105 = vector.load %arg1[%c0_127, %c1_128, %c1_129, %c1_130, %c0_131] : memref<1x2x16x16x128xf32, #tpu.memory_space<vmem>>, vector<1x1x14x14x128xf32>
    %106 = vector.shape_cast %105 : vector<1x1x14x14x128xf32> to vector<14x14x128xf32>
    %c1_132 = arith.constant 1 : index
    %c1_133 = arith.constant 1 : index
    %c0_134 = arith.constant 0 : index
    %c1_135 = arith.constant 1 : index
    %c0_136 = arith.constant 0 : index
    %107 = vector.load %arg2[%c1_132, %c1_133, %c0_134, %c1_135, %c0_136] : memref<3x3x2x2x128xf32, #tpu.memory_space<vmem>>, vector<1x1x1x1x128xf32>
    %108 = vector.shape_cast %107 : vector<1x1x1x1x128xf32> to vector<128xf32>
    %109 = vector.shape_cast %108 : vector<128xf32> to vector<1x1x128xf32>
    %110 = vector.broadcast %109 : vector<1x1x128xf32> to vector<14x14x128xf32>
    %111 = arith.mulf %110, %106 : vector<14x14x128xf32>
    %112 = arith.addf %104, %111 : vector<14x14x128xf32>
    %c0_137 = arith.constant 0 : index
    %c1_138 = arith.constant 1 : index
    %c1_139 = arith.constant 1 : index
    %c2_140 = arith.constant 2 : index
    %c0_141 = arith.constant 0 : index
    %113 = vector.load %arg1[%c0_137, %c1_138, %c1_139, %c2_140, %c0_141] : memref<1x2x16x16x128xf32, #tpu.memory_space<vmem>>, vector<1x1x14x14x128xf32>
    %114 = vector.shape_cast %113 : vector<1x1x14x14x128xf32> to vector<14x14x128xf32>
    %c1_142 = arith.constant 1 : index
    %c2_143 = arith.constant 2 : index
    %c0_144 = arith.constant 0 : index
    %c1_145 = arith.constant 1 : index
    %c0_146 = arith.constant 0 : index
    %115 = vector.load %arg2[%c1_142, %c2_143, %c0_144, %c1_145, %c0_146] : memref<3x3x2x2x128xf32, #tpu.memory_space<vmem>>, vector<1x1x1x1x128xf32>
    %116 = vector.shape_cast %115 : vector<1x1x1x1x128xf32> to vector<128xf32>
    %117 = vector.shape_cast %116 : vector<128xf32> to vector<1x1x128xf32>
    %118 = vector.broadcast %117 : vector<1x1x128xf32> to vector<14x14x128xf32>
    %119 = arith.mulf %118, %114 : vector<14x14x128xf32>
    %120 = arith.addf %112, %119 : vector<14x14x128xf32>
    %c0_147 = arith.constant 0 : index
    %c1_148 = arith.constant 1 : index
    %c2_149 = arith.constant 2 : index
    %c0_150 = arith.constant 0 : index
    %c0_151 = arith.constant 0 : index
    %121 = vector.load %arg1[%c0_147, %c1_148, %c2_149, %c0_150, %c0_151] : memref<1x2x16x16x128xf32, #tpu.memory_space<vmem>>, vector<1x1x14x14x128xf32>
    %122 = vector.shape_cast %121 : vector<1x1x14x14x128xf32> to vector<14x14x128xf32>
    %c2_152 = arith.constant 2 : index
    %c0_153 = arith.constant 0 : index
    %c0_154 = arith.constant 0 : index
    %c1_155 = arith.constant 1 : index
    %c0_156 = arith.constant 0 : index
    %123 = vector.load %arg2[%c2_152, %c0_153, %c0_154, %c1_155, %c0_156] : memref<3x3x2x2x128xf32, #tpu.memory_space<vmem>>, vector<1x1x1x1x128xf32>
    %124 = vector.shape_cast %123 : vector<1x1x1x1x128xf32> to vector<128xf32>
    %125 = vector.shape_cast %124 : vector<128xf32> to vector<1x1x128xf32>
    %126 = vector.broadcast %125 : vector<1x1x128xf32> to vector<14x14x128xf32>
    %127 = arith.mulf %126, %122 : vector<14x14x128xf32>
    %128 = arith.addf %120, %127 : vector<14x14x128xf32>
    %c0_157 = arith.constant 0 : index
    %c1_158 = arith.constant 1 : index
    %c2_159 = arith.constant 2 : index
    %c1_160 = arith.constant 1 : index
    %c0_161 = arith.constant 0 : index
    %129 = vector.load %arg1[%c0_157, %c1_158, %c2_159, %c1_160, %c0_161] : memref<1x2x16x16x128xf32, #tpu.memory_space<vmem>>, vector<1x1x14x14x128xf32>
    %130 = vector.shape_cast %129 : vector<1x1x14x14x128xf32> to vector<14x14x128xf32>
    %c2_162 = arith.constant 2 : index
    %c1_163 = arith.constant 1 : index
    %c0_164 = arith.constant 0 : index
    %c1_165 = arith.constant 1 : index
    %c0_166 = arith.constant 0 : index
    %131 = vector.load %arg2[%c2_162, %c1_163, %c0_164, %c1_165, %c0_166] : memref<3x3x2x2x128xf32, #tpu.memory_space<vmem>>, vector<1x1x1x1x128xf32>
    %132 = vector.shape_cast %131 : vector<1x1x1x1x128xf32> to vector<128xf32>
    %133 = vector.shape_cast %132 : vector<128xf32> to vector<1x1x128xf32>
    %134 = vector.broadcast %133 : vector<1x1x128xf32> to vector<14x14x128xf32>
    %135 = arith.mulf %134, %130 : vector<14x14x128xf32>
    %136 = arith.addf %128, %135 : vector<14x14x128xf32>
    %c0_167 = arith.constant 0 : index
    %c1_168 = arith.constant 1 : index
    %c2_169 = arith.constant 2 : index
    %c2_170 = arith.constant 2 : index
    %c0_171 = arith.constant 0 : index
    %137 = vector.load %arg1[%c0_167, %c1_168, %c2_169, %c2_170, %c0_171] : memref<1x2x16x16x128xf32, #tpu.memory_space<vmem>>, vector<1x1x14x14x128xf32>
    %138 = vector.shape_cast %137 : vector<1x1x14x14x128xf32> to vector<14x14x128xf32>
    %c2_172 = arith.constant 2 : index
    %c2_173 = arith.constant 2 : index
    %c0_174 = arith.constant 0 : index
    %c1_175 = arith.constant 1 : index
    %c0_176 = arith.constant 0 : index
    %139 = vector.load %arg2[%c2_172, %c2_173, %c0_174, %c1_175, %c0_176] : memref<3x3x2x2x128xf32, #tpu.memory_space<vmem>>, vector<1x1x1x1x128xf32>
    %140 = vector.shape_cast %139 : vector<1x1x1x1x128xf32> to vector<128xf32>
    %141 = vector.shape_cast %140 : vector<128xf32> to vector<1x1x128xf32>
    %142 = vector.broadcast %141 : vector<1x1x128xf32> to vector<14x14x128xf32>
    %143 = arith.mulf %142, %138 : vector<14x14x128xf32>
    %144 = arith.addf %136, %143 : vector<14x14x128xf32>
    %c0_177 = arith.constant 0 : index
    %c0_178 = arith.constant 0 : index
    %c0_179 = arith.constant 0 : index
    %c0_180 = arith.constant 0 : index
    %c0_181 = arith.constant 0 : index
    %145 = vector.load %arg3[%c0_177, %c0_178, %c0_179, %c0_180, %c0_181] : memref<1x2x14x14x128xf32, #tpu.memory_space<vmem>>, vector<1x1x14x14x128xf32>
    %146 = vector.shape_cast %145 : vector<1x1x14x14x128xf32> to vector<14x14x128xf32>
    %147 = vector.shape_cast %144 : vector<14x14x128xf32> to vector<1x1x14x14x128xf32>
    tpu.vector_store %arg3[%c0_177, %c0_178, %c0_179, %c0_180, %c0_181], %147 {strides = array<i32>} : memref<1x2x14x14x128xf32, #tpu.memory_space<vmem>>, vector<1x1x14x14x128xf32>,
    %cst_182 = arith.constant 0.000000e+00 : f32
    %148 = vector.broadcast %cst_182 : f32 to vector<14x14x128xf32>
    %c0_183 = arith.constant 0 : index
    %c0_184 = arith.constant 0 : index
    %c0_185 = arith.constant 0 : index
    %c0_186 = arith.constant 0 : index
    %c0_187 = arith.constant 0 : index
    %149 = vector.load %arg1[%c0_183, %c0_184, %c0_185, %c0_186, %c0_187] : memref<1x2x16x16x128xf32, #tpu.memory_space<vmem>>, vector<1x1x14x14x128xf32>
    %150 = vector.shape_cast %149 : vector<1x1x14x14x128xf32> to vector<14x14x128xf32>
    %c0_188 = arith.constant 0 : index
    %c0_189 = arith.constant 0 : index
    %c1_190 = arith.constant 1 : index
    %c0_191 = arith.constant 0 : index
    %c0_192 = arith.constant 0 : index
    %151 = vector.load %arg2[%c0_188, %c0_189, %c1_190, %c0_191, %c0_192] : memref<3x3x2x2x128xf32, #tpu.memory_space<vmem>>, vector<1x1x1x1x128xf32>
    %152 = vector.shape_cast %151 : vector<1x1x1x1x128xf32> to vector<128xf32>
    %153 = vector.shape_cast %152 : vector<128xf32> to vector<1x1x128xf32>
    %154 = vector.broadcast %153 : vector<1x1x128xf32> to vector<14x14x128xf32>
    %155 = arith.mulf %154, %150 : vector<14x14x128xf32>
    %156 = arith.addf %148, %155 : vector<14x14x128xf32>
    %c0_193 = arith.constant 0 : index
    %c0_194 = arith.constant 0 : index
    %c0_195 = arith.constant 0 : index
    %c1_196 = arith.constant 1 : index
    %c0_197 = arith.constant 0 : index
    %157 = vector.load %arg1[%c0_193, %c0_194, %c0_195, %c1_196, %c0_197] : memref<1x2x16x16x128xf32, #tpu.memory_space<vmem>>, vector<1x1x14x14x128xf32>
    %158 = vector.shape_cast %157 : vector<1x1x14x14x128xf32> to vector<14x14x128xf32>
    %c0_198 = arith.constant 0 : index
    %c1_199 = arith.constant 1 : index
    %c1_200 = arith.constant 1 : index
    %c0_201 = arith.constant 0 : index
    %c0_202 = arith.constant 0 : index
    %159 = vector.load %arg2[%c0_198, %c1_199, %c1_200, %c0_201, %c0_202] : memref<3x3x2x2x128xf32, #tpu.memory_space<vmem>>, vector<1x1x1x1x128xf32>
    %160 = vector.shape_cast %159 : vector<1x1x1x1x128xf32> to vector<128xf32>
    %161 = vector.shape_cast %160 : vector<128xf32> to vector<1x1x128xf32>
    %162 = vector.broadcast %161 : vector<1x1x128xf32> to vector<14x14x128xf32>
    %163 = arith.mulf %162, %158 : vector<14x14x128xf32>
    %164 = arith.addf %156, %163 : vector<14x14x128xf32>
    %c0_203 = arith.constant 0 : index
    %c0_204 = arith.constant 0 : index
    %c0_205 = arith.constant 0 : index
    %c2_206 = arith.constant 2 : index
    %c0_207 = arith.constant 0 : index
    %165 = vector.load %arg1[%c0_203, %c0_204, %c0_205, %c2_206, %c0_207] : memref<1x2x16x16x128xf32, #tpu.memory_space<vmem>>, vector<1x1x14x14x128xf32>
    %166 = vector.shape_cast %165 : vector<1x1x14x14x128xf32> to vector<14x14x128xf32>
    %c0_208 = arith.constant 0 : index
    %c2_209 = arith.constant 2 : index
    %c1_210 = arith.constant 1 : index
    %c0_211 = arith.constant 0 : index
    %c0_212 = arith.constant 0 : index
    %167 = vector.load %arg2[%c0_208, %c2_209, %c1_210, %c0_211, %c0_212] : memref<3x3x2x2x128xf32, #tpu.memory_space<vmem>>, vector<1x1x1x1x128xf32>
    %168 = vector.shape_cast %167 : vector<1x1x1x1x128xf32> to vector<128xf32>
    %169 = vector.shape_cast %168 : vector<128xf32> to vector<1x1x128xf32>
    %170 = vector.broadcast %169 : vector<1x1x128xf32> to vector<14x14x128xf32>
    %171 = arith.mulf %170, %166 : vector<14x14x128xf32>
    %172 = arith.addf %164, %171 : vector<14x14x128xf32>
    %c0_213 = arith.constant 0 : index
    %c0_214 = arith.constant 0 : index
    %c1_215 = arith.constant 1 : index
    %c0_216 = arith.constant 0 : index
    %c0_217 = arith.constant 0 : index
    %173 = vector.load %arg1[%c0_213, %c0_214, %c1_215, %c0_216, %c0_217] : memref<1x2x16x16x128xf32, #tpu.memory_space<vmem>>, vector<1x1x14x14x128xf32>
    %174 = vector.shape_cast %173 : vector<1x1x14x14x128xf32> to vector<14x14x128xf32>
    %c1_218 = arith.constant 1 : index
    %c0_219 = arith.constant 0 : index
    %c1_220 = arith.constant 1 : index
    %c0_221 = arith.constant 0 : index
    %c0_222 = arith.constant 0 : index
    %175 = vector.load %arg2[%c1_218, %c0_219, %c1_220, %c0_221, %c0_222] : memref<3x3x2x2x128xf32, #tpu.memory_space<vmem>>, vector<1x1x1x1x128xf32>
    %176 = vector.shape_cast %175 : vector<1x1x1x1x128xf32> to vector<128xf32>
    %177 = vector.shape_cast %176 : vector<128xf32> to vector<1x1x128xf32>
    %178 = vector.broadcast %177 : vector<1x1x128xf32> to vector<14x14x128xf32>
    %179 = arith.mulf %178, %174 : vector<14x14x128xf32>
    %180 = arith.addf %172, %179 : vector<14x14x128xf32>
    %c0_223 = arith.constant 0 : index
    %c0_224 = arith.constant 0 : index
    %c1_225 = arith.constant 1 : index
    %c1_226 = arith.constant 1 : index
    %c0_227 = arith.constant 0 : index
    %181 = vector.load %arg1[%c0_223, %c0_224, %c1_225, %c1_226, %c0_227] : memref<1x2x16x16x128xf32, #tpu.memory_space<vmem>>, vector<1x1x14x14x128xf32>
    %182 = vector.shape_cast %181 : vector<1x1x14x14x128xf32> to vector<14x14x128xf32>
    %c1_228 = arith.constant 1 : index
    %c1_229 = arith.constant 1 : index
    %c1_230 = arith.constant 1 : index
    %c0_231 = arith.constant 0 : index
    %c0_232 = arith.constant 0 : index
    %183 = vector.load %arg2[%c1_228, %c1_229, %c1_230, %c0_231, %c0_232] : memref<3x3x2x2x128xf32, #tpu.memory_space<vmem>>, vector<1x1x1x1x128xf32>
    %184 = vector.shape_cast %183 : vector<1x1x1x1x128xf32> to vector<128xf32>
    %185 = vector.shape_cast %184 : vector<128xf32> to vector<1x1x128xf32>
    %186 = vector.broadcast %185 : vector<1x1x128xf32> to vector<14x14x128xf32>
    %187 = arith.mulf %186, %182 : vector<14x14x128xf32>
    %188 = arith.addf %180, %187 : vector<14x14x128xf32>
    %c0_233 = arith.constant 0 : index
    %c0_234 = arith.constant 0 : index
    %c1_235 = arith.constant 1 : index
    %c2_236 = arith.constant 2 : index
    %c0_237 = arith.constant 0 : index
    %189 = vector.load %arg1[%c0_233, %c0_234, %c1_235, %c2_236, %c0_237] : memref<1x2x16x16x128xf32, #tpu.memory_space<vmem>>, vector<1x1x14x14x128xf32>
    %190 = vector.shape_cast %189 : vector<1x1x14x14x128xf32> to vector<14x14x128xf32>
    %c1_238 = arith.constant 1 : index
    %c2_239 = arith.constant 2 : index
    %c1_240 = arith.constant 1 : index
    %c0_241 = arith.constant 0 : index
    %c0_242 = arith.constant 0 : index
    %191 = vector.load %arg2[%c1_238, %c2_239, %c1_240, %c0_241, %c0_242] : memref<3x3x2x2x128xf32, #tpu.memory_space<vmem>>, vector<1x1x1x1x128xf32>
    %192 = vector.shape_cast %191 : vector<1x1x1x1x128xf32> to vector<128xf32>
    %193 = vector.shape_cast %192 : vector<128xf32> to vector<1x1x128xf32>
    %194 = vector.broadcast %193 : vector<1x1x128xf32> to vector<14x14x128xf32>
    %195 = arith.mulf %194, %190 : vector<14x14x128xf32>
    %196 = arith.addf %188, %195 : vector<14x14x128xf32>
    %c0_243 = arith.constant 0 : index
    %c0_244 = arith.constant 0 : index
    %c2_245 = arith.constant 2 : index
    %c0_246 = arith.constant 0 : index
    %c0_247 = arith.constant 0 : index
    %197 = vector.load %arg1[%c0_243, %c0_244, %c2_245, %c0_246, %c0_247] : memref<1x2x16x16x128xf32, #tpu.memory_space<vmem>>, vector<1x1x14x14x128xf32>
    %198 = vector.shape_cast %197 : vector<1x1x14x14x128xf32> to vector<14x14x128xf32>
    %c2_248 = arith.constant 2 : index
    %c0_249 = arith.constant 0 : index
    %c1_250 = arith.constant 1 : index
    %c0_251 = arith.constant 0 : index
    %c0_252 = arith.constant 0 : index
    %199 = vector.load %arg2[%c2_248, %c0_249, %c1_250, %c0_251, %c0_252] : memref<3x3x2x2x128xf32, #tpu.memory_space<vmem>>, vector<1x1x1x1x128xf32>
    %200 = vector.shape_cast %199 : vector<1x1x1x1x128xf32> to vector<128xf32>
    %201 = vector.shape_cast %200 : vector<128xf32> to vector<1x1x128xf32>
    %202 = vector.broadcast %201 : vector<1x1x128xf32> to vector<14x14x128xf32>
    %203 = arith.mulf %202, %198 : vector<14x14x128xf32>
    %204 = arith.addf %196, %203 : vector<14x14x128xf32>
    %c0_253 = arith.constant 0 : index
    %c0_254 = arith.constant 0 : index
    %c2_255 = arith.constant 2 : index
    %c1_256 = arith.constant 1 : index
    %c0_257 = arith.constant 0 : index
    %205 = vector.load %arg1[%c0_253, %c0_254, %c2_255, %c1_256, %c0_257] : memref<1x2x16x16x128xf32, #tpu.memory_space<vmem>>, vector<1x1x14x14x128xf32>
    %206 = vector.shape_cast %205 : vector<1x1x14x14x128xf32> to vector<14x14x128xf32>
    %c2_258 = arith.constant 2 : index
    %c1_259 = arith.constant 1 : index
    %c1_260 = arith.constant 1 : index
    %c0_261 = arith.constant 0 : index
    %c0_262 = arith.constant 0 : index
    %207 = vector.load %arg2[%c2_258, %c1_259, %c1_260, %c0_261, %c0_262] : memref<3x3x2x2x128xf32, #tpu.memory_space<vmem>>, vector<1x1x1x1x128xf32>
    %208 = vector.shape_cast %207 : vector<1x1x1x1x128xf32> to vector<128xf32>
    %209 = vector.shape_cast %208 : vector<128xf32> to vector<1x1x128xf32>
    %210 = vector.broadcast %209 : vector<1x1x128xf32> to vector<14x14x128xf32>
    %211 = arith.mulf %210, %206 : vector<14x14x128xf32>
    %212 = arith.addf %204, %211 : vector<14x14x128xf32>
    %c0_263 = arith.constant 0 : index
    %c0_264 = arith.constant 0 : index
    %c2_265 = arith.constant 2 : index
    %c2_266 = arith.constant 2 : index
    %c0_267 = arith.constant 0 : index
    %213 = vector.load %arg1[%c0_263, %c0_264, %c2_265, %c2_266, %c0_267] : memref<1x2x16x16x128xf32, #tpu.memory_space<vmem>>, vector<1x1x14x14x128xf32>
    %214 = vector.shape_cast %213 : vector<1x1x14x14x128xf32> to vector<14x14x128xf32>
    %c2_268 = arith.constant 2 : index
    %c2_269 = arith.constant 2 : index
    %c1_270 = arith.constant 1 : index
    %c0_271 = arith.constant 0 : index
    %c0_272 = arith.constant 0 : index
    %215 = vector.load %arg2[%c2_268, %c2_269, %c1_270, %c0_271, %c0_272] : memref<3x3x2x2x128xf32, #tpu.memory_space<vmem>>, vector<1x1x1x1x128xf32>
    %216 = vector.shape_cast %215 : vector<1x1x1x1x128xf32> to vector<128xf32>
    %217 = vector.shape_cast %216 : vector<128xf32> to vector<1x1x128xf32>
    %218 = vector.broadcast %217 : vector<1x1x128xf32> to vector<14x14x128xf32>
    %219 = arith.mulf %218, %214 : vector<14x14x128xf32>
    %220 = arith.addf %212, %219 : vector<14x14x128xf32>
    %c0_273 = arith.constant 0 : index
    %c1_274 = arith.constant 1 : index
    %c0_275 = arith.constant 0 : index
    %c0_276 = arith.constant 0 : index
    %c0_277 = arith.constant 0 : index
    %221 = vector.load %arg1[%c0_273, %c1_274, %c0_275, %c0_276, %c0_277] : memref<1x2x16x16x128xf32, #tpu.memory_space<vmem>>, vector<1x1x14x14x128xf32>
    %222 = vector.shape_cast %221 : vector<1x1x14x14x128xf32> to vector<14x14x128xf32>
    %c0_278 = arith.constant 0 : index
    %c0_279 = arith.constant 0 : index
    %c1_280 = arith.constant 1 : index
    %c1_281 = arith.constant 1 : index
    %c0_282 = arith.constant 0 : index
    %223 = vector.load %arg2[%c0_278, %c0_279, %c1_280, %c1_281, %c0_282] : memref<3x3x2x2x128xf32, #tpu.memory_space<vmem>>, vector<1x1x1x1x128xf32>
    %224 = vector.shape_cast %223 : vector<1x1x1x1x128xf32> to vector<128xf32>
    %225 = vector.shape_cast %224 : vector<128xf32> to vector<1x1x128xf32>
    %226 = vector.broadcast %225 : vector<1x1x128xf32> to vector<14x14x128xf32>
    %227 = arith.mulf %226, %222 : vector<14x14x128xf32>
    %228 = arith.addf %220, %227 : vector<14x14x128xf32>
    %c0_283 = arith.constant 0 : index
    %c1_284 = arith.constant 1 : index
    %c0_285 = arith.constant 0 : index
    %c1_286 = arith.constant 1 : index
    %c0_287 = arith.constant 0 : index
    %229 = vector.load %arg1[%c0_283, %c1_284, %c0_285, %c1_286, %c0_287] : memref<1x2x16x16x128xf32, #tpu.memory_space<vmem>>, vector<1x1x14x14x128xf32>
    %230 = vector.shape_cast %229 : vector<1x1x14x14x128xf32> to vector<14x14x128xf32>
    %c0_288 = arith.constant 0 : index
    %c1_289 = arith.constant 1 : index
    %c1_290 = arith.constant 1 : index
    %c1_291 = arith.constant 1 : index
    %c0_292 = arith.constant 0 : index
    %231 = vector.load %arg2[%c0_288, %c1_289, %c1_290, %c1_291, %c0_292] : memref<3x3x2x2x128xf32, #tpu.memory_space<vmem>>, vector<1x1x1x1x128xf32>
    %232 = vector.shape_cast %231 : vector<1x1x1x1x128xf32> to vector<128xf32>
    %233 = vector.shape_cast %232 : vector<128xf32> to vector<1x1x128xf32>
    %234 = vector.broadcast %233 : vector<1x1x128xf32> to vector<14x14x128xf32>
    %235 = arith.mulf %234, %230 : vector<14x14x128xf32>
    %236 = arith.addf %228, %235 : vector<14x14x128xf32>
    %c0_293 = arith.constant 0 : index
    %c1_294 = arith.constant 1 : index
    %c0_295 = arith.constant 0 : index
    %c2_296 = arith.constant 2 : index
    %c0_297 = arith.constant 0 : index
    %237 = vector.load %arg1[%c0_293, %c1_294, %c0_295, %c2_296, %c0_297] : memref<1x2x16x16x128xf32, #tpu.memory_space<vmem>>, vector<1x1x14x14x128xf32>
    %238 = vector.shape_cast %237 : vector<1x1x14x14x128xf32> to vector<14x14x128xf32>
    %c0_298 = arith.constant 0 : index
    %c2_299 = arith.constant 2 : index
    %c1_300 = arith.constant 1 : index
    %c1_301 = arith.constant 1 : index
    %c0_302 = arith.constant 0 : index
    %239 = vector.load %arg2[%c0_298, %c2_299, %c1_300, %c1_301, %c0_302] : memref<3x3x2x2x128xf32, #tpu.memory_space<vmem>>, vector<1x1x1x1x128xf32>
    %240 = vector.shape_cast %239 : vector<1x1x1x1x128xf32> to vector<128xf32>
    %241 = vector.shape_cast %240 : vector<128xf32> to vector<1x1x128xf32>
    %242 = vector.broadcast %241 : vector<1x1x128xf32> to vector<14x14x128xf32>
    %243 = arith.mulf %242, %238 : vector<14x14x128xf32>
    %244 = arith.addf %236, %243 : vector<14x14x128xf32>
    %c0_303 = arith.constant 0 : index
    %c1_304 = arith.constant 1 : index
    %c1_305 = arith.constant 1 : index
    %c0_306 = arith.constant 0 : index
    %c0_307 = arith.constant 0 : index
    %245 = vector.load %arg1[%c0_303, %c1_304, %c1_305, %c0_306, %c0_307] : memref<1x2x16x16x128xf32, #tpu.memory_space<vmem>>, vector<1x1x14x14x128xf32>
    %246 = vector.shape_cast %245 : vector<1x1x14x14x128xf32> to vector<14x14x128xf32>
    %c1_308 = arith.constant 1 : index
    %c0_309 = arith.constant 0 : index
    %c1_310 = arith.constant 1 : index
    %c1_311 = arith.constant 1 : index
    %c0_312 = arith.constant 0 : index
    %247 = vector.load %arg2[%c1_308, %c0_309, %c1_310, %c1_311, %c0_312] : memref<3x3x2x2x128xf32, #tpu.memory_space<vmem>>, vector<1x1x1x1x128xf32>
    %248 = vector.shape_cast %247 : vector<1x1x1x1x128xf32> to vector<128xf32>
    %249 = vector.shape_cast %248 : vector<128xf32> to vector<1x1x128xf32>
    %250 = vector.broadcast %249 : vector<1x1x128xf32> to vector<14x14x128xf32>
    %251 = arith.mulf %250, %246 : vector<14x14x128xf32>
    %252 = arith.addf %244, %251 : vector<14x14x128xf32>
    %c0_313 = arith.constant 0 : index
    %c1_314 = arith.constant 1 : index
    %c1_315 = arith.constant 1 : index
    %c1_316 = arith.constant 1 : index
    %c0_317 = arith.constant 0 : index
    %253 = vector.load %arg1[%c0_313, %c1_314, %c1_315, %c1_316, %c0_317] : memref<1x2x16x16x128xf32, #tpu.memory_space<vmem>>, vector<1x1x14x14x128xf32>
    %254 = vector.shape_cast %253 : vector<1x1x14x14x128xf32> to vector<14x14x128xf32>
    %c1_318 = arith.constant 1 : index
    %c1_319 = arith.constant 1 : index
    %c1_320 = arith.constant 1 : index
    %c1_321 = arith.constant 1 : index
    %c0_322 = arith.constant 0 : index
    %255 = vector.load %arg2[%c1_318, %c1_319, %c1_320, %c1_321, %c0_322] : memref<3x3x2x2x128xf32, #tpu.memory_space<vmem>>, vector<1x1x1x1x128xf32>
    %256 = vector.shape_cast %255 : vector<1x1x1x1x128xf32> to vector<128xf32>
    %257 = vector.shape_cast %256 : vector<128xf32> to vector<1x1x128xf32>
    %258 = vector.broadcast %257 : vector<1x1x128xf32> to vector<14x14x128xf32>
    %259 = arith.mulf %258, %254 : vector<14x14x128xf32>
    %260 = arith.addf %252, %259 : vector<14x14x128xf32>
    %c0_323 = arith.constant 0 : index
    %c1_324 = arith.constant 1 : index
    %c1_325 = arith.constant 1 : index
    %c2_326 = arith.constant 2 : index
    %c0_327 = arith.constant 0 : index
    %261 = vector.load %arg1[%c0_323, %c1_324, %c1_325, %c2_326, %c0_327] : memref<1x2x16x16x128xf32, #tpu.memory_space<vmem>>, vector<1x1x14x14x128xf32>
    %262 = vector.shape_cast %261 : vector<1x1x14x14x128xf32> to vector<14x14x128xf32>
    %c1_328 = arith.constant 1 : index
    %c2_329 = arith.constant 2 : index
    %c1_330 = arith.constant 1 : index
    %c1_331 = arith.constant 1 : index
    %c0_332 = arith.constant 0 : index
    %263 = vector.load %arg2[%c1_328, %c2_329, %c1_330, %c1_331, %c0_332] : memref<3x3x2x2x128xf32, #tpu.memory_space<vmem>>, vector<1x1x1x1x128xf32>
    %264 = vector.shape_cast %263 : vector<1x1x1x1x128xf32> to vector<128xf32>
    %265 = vector.shape_cast %264 : vector<128xf32> to vector<1x1x128xf32>
    %266 = vector.broadcast %265 : vector<1x1x128xf32> to vector<14x14x128xf32>
    %267 = arith.mulf %266, %262 : vector<14x14x128xf32>
    %268 = arith.addf %260, %267 : vector<14x14x128xf32>
    %c0_333 = arith.constant 0 : index
    %c1_334 = arith.constant 1 : index
    %c2_335 = arith.constant 2 : index
    %c0_336 = arith.constant 0 : index
    %c0_337 = arith.constant 0 : index
    %269 = vector.load %arg1[%c0_333, %c1_334, %c2_335, %c0_336, %c0_337] : memref<1x2x16x16x128xf32, #tpu.memory_space<vmem>>, vector<1x1x14x14x128xf32>
    %270 = vector.shape_cast %269 : vector<1x1x14x14x128xf32> to vector<14x14x128xf32>
    %c2_338 = arith.constant 2 : index
    %c0_339 = arith.constant 0 : index
    %c1_340 = arith.constant 1 : index
    %c1_341 = arith.constant 1 : index
    %c0_342 = arith.constant 0 : index
    %271 = vector.load %arg2[%c2_338, %c0_339, %c1_340, %c1_341, %c0_342] : memref<3x3x2x2x128xf32, #tpu.memory_space<vmem>>, vector<1x1x1x1x128xf32>
    %272 = vector.shape_cast %271 : vector<1x1x1x1x128xf32> to vector<128xf32>
    %273 = vector.shape_cast %272 : vector<128xf32> to vector<1x1x128xf32>
    %274 = vector.broadcast %273 : vector<1x1x128xf32> to vector<14x14x128xf32>
    %275 = arith.mulf %274, %270 : vector<14x14x128xf32>
    %276 = arith.addf %268, %275 : vector<14x14x128xf32>
    %c0_343 = arith.constant 0 : index
    %c1_344 = arith.constant 1 : index
    %c2_345 = arith.constant 2 : index
    %c1_346 = arith.constant 1 : index
    %c0_347 = arith.constant 0 : index
    %277 = vector.load %arg1[%c0_343, %c1_344, %c2_345, %c1_346, %c0_347] : memref<1x2x16x16x128xf32, #tpu.memory_space<vmem>>, vector<1x1x14x14x128xf32>
    %278 = vector.shape_cast %277 : vector<1x1x14x14x128xf32> to vector<14x14x128xf32>
    %c2_348 = arith.constant 2 : index
    %c1_349 = arith.constant 1 : index
    %c1_350 = arith.constant 1 : index
    %c1_351 = arith.constant 1 : index
    %c0_352 = arith.constant 0 : index
    %279 = vector.load %arg2[%c2_348, %c1_349, %c1_350, %c1_351, %c0_352] : memref<3x3x2x2x128xf32, #tpu.memory_space<vmem>>, vector<1x1x1x1x128xf32>
    %280 = vector.shape_cast %279 : vector<1x1x1x1x128xf32> to vector<128xf32>
    %281 = vector.shape_cast %280 : vector<128xf32> to vector<1x1x128xf32>
    %282 = vector.broadcast %281 : vector<1x1x128xf32> to vector<14x14x128xf32>
    %283 = arith.mulf %282, %278 : vector<14x14x128xf32>
    %284 = arith.addf %276, %283 : vector<14x14x128xf32>
    %c0_353 = arith.constant 0 : index
    %c1_354 = arith.constant 1 : index
    %c2_355 = arith.constant 2 : index
    %c2_356 = arith.constant 2 : index
    %c0_357 = arith.constant 0 : index
    %285 = vector.load %arg1[%c0_353, %c1_354, %c2_355, %c2_356, %c0_357] : memref<1x2x16x16x128xf32, #tpu.memory_space<vmem>>, vector<1x1x14x14x128xf32>
    %286 = vector.shape_cast %285 : vector<1x1x14x14x128xf32> to vector<14x14x128xf32>
    %c2_358 = arith.constant 2 : index
    %c2_359 = arith.constant 2 : index
    %c1_360 = arith.constant 1 : index
    %c1_361 = arith.constant 1 : index
    %c0_362 = arith.constant 0 : index
    %287 = vector.load %arg2[%c2_358, %c2_359, %c1_360, %c1_361, %c0_362] : memref<3x3x2x2x128xf32, #tpu.memory_space<vmem>>, vector<1x1x1x1x128xf32>
    %288 = vector.shape_cast %287 : vector<1x1x1x1x128xf32> to vector<128xf32>
    %289 = vector.shape_cast %288 : vector<128xf32> to vector<1x1x128xf32>
    %290 = vector.broadcast %289 : vector<1x1x128xf32> to vector<14x14x128xf32>
    %291 = arith.mulf %290, %286 : vector<14x14x128xf32>
    %292 = arith.addf %284, %291 : vector<14x14x128xf32>
    %c0_363 = arith.constant 0 : index
    %c1_364 = arith.constant 1 : index
    %c0_365 = arith.constant 0 : index
    %c0_366 = arith.constant 0 : index
    %c0_367 = arith.constant 0 : index
    %293 = vector.load %arg3[%c0_363, %c1_364, %c0_365, %c0_366, %c0_367] : memref<1x2x14x14x128xf32, #tpu.memory_space<vmem>>, vector<1x1x14x14x128xf32>
    %294 = vector.shape_cast %293 : vector<1x1x14x14x128xf32> to vector<14x14x128xf32>
    %295 = vector.shape_cast %292 : vector<14x14x128xf32> to vector<1x1x14x14x128xf32>
    tpu.vector_store %arg3[%c0_363, %c1_364, %c0_365, %c0_366, %c0_367], %295 {strides = array<i32>} : memref<1x2x14x14x128xf32, #tpu.memory_space<vmem>>, vector<1x1x14x14x128xf32>,
    return
  }
  func.func @transform_0(%arg0: i32) -> (i32, i32, i32, i32, i32) {
    %c0_i32 = arith.constant 0 : i32
    %c0_i32_0 = arith.constant 0 : i32
    %c0_i32_1 = arith.constant 0 : i32
    %c0_i32_2 = arith.constant 0 : i32
    %c0_i32_3 = arith.constant 0 : i32
    return %arg0, %c0_i32, %c0_i32_0, %c0_i32_1, %c0_i32_2 : i32, i32, i32, i32, i32
  }
  func.func @transform_1(%arg0: i32) -> (i32, i32, i32, i32, i32) {
    %c0_i32 = arith.constant 0 : i32
    %c0_i32_0 = arith.constant 0 : i32
    %c0_i32_1 = arith.constant 0 : i32
    %c0_i32_2 = arith.constant 0 : i32
    %c0_i32_3 = arith.constant 0 : i32
    %c0_i32_4 = arith.constant 0 : i32
    return %c0_i32, %c0_i32_0, %c0_i32_1, %c0_i32_2, %c0_i32_3 : i32, i32, i32, i32, i32
  }
  func.func @transform_2(%arg0: i32) -> (i32, i32, i32, i32, i32) {
    %c0_i32 = arith.constant 0 : i32
    %c0_i32_0 = arith.constant 0 : i32
    %c0_i32_1 = arith.constant 0 : i32
    %c0_i32_2 = arith.constant 0 : i32
    %c0_i32_3 = arith.constant 0 : i32
    return %arg0, %c0_i32, %c0_i32_0, %c0_i32_1, %c0_i32_2 : i32, i32, i32, i32, i32
  }
}

</mosaic_0001>

<llo_original>
// kernel: group_conv2d_forward.1
$region0: #{group_conv2d_forward.1}
  #allocation0 [shape = 'u32[]', space=smem, size = 0x4, offset = 0x4, fixed_abs, tag = 'smem constant byte address 0x4 - core index']
  #allocation1 [shape = 'u32[72,128]{1,0:T(1,128)}', space=vmem, size = 0x9000, scoped, tag = 'internal scratch']
  %s0 = inlined_call_operand.vmem [shape: f32[2,2,16,16,128], index: 0, kind: input, shape index: {}]
  %s1 = inlined_call_operand.vmem [shape: f32[3,3,2,2,128], index: 1, kind: input, shape index: {}]
  %s2 = inlined_call_operand.vmem [shape: f32[2,2,14,14,128], index: 2, kind: output, shape index: {}]
  %s3 = sld [smem:[#allocation0]]
  $region41: #{group_conv2d_forward.1} parent=0
    _
  %s5 = ssub.s32 1, %s3
  %s6 = scalar_select 0, %s5, %s3
  loop: start=0, step=1, limit=4
  $region2: #{group_conv2d_forward.1} parent=0 // loop_pre_header
    _
  $region3: #{group_conv2d_forward.1} parent=0 // loop_header
    %s8 = sphi 0, %s12
    %p9 = scmp.ge.s32.totalorder %s8, 4
    %s18 = sphi 0, %s20
    %s21 = sphi 0, %s18
    %s22 = sphi 0, %s21
    %s38 = sphi 0, %s22
    %s42 = sphi 0, %s42
    %s44 = sphi 0, %s42
    %s45 = sphi 0, %s44
    %s59 = sphi 0, %s45
    %s65 = sphi 0, %s67
    %s68 = sphi 0, %s65
    %s69 = sphi 0, %s68
    %s85 = sphi 0, %s69
  $region4: #{group_conv2d_forward.1} parent=0 // loop_header_branch
    %11 = sbr.rel (%p9) target = $region8
  $region5: #{group_conv2d_forward.1} parent=0 // loop_body
    %s13 = ssub.s32 %s8, 1
    %s14 = ssub.s32 %s8, 2
    %s15 = sadd.s32 %s8, 1
    %s16 = ssub.s32 %s8, %s15
    %p17 = scmp.eq.s32.totalorder %s16, 0
    %s19 = sadd.s32 %s18, 1
    %s20 = scalar_select %p17, %s18, %s19
    %p23 = pneg %p17
    %p24 = scmp.eq.s32.totalorder %s8, 1
    %p25 = por %p23, %p24
    %p26 = scmp.ne.s32.totalorder %s18, %s21
    %p27 = scmp.eq.s32.totalorder %s8, 0
    %p28 = por %p26, %p27
    %p29 = scmp.ne.s32.totalorder %s18, %s21
    %p30 = scmp.eq.s32.totalorder %s13, 1
    %p31 = por %p29, %p30
    %p32 = scmp.ne.s32.totalorder %s21, %s22
    %p33 = scmp.eq.s32.totalorder %s13, 0
    %p34 = por %p32, %p33
    %p35 = scmp.ne.s32.totalorder %s21, %s22
    %p36 = scmp.eq.s32.totalorder %s14, 1
    %p37 = por %p35, %p36
    %p39 = scmp.ne.s32.totalorder %s22, %s38
    %p40 = scmp.eq.s32.totalorder %s14, 0
    %p41 = por %p39, %p40
    %s43 = sadd.s32 %s42, 1
    %p46 = scmp.eq.s32.totalorder %s8, 1
    %p47 = scmp.ne.s32.totalorder %s42, %s44
    %p48 = scmp.eq.s32.totalorder %s8, 0
    %p49 = por %p47, %p48
    %p50 = scmp.ne.s32.totalorder %s42, %s44
    %p51 = scmp.eq.s32.totalorder %s13, 1
    %p52 = por %p50, %p51
    %p53 = scmp.ne.s32.totalorder %s44, %s45
    %p54 = scmp.eq.s32.totalorder %s13, 0
    %p55 = por %p53, %p54
    %p56 = scmp.ne.s32.totalorder %s44, %s45
    %p57 = scmp.eq.s32.totalorder %s14, 1
    %p58 = por %p56, %p57
    %p60 = scmp.ne.s32.totalorder %s45, %s59
    %p61 = scmp.eq.s32.totalorder %s14, 0
    %p62 = por %p60, %p61
    %s63 = ssub.s32 %s8, %s15
    %p64 = scmp.eq.s32.totalorder %s63, 0
    %s66 = sadd.s32 %s65, 1
    %s67 = scalar_select %p64, %s65, %s66
    %p70 = pneg %p64
    %p71 = scmp.eq.s32.totalorder %s8, 1
    %p72 = por %p70, %p71
    %p73 = scmp.ne.s32.totalorder %s65, %s68
    %p74 = scmp.eq.s32.totalorder %s8, 0
    %p75 = por %p73, %p74
    %p76 = scmp.ne.s32.totalorder %s65, %s68
    %p77 = scmp.eq.s32.totalorder %s13, 1
    %p78 = por %p76, %p77
    %p79 = scmp.ne.s32.totalorder %s68, %s69
    %p80 = scmp.eq.s32.totalorder %s13, 0
    %p81 = por %p79, %p80
    %p82 = scmp.ne.s32.totalorder %s68, %s69
    %p83 = scmp.eq.s32.totalorder %s14, 1
    %p84 = por %p82, %p83
    %p86 = scmp.ne.s32.totalorder %s69, %s85
    %p87 = scmp.eq.s32.totalorder %s14, 0
    %p88 = por %p86, %p87
    %p89 = scmp.le.s32.totalorder 1, %s8
    %p90 = scmp.lt.s32.totalorder %s8, 3
    %p91 = pnand %p89, %p90
    %p92 = pneg %p91
    // Predicated region
    $region9: #{group_conv2d_forward.1} parent=5 // pred_check
      _
    $region10: #{group_conv2d_forward.1} parent=5 // pred_check_branch
      %94 = sbr.rel (%p91) target = $region12
    $region11: #{group_conv2d_forward.1} parent=5 // pred_region
      %s95 = ssub.s32 %s8, 1
      // Predicated region
      $region13: #{group_conv2d_forward.1} parent=11 // pred_check
        %p96 = pneg %p55
      $region14: #{group_conv2d_forward.1} parent=11 // pred_check_branch
        %98 = sbr.rel (%p96) target = $region16
      $region15: #{group_conv2d_forward.1} parent=11 // pred_region
        _
      $region16: #{group_conv2d_forward.1} parent=11 // pred_fallthru
        _
    $region12: #{group_conv2d_forward.1} parent=5 // pred_fallthru
      _
    %p99 = scmp.lt.s32.totalorder %s8, 2
    // Predicated region
    $region17: #{group_conv2d_forward.1} parent=5 // pred_check
      %p100 = pneg %p99
    $region18: #{group_conv2d_forward.1} parent=5 // pred_check_branch
      %102 = sbr.rel (%p100) target = $region20
    $region19: #{group_conv2d_forward.1} parent=5 // pred_region
      // Predicated region
      $region21: #{group_conv2d_forward.1} parent=19 // pred_check
        %p103 = pneg %p28
      $region22: #{group_conv2d_forward.1} parent=19 // pred_check_branch
        %105 = sbr.rel (%p103) target = $region24
      $region23: #{group_conv2d_forward.1} parent=19 // pred_region
        %p106 = scmp.lt.s32.totalorder %s8, 1
        %s107 = scalar_select %p106, %s8, 1
        %s108 = smul.addr %s107, 64
        %s109 = smul.addr %s108, 8
        %s110 = scalar_lea.vmem %s0, %s109
      $region24: #{group_conv2d_forward.1} parent=19 // pred_fallthru
        _
    $region20: #{group_conv2d_forward.1} parent=5 // pred_fallthru
      _
    %p111 = scmp.le.s32.totalorder 1, %s8
    %p112 = scmp.lt.s32.totalorder %s8, 3
    %p113 = pnand %p111, %p112
    %p114 = pneg %p113
    // Predicated region
    $region25: #{group_conv2d_forward.1} parent=5 // pred_check
      _
    $region26: #{group_conv2d_forward.1} parent=5 // pred_check_branch
      %116 = sbr.rel (%p113) target = $region28
    $region27: #{group_conv2d_forward.1} parent=5 // pred_region
      %s117 = ssub.s32 %s8, 1
      %p118 = scmp.lt.s32.totalorder %s13, 1
      %s119 = scalar_select %p118, %s13, 1
      %s120 = smul.addr %s119, 64
      %s121 = smul.addr %s120, 8
      %s122 = scalar_lea.vmem %s0, %s121
      %p123 = pneg %p34
      %p124 = pneg %p31
      %p125 = pneg %p55
      %p126 = pneg %p52
      %p127 = pneg %p81
      %p128 = pneg %p78
      %p129 = scmp.lt.s32.totalorder %s13, 1
      %s130 = scalar_select %p129, %s13, 1
      %s131 = smul.addr %s130, 56
      %s132 = smul.addr %s131, 8
      %s133 = scalar_lea.vmem %s2, %s132
      %p134 = scmp.lt.s32.totalorder %s13, 1
      %s135 = scalar_select %p134, %s13, 1
      %s136 = smul.addr %s135, 64
      %s137 = smul.addr %s136, 8
      %s138 = scalar_lea.vmem %s0, %s137
      %p139 = scmp.lt.s32.totalorder %s13, 1
      %s140 = scalar_select %p139, %s13, 1
      %s141 = smul.addr %s140, 56
      %s142 = smul.addr %s141, 8
      %s143 = scalar_lea.vmem %s2, %s142
      %v144 = vld [vmem:[%s138] sm:$0xff]
      %v145 = vld [vmem:[%s138 + $0x8] sm:$0x3f]
      %v146 = vld [vmem:[%s138 + $0x10] sm:$0xff]
      %v147 = vld [vmem:[%s138 + $0x18] sm:$0x3f]
      %v148 = vld [vmem:[%s138 + $0x20] sm:$0xff]
      %v149 = vld [vmem:[%s138 + $0x28] sm:$0x3f]
      %v150 = vld [vmem:[%s138 + $0x30] sm:$0xff]
      %v151 = vld [vmem:[%s138 + $0x38] sm:$0x3f]
      %v152 = vld [vmem:[%s138 + $0x40] sm:$0xff]
      %v153 = vld [vmem:[%s138 + $0x48] sm:$0x3f]
      %v154 = vld [vmem:[%s138 + $0x50] sm:$0xff]
      %v155 = vld [vmem:[%s138 + $0x58] sm:$0x3f]
      %v156 = vld [vmem:[%s138 + $0x60] sm:$0xff]
      %v157 = vld [vmem:[%s138 + $0x68] sm:$0x3f]
      %v158 = vld [vmem:[%s138 + $0x70] sm:$0xff]
      %v159 = vld [vmem:[%s138 + $0x78] sm:$0x3f]
      %v160 = vld [vmem:[%s138 + $0x80] sm:$0xff]
      %v161 = vld [vmem:[%s138 + $0x88] sm:$0x3f]
      %v162 = vld [vmem:[%s138 + $0x90] sm:$0xff]
      %v163 = vld [vmem:[%s138 + $0x98] sm:$0x3f]
      %v164 = vld [vmem:[%s138 + $0xa0] sm:$0xff]
      %v165 = vld [vmem:[%s138 + $0xa8] sm:$0x3f]
      %v166 = vld [vmem:[%s138 + $0xb0] sm:$0xff]
      %v167 = vld [vmem:[%s138 + $0xb8] sm:$0x3f]
      %v168 = vld [vmem:[%s138 + $0xc0] sm:$0xff]
      %v169 = vld [vmem:[%s138 + $0xc8] sm:$0x3f]
      %v170 = vld [vmem:[%s138 + $0xd0] sm:$0xff]
      %v171 = vld [vmem:[%s138 + $0xd8] sm:$0x3f]
      %v172 = vld [vmem:[%s1] sm:$0x1]
      %v173 = vperm.slane %v172, 0
      %v174 = vmul.f32 %v173, %v144
      %v175 = vmul.f32 %v173, %v145
      %v176 = vmul.f32 %v173, %v146
      %v177 = vmul.f32 %v173, %v147
      %v178 = vmul.f32 %v173, %v148
      %v179 = vmul.f32 %v173, %v149
      %v180 = vmul.f32 %v173, %v150
      %v181 = vmul.f32 %v173, %v151
      %v182 = vmul.f32 %v173, %v152
      %v183 = vmul.f32 %v173, %v153
      %v184 = vmul.f32 %v173, %v154
      %v185 = vmul.f32 %v173, %v155
      %v186 = vmul.f32 %v173, %v156
      %v187 = vmul.f32 %v173, %v157
      %v188 = vmul.f32 %v173, %v158
      %v189 = vmul.f32 %v173, %v159
      %v190 = vmul.f32 %v173, %v160
      %v191 = vmul.f32 %v173, %v161
      %v192 = vmul.f32 %v173, %v162
      %v193 = vmul.f32 %v173, %v163
      %v194 = vmul.f32 %v173, %v164
      %v195 = vmul.f32 %v173, %v165
      %v196 = vmul.f32 %v173, %v166
      %v197 = vmul.f32 %v173, %v167
      %v198 = vmul.f32 %v173, %v168
      %v199 = vmul.f32 %v173, %v169
      %v200 = vmul.f32 %v173, %v170
      %v201 = vmul.f32 %v173, %v171
      %v202 = vadd.f32 %v174, 0.0
      %v203 = vadd.f32 %v175, 0.0
      %v204 = vadd.f32 %v176, 0.0
      %v205 = vadd.f32 %v177, 0.0
      %v206 = vadd.f32 %v178, 0.0
      %v207 = vadd.f32 %v179, 0.0
      %v208 = vadd.f32 %v180, 0.0
      %v209 = vadd.f32 %v181, 0.0
      %v210 = vadd.f32 %v182, 0.0
      %v211 = vadd.f32 %v183, 0.0
      %v212 = vadd.f32 %v184, 0.0
      %v213 = vadd.f32 %v185, 0.0
      %v214 = vadd.f32 %v186, 0.0
      %v215 = vadd.f32 %v187, 0.0
      %v216 = vadd.f32 %v188, 0.0
      %v217 = vadd.f32 %v189, 0.0
      %v218 = vadd.f32 %v190, 0.0
      %v219 = vadd.f32 %v191, 0.0
      %v220 = vadd.f32 %v192, 0.0
      %v221 = vadd.f32 %v193, 0.0
      %v222 = vadd.f32 %v194, 0.0
      %v223 = vadd.f32 %v195, 0.0
      %v224 = vadd.f32 %v196, 0.0
      %v225 = vadd.f32 %v197, 0.0
      %v226 = vadd.f32 %v198, 0.0
      %v227 = vadd.f32 %v199, 0.0
      %v228 = vadd.f32 %v200, 0.0
      %v229 = vadd.f32 %v201, 0.0
      %v230 = vld [vmem:[%s138 + $0x1] sm:$0xff]
      %v231 = vld [vmem:[%s138 + $0x9] sm:$0x3f]
      %v232 = vld [vmem:[%s138 + $0x11] sm:$0xff]
      %v233 = vld [vmem:[%s138 + $0x19] sm:$0x3f]
      %v234 = vld [vmem:[%s138 + $0x21] sm:$0xff]
      %v235 = vld [vmem:[%s138 + $0x29] sm:$0x3f]
      %v236 = vld [vmem:[%s138 + $0x31] sm:$0xff]
      %v237 = vld [vmem:[%s138 + $0x39] sm:$0x3f]
      %v238 = vld [vmem:[%s138 + $0x41] sm:$0xff]
      %v239 = vld [vmem:[%s138 + $0x49] sm:$0x3f]
      %v240 = vld [vmem:[%s138 + $0x51] sm:$0xff]
      %v241 = vld [vmem:[%s138 + $0x59] sm:$0x3f]
      %v242 = vld [vmem:[%s138 + $0x61] sm:$0xff]
      %v243 = vld [vmem:[%s138 + $0x69] sm:$0x3f]
      %v244 = vld [vmem:[%s138 + $0x71] sm:$0xff]
      %v245 = vld [vmem:[%s138 + $0x79] sm:$0x3f]
      %v246 = vld [vmem:[%s138 + $0x81] sm:$0xff]
      %v247 = vld [vmem:[%s138 + $0x89] sm:$0x3f]
      %v248 = vld [vmem:[%s138 + $0x91] sm:$0xff]
      %v249 = vld [vmem:[%s138 + $0x99] sm:$0x3f]
      %v250 = vld [vmem:[%s138 + $0xa1] sm:$0xff]
      %v251 = vld [vmem:[%s138 + $0xa9] sm:$0x3f]
      %v252 = vld [vmem:[%s138 + $0xb1] sm:$0xff]
      %v253 = vld [vmem:[%s138 + $0xb9] sm:$0x3f]
      %v254 = vld [vmem:[%s138 + $0xc1] sm:$0xff]
      %v255 = vld [vmem:[%s138 + $0xc9] sm:$0x3f]
      %v256 = vld [vmem:[%s138 + $0xd1] sm:$0xff]
      %v257 = vld [vmem:[%s138 + $0xd9] sm:$0x3f]
      %s258 = scalar_lea.vmem %s1, 4
      %v259 = vld [vmem:[%s258] sm:$0x1]
      %v260 = vperm.slane %v259, 0
      %v261 = vmul.f32 %v260, %v230
      %v262 = vmul.f32 %v260, %v231
      %v263 = vmul.f32 %v260, %v232
      %v264 = vmul.f32 %v260, %v233
      %v265 = vmul.f32 %v260, %v234
      %v266 = vmul.f32 %v260, %v235
      %v267 = vmul.f32 %v260, %v236
      %v268 = vmul.f32 %v260, %v237
      %v269 = vmul.f32 %v260, %v238
      %v270 = vmul.f32 %v260, %v239
      %v271 = vmul.f32 %v260, %v240
      %v272 = vmul.f32 %v260, %v241
      %v273 = vmul.f32 %v260, %v242
      %v274 = vmul.f32 %v260, %v243
      %v275 = vmul.f32 %v260, %v244
      %v276 = vmul.f32 %v260, %v245
      %v277 = vmul.f32 %v260, %v246
      %v278 = vmul.f32 %v260, %v247
      %v279 = vmul.f32 %v260, %v248
      %v280 = vmul.f32 %v260, %v249
      %v281 = vmul.f32 %v260, %v250
      %v282 = vmul.f32 %v260, %v251
      %v283 = vmul.f32 %v260, %v252
      %v284 = vmul.f32 %v260, %v253
      %v285 = vmul.f32 %v260, %v254
      %v286 = vmul.f32 %v260, %v255
      %v287 = vmul.f32 %v260, %v256
      %v288 = vmul.f32 %v260, %v257
      %v289 = vadd.f32 %v202, %v261
      %v290 = vadd.f32 %v203, %v262
      %v291 = vadd.f32 %v204, %v263
      %v292 = vadd.f32 %v205, %v264
      %v293 = vadd.f32 %v206, %v265
      %v294 = vadd.f32 %v207, %v266
      %v295 = vadd.f32 %v208, %v267
      %v296 = vadd.f32 %v209, %v268
      %v297 = vadd.f32 %v210, %v269
      %v298 = vadd.f32 %v211, %v270
      %v299 = vadd.f32 %v212, %v271
      %v300 = vadd.f32 %v213, %v272
      %v301 = vadd.f32 %v214, %v273
      %v302 = vadd.f32 %v215, %v274
      %v303 = vadd.f32 %v216, %v275
      %v304 = vadd.f32 %v217, %v276
      %v305 = vadd.f32 %v218, %v277
      %v306 = vadd.f32 %v219, %v278
      %v307 = vadd.f32 %v220, %v279
      %v308 = vadd.f32 %v221, %v280
      %v309 = vadd.f32 %v222, %v281
      %v310 = vadd.f32 %v223, %v282
      %v311 = vadd.f32 %v224, %v283
      %v312 = vadd.f32 %v225, %v284
      %v313 = vadd.f32 %v226, %v285
      %v314 = vadd.f32 %v227, %v286
      %v315 = vadd.f32 %v228, %v287
      %v316 = vadd.f32 %v229, %v288
      %v317 = vld [vmem:[%s138 + $0x2] sm:$0xff]
      %v318 = vld [vmem:[%s138 + $0xa] sm:$0x3f]
      %v319 = vld [vmem:[%s138 + $0x12] sm:$0xff]
      %v320 = vld [vmem:[%s138 + $0x1a] sm:$0x3f]
      %v321 = vld [vmem:[%s138 + $0x22] sm:$0xff]
      %v322 = vld [vmem:[%s138 + $0x2a] sm:$0x3f]
      %v323 = vld [vmem:[%s138 + $0x32] sm:$0xff]
      %v324 = vld [vmem:[%s138 + $0x3a] sm:$0x3f]
      %v325 = vld [vmem:[%s138 + $0x42] sm:$0xff]
      %v326 = vld [vmem:[%s138 + $0x4a] sm:$0x3f]
      %v327 = vld [vmem:[%s138 + $0x52] sm:$0xff]
      %v328 = vld [vmem:[%s138 + $0x5a] sm:$0x3f]
      %v329 = vld [vmem:[%s138 + $0x62] sm:$0xff]
      %v330 = vld [vmem:[%s138 + $0x6a] sm:$0x3f]
      %v331 = vld [vmem:[%s138 + $0x72] sm:$0xff]
      %v332 = vld [vmem:[%s138 + $0x7a] sm:$0x3f]
      %v333 = vld [vmem:[%s138 + $0x82] sm:$0xff]
      %v334 = vld [vmem:[%s138 + $0x8a] sm:$0x3f]
      %v335 = vld [vmem:[%s138 + $0x92] sm:$0xff]
      %v336 = vld [vmem:[%s138 + $0x9a] sm:$0x3f]
      %v337 = vld [vmem:[%s138 + $0xa2] sm:$0xff]
      %v338 = vld [vmem:[%s138 + $0xaa] sm:$0x3f]
      %v339 = vld [vmem:[%s138 + $0xb2] sm:$0xff]
      %v340 = vld [vmem:[%s138 + $0xba] sm:$0x3f]
      %v341 = vld [vmem:[%s138 + $0xc2] sm:$0xff]
      %v342 = vld [vmem:[%s138 + $0xca] sm:$0x3f]
      %v343 = vld [vmem:[%s138 + $0xd2] sm:$0xff]
      %v344 = vld [vmem:[%s138 + $0xda] sm:$0x3f]
      %s345 = scalar_lea.vmem %s1, 8
      %v346 = vld [vmem:[%s345] sm:$0x1]
      %v347 = vperm.slane %v346, 0
      %v348 = vmul.f32 %v347, %v317
      %v349 = vmul.f32 %v347, %v318
      %v350 = vmul.f32 %v347, %v319
      %v351 = vmul.f32 %v347, %v320
      %v352 = vmul.f32 %v347, %v321
      %v353 = vmul.f32 %v347, %v322
      %v354 = vmul.f32 %v347, %v323
      %v355 = vmul.f32 %v347, %v324
      %v356 = vmul.f32 %v347, %v325
      %v357 = vmul.f32 %v347, %v326
      %v358 = vmul.f32 %v347, %v327
      %v359 = vmul.f32 %v347, %v328
      %v360 = vmul.f32 %v347, %v329
      %v361 = vmul.f32 %v347, %v330
      %v362 = vmul.f32 %v347, %v331
      %v363 = vmul.f32 %v347, %v332
      %v364 = vmul.f32 %v347, %v333
      %v365 = vmul.f32 %v347, %v334
      %v366 = vmul.f32 %v347, %v335
      %v367 = vmul.f32 %v347, %v336
      %v368 = vmul.f32 %v347, %v337
      %v369 = vmul.f32 %v347, %v338
      %v370 = vmul.f32 %v347, %v339
      %v371 = vmul.f32 %v347, %v340
      %v372 = vmul.f32 %v347, %v341
      %v373 = vmul.f32 %v347, %v342
      %v374 = vmul.f32 %v347, %v343
      %v375 = vmul.f32 %v347, %v344
      %v376 = vadd.f32 %v289, %v348
      %v377 = vadd.f32 %v290, %v349
      %v378 = vadd.f32 %v291, %v350
      %v379 = vadd.f32 %v292, %v351
      %v380 = vadd.f32 %v293, %v352
      %v381 = vadd.f32 %v294, %v353
      %v382 = vadd.f32 %v295, %v354
      %v383 = vadd.f32 %v296, %v355
      %v384 = vadd.f32 %v297, %v356
      %v385 = vadd.f32 %v298, %v357
      %v386 = vadd.f32 %v299, %v358
      %v387 = vadd.f32 %v300, %v359
      %v388 = vadd.f32 %v301, %v360
      %v389 = vadd.f32 %v302, %v361
      %v390 = vadd.f32 %v303, %v362
      %v391 = vadd.f32 %v304, %v363
      %v392 = vadd.f32 %v305, %v364
      %v393 = vadd.f32 %v306, %v365
      %v394 = vadd.f32 %v307, %v366
      %v395 = vadd.f32 %v308, %v367
      %v396 = vadd.f32 %v309, %v368
      %v397 = vadd.f32 %v310, %v369
      %v398 = vadd.f32 %v311, %v370
      %v399 = vadd.f32 %v312, %v371
      %v400 = vadd.f32 %v313, %v372
      %v401 = vadd.f32 %v314, %v373
      %v402 = vadd.f32 %v315, %v374
      %v403 = vadd.f32 %v316, %v375
      %s404 = scalar_lea.vmem %s138, 16
      %v405 = vld [vmem:[%s404] sm:$0xff]
      %v406 = vld [vmem:[%s404 + $0x8] sm:$0x3f]
      %v407 = vld [vmem:[%s404 + $0x10] sm:$0xff]
      %v408 = vld [vmem:[%s404 + $0x18] sm:$0x3f]
      %v409 = vld [vmem:[%s404 + $0x20] sm:$0xff]
      %v410 = vld [vmem:[%s404 + $0x28] sm:$0x3f]
      %v411 = vld [vmem:[%s404 + $0x30] sm:$0xff]
      %v412 = vld [vmem:[%s404 + $0x38] sm:$0x3f]
      %v413 = vld [vmem:[%s404 + $0x40] sm:$0xff]
      %v414 = vld [vmem:[%s404 + $0x48] sm:$0x3f]
      %v415 = vld [vmem:[%s404 + $0x50] sm:$0xff]
      %v416 = vld [vmem:[%s404 + $0x58] sm:$0x3f]
      %v417 = vld [vmem:[%s404 + $0x60] sm:$0xff]
      %v418 = vld [vmem:[%s404 + $0x68] sm:$0x3f]
      %v419 = vld [vmem:[%s404 + $0x70] sm:$0xff]
      %v420 = vld [vmem:[%s404 + $0x78] sm:$0x3f]
      %v421 = vld [vmem:[%s404 + $0x80] sm:$0xff]
      %v422 = vld [vmem:[%s404 + $0x88] sm:$0x3f]
      %v423 = vld [vmem:[%s404 + $0x90] sm:$0xff]
      %v424 = vld [vmem:[%s404 + $0x98] sm:$0x3f]
      %v425 = vld [vmem:[%s404 + $0xa0] sm:$0xff]
      %v426 = vld [vmem:[%s404 + $0xa8] sm:$0x3f]
      %v427 = vld [vmem:[%s404 + $0xb0] sm:$0xff]
      %v428 = vld [vmem:[%s404 + $0xb8] sm:$0x3f]
      %v429 = vld [vmem:[%s404 + $0xc0] sm:$0xff]
      %v430 = vld [vmem:[%s404 + $0xc8] sm:$0x3f]
      %v431 = vld [vmem:[%s404 + $0xd0] sm:$0xff]
      %v432 = vld [vmem:[%s404 + $0xd8] sm:$0x3f]
      %s433 = scalar_lea.vmem %s1, 12
      %v434 = vld [vmem:[%s433] sm:$0x1]
      %v435 = vperm.slane %v434, 0
      %v436 = vmul.f32 %v435, %v405
      %v437 = vmul.f32 %v435, %v406
      %v438 = vmul.f32 %v435, %v407
      %v439 = vmul.f32 %v435, %v408
      %v440 = vmul.f32 %v435, %v409
      %v441 = vmul.f32 %v435, %v410
      %v442 = vmul.f32 %v435, %v411
      %v443 = vmul.f32 %v435, %v412
      %v444 = vmul.f32 %v435, %v413
      %v445 = vmul.f32 %v435, %v414
      %v446 = vmul.f32 %v435, %v415
      %v447 = vmul.f32 %v435, %v416
      %v448 = vmul.f32 %v435, %v417
      %v449 = vmul.f32 %v435, %v418
      %v450 = vmul.f32 %v435, %v419
      %v451 = vmul.f32 %v435, %v420
      %v452 = vmul.f32 %v435, %v421
      %v453 = vmul.f32 %v435, %v422
      %v454 = vmul.f32 %v435, %v423
      %v455 = vmul.f32 %v435, %v424
      %v456 = vmul.f32 %v435, %v425
      %v457 = vmul.f32 %v435, %v426
      %v458 = vmul.f32 %v435, %v427
      %v459 = vmul.f32 %v435, %v428
      %v460 = vmul.f32 %v435, %v429
      %v461 = vmul.f32 %v435, %v430
      %v462 = vmul.f32 %v435, %v431
      %v463 = vmul.f32 %v435, %v432
      %v464 = vadd.f32 %v376, %v436
      %v465 = vadd.f32 %v377, %v437
      %v466 = vadd.f32 %v378, %v438
      %v467 = vadd.f32 %v379, %v439
      %v468 = vadd.f32 %v380, %v440
      %v469 = vadd.f32 %v381, %v441
      %v470 = vadd.f32 %v382, %v442
      %v471 = vadd.f32 %v383, %v443
      %v472 = vadd.f32 %v384, %v444
      %v473 = vadd.f32 %v385, %v445
      %v474 = vadd.f32 %v386, %v446
      %v475 = vadd.f32 %v387, %v447
      %v476 = vadd.f32 %v388, %v448
      %v477 = vadd.f32 %v389, %v449
      %v478 = vadd.f32 %v390, %v450
      %v479 = vadd.f32 %v391, %v451
      %v480 = vadd.f32 %v392, %v452
      %v481 = vadd.f32 %v393, %v453
      %v482 = vadd.f32 %v394, %v454
      %v483 = vadd.f32 %v395, %v455
      %v484 = vadd.f32 %v396, %v456
      %v485 = vadd.f32 %v397, %v457
      %v486 = vadd.f32 %v398, %v458
      %v487 = vadd.f32 %v399, %v459
      %v488 = vadd.f32 %v400, %v460
      %v489 = vadd.f32 %v401, %v461
      %v490 = vadd.f32 %v402, %v462
      %v491 = vadd.f32 %v403, %v463
      %v492 = vld [vmem:[%s404 + $0x1] sm:$0xff]
      %v493 = vld [vmem:[%s404 + $0x9] sm:$0x3f]
      %v494 = vld [vmem:[%s404 + $0x11] sm:$0xff]
      %v495 = vld [vmem:[%s404 + $0x19] sm:$0x3f]
      %v496 = vld [vmem:[%s404 + $0x21] sm:$0xff]
      %v497 = vld [vmem:[%s404 + $0x29] sm:$0x3f]
      %v498 = vld [vmem:[%s404 + $0x31] sm:$0xff]
      %v499 = vld [vmem:[%s404 + $0x39] sm:$0x3f]
      %v500 = vld [vmem:[%s404 + $0x41] sm:$0xff]
      %v501 = vld [vmem:[%s404 + $0x49] sm:$0x3f]
      %v502 = vld [vmem:[%s404 + $0x51] sm:$0xff]
      %v503 = vld [vmem:[%s404 + $0x59] sm:$0x3f]
      %v504 = vld [vmem:[%s404 + $0x61] sm:$0xff]
      %v505 = vld [vmem:[%s404 + $0x69] sm:$0x3f]
      %v506 = vld [vmem:[%s404 + $0x71] sm:$0xff]
      %v507 = vld [vmem:[%s404 + $0x79] sm:$0x3f]
      %v508 = vld [vmem:[%s404 + $0x81] sm:$0xff]
      %v509 = vld [vmem:[%s404 + $0x89] sm:$0x3f]
      %v510 = vld [vmem:[%s404 + $0x91] sm:$0xff]
      %v511 = vld [vmem:[%s404 + $0x99] sm:$0x3f]
      %v512 = vld [vmem:[%s404 + $0xa1] sm:$0xff]
      %v513 = vld [vmem:[%s404 + $0xa9] sm:$0x3f]
      %v514 = vld [vmem:[%s404 + $0xb1] sm:$0xff]
      %v515 = vld [vmem:[%s404 + $0xb9] sm:$0x3f]
      %v516 = vld [vmem:[%s404 + $0xc1] sm:$0xff]
      %v517 = vld [vmem:[%s404 + $0xc9] sm:$0x3f]
      %v518 = vld [vmem:[%s404 + $0xd1] sm:$0xff]
      %v519 = vld [vmem:[%s404 + $0xd9] sm:$0x3f]
      %s520 = scalar_lea.vmem %s1, 16
      %v521 = vld [vmem:[%s520] sm:$0x1]
      %v522 = vperm.slane %v521, 0
      %v523 = vmul.f32 %v522, %v492
      %v524 = vmul.f32 %v522, %v493
      %v525 = vmul.f32 %v522, %v494
      %v526 = vmul.f32 %v522, %v495
      %v527 = vmul.f32 %v522, %v496
      %v528 = vmul.f32 %v522, %v497
      %v529 = vmul.f32 %v522, %v498
      %v530 = vmul.f32 %v522, %v499
      %v531 = vmul.f32 %v522, %v500
      %v532 = vmul.f32 %v522, %v501
      %v533 = vmul.f32 %v522, %v502
      %v534 = vmul.f32 %v522, %v503
      %v535 = vmul.f32 %v522, %v504
      %v536 = vmul.f32 %v522, %v505
      %v537 = vmul.f32 %v522, %v506
      %v538 = vmul.f32 %v522, %v507
      %v539 = vmul.f32 %v522, %v508
      %v540 = vmul.f32 %v522, %v509
      %v541 = vmul.f32 %v522, %v510
      %v542 = vmul.f32 %v522, %v511
      %v543 = vmul.f32 %v522, %v512
      %v544 = vmul.f32 %v522, %v513
      %v545 = vmul.f32 %v522, %v514
      %v546 = vmul.f32 %v522, %v515
      %v547 = vmul.f32 %v522, %v516
      %v548 = vmul.f32 %v522, %v517
      %v549 = vmul.f32 %v522, %v518
      %v550 = vmul.f32 %v522, %v519
      %v551 = vadd.f32 %v464, %v523
      %v552 = vadd.f32 %v465, %v524
      %v553 = vadd.f32 %v466, %v525
      %v554 = vadd.f32 %v467, %v526
      %v555 = vadd.f32 %v468, %v527
      %v556 = vadd.f32 %v469, %v528
      %v557 = vadd.f32 %v470, %v529
      %v558 = vadd.f32 %v471, %v530
      %v559 = vadd.f32 %v472, %v531
      %v560 = vadd.f32 %v473, %v532
      %v561 = vadd.f32 %v474, %v533
      %v562 = vadd.f32 %v475, %v534
      %v563 = vadd.f32 %v476, %v535
      %v564 = vadd.f32 %v477, %v536
      %v565 = vadd.f32 %v478, %v537
      %v566 = vadd.f32 %v479, %v538
      %v567 = vadd.f32 %v480, %v539
      %v568 = vadd.f32 %v481, %v540
      %v569 = vadd.f32 %v482, %v541
      %v570 = vadd.f32 %v483, %v542
      %v571 = vadd.f32 %v484, %v543
      %v572 = vadd.f32 %v485, %v544
      %v573 = vadd.f32 %v486, %v545
      %v574 = vadd.f32 %v487, %v546
      %v575 = vadd.f32 %v488, %v547
      %v576 = vadd.f32 %v489, %v548
      %v577 = vadd.f32 %v490, %v549
      %v578 = vadd.f32 %v491, %v550
      %v579 = vld [vmem:[%s404 + $0x2] sm:$0xff]
      %v580 = vld [vmem:[%s404 + $0xa] sm:$0x3f]
      %v581 = vld [vmem:[%s404 + $0x12] sm:$0xff]
      %v582 = vld [vmem:[%s404 + $0x1a] sm:$0x3f]
      %v583 = vld [vmem:[%s404 + $0x22] sm:$0xff]
      %v584 = vld [vmem:[%s404 + $0x2a] sm:$0x3f]
      %v585 = vld [vmem:[%s404 + $0x32] sm:$0xff]
      %v586 = vld [vmem:[%s404 + $0x3a] sm:$0x3f]
      %v587 = vld [vmem:[%s404 + $0x42] sm:$0xff]
      %v588 = vld [vmem:[%s404 + $0x4a] sm:$0x3f]
      %v589 = vld [vmem:[%s404 + $0x52] sm:$0xff]
      %v590 = vld [vmem:[%s404 + $0x5a] sm:$0x3f]
      %v591 = vld [vmem:[%s404 + $0x62] sm:$0xff]
      %v592 = vld [vmem:[%s404 + $0x6a] sm:$0x3f]
      %v593 = vld [vmem:[%s404 + $0x72] sm:$0xff]
      %v594 = vld [vmem:[%s404 + $0x7a] sm:$0x3f]
      %v595 = vld [vmem:[%s404 + $0x82] sm:$0xff]
      %v596 = vld [vmem:[%s404 + $0x8a] sm:$0x3f]
      %v597 = vld [vmem:[%s404 + $0x92] sm:$0xff]
      %v598 = vld [vmem:[%s404 + $0x9a] sm:$0x3f]
      %v599 = vld [vmem:[%s404 + $0xa2] sm:$0xff]
      %v600 = vld [vmem:[%s404 + $0xaa] sm:$0x3f]
      %v601 = vld [vmem:[%s404 + $0xb2] sm:$0xff]
      %v602 = vld [vmem:[%s404 + $0xba] sm:$0x3f]
      %v603 = vld [vmem:[%s404 + $0xc2] sm:$0xff]
      %v604 = vld [vmem:[%s404 + $0xca] sm:$0x3f]
      %v605 = vld [vmem:[%s404 + $0xd2] sm:$0xff]
      %v606 = vld [vmem:[%s404 + $0xda] sm:$0x3f]
      %s607 = scalar_lea.vmem %s1, 20
      %v608 = vld [vmem:[%s607] sm:$0x1]
      %v609 = vperm.slane %v608, 0
      %v610 = vmul.f32 %v609, %v579
      %v611 = vmul.f32 %v609, %v580
      %v612 = vmul.f32 %v609, %v581
      %v613 = vmul.f32 %v609, %v582
      %v614 = vmul.f32 %v609, %v583
      %v615 = vmul.f32 %v609, %v584
      %v616 = vmul.f32 %v609, %v585
      %v617 = vmul.f32 %v609, %v586
      %v618 = vmul.f32 %v609, %v587
      %v619 = vmul.f32 %v609, %v588
      %v620 = vmul.f32 %v609, %v589
      %v621 = vmul.f32 %v609, %v590
      %v622 = vmul.f32 %v609, %v591
      %v623 = vmul.f32 %v609, %v592
      %v624 = vmul.f32 %v609, %v593
      %v625 = vmul.f32 %v609, %v594
      %v626 = vmul.f32 %v609, %v595
      %v627 = vmul.f32 %v609, %v596
      %v628 = vmul.f32 %v609, %v597
      %v629 = vmul.f32 %v609, %v598
      %v630 = vmul.f32 %v609, %v599
      %v631 = vmul.f32 %v609, %v600
      %v632 = vmul.f32 %v609, %v601
      %v633 = vmul.f32 %v609, %v602
      %v634 = vmul.f32 %v609, %v603
      %v635 = vmul.f32 %v609, %v604
      %v636 = vmul.f32 %v609, %v605
      %v637 = vmul.f32 %v609, %v606
      %v638 = vadd.f32 %v551, %v610
      %v639 = vadd.f32 %v552, %v611
      %v640 = vadd.f32 %v553, %v612
      %v641 = vadd.f32 %v554, %v613
      %v642 = vadd.f32 %v555, %v614
      %v643 = vadd.f32 %v556, %v615
      %v644 = vadd.f32 %v557, %v616
      %v645 = vadd.f32 %v558, %v617
      %v646 = vadd.f32 %v559, %v618
      %v647 = vadd.f32 %v560, %v619
      %v648 = vadd.f32 %v561, %v620
      %v649 = vadd.f32 %v562, %v621
      %v650 = vadd.f32 %v563, %v622
      %v651 = vadd.f32 %v564, %v623
      %v652 = vadd.f32 %v565, %v624
      %v653 = vadd.f32 %v566, %v625
      %v654 = vadd.f32 %v567, %v626
      %v655 = vadd.f32 %v568, %v627
      %v656 = vadd.f32 %v569, %v628
      %v657 = vadd.f32 %v570, %v629
      %v658 = vadd.f32 %v571, %v630
      %v659 = vadd.f32 %v572, %v631
      %v660 = vadd.f32 %v573, %v632
      %v661 = vadd.f32 %v574, %v633
      %v662 = vadd.f32 %v575, %v634
      %v663 = vadd.f32 %v576, %v635
      %v664 = vadd.f32 %v577, %v636
      %v665 = vadd.f32 %v578, %v637
      %s666 = scalar_lea.vmem %s138, 32
      %v667 = vld [vmem:[%s666] sm:$0xff]
      %v668 = vld [vmem:[%s666 + $0x8] sm:$0x3f]
      %v669 = vld [vmem:[%s666 + $0x10] sm:$0xff]
      %v670 = vld [vmem:[%s666 + $0x18] sm:$0x3f]
      %v671 = vld [vmem:[%s666 + $0x20] sm:$0xff]
      %v672 = vld [vmem:[%s666 + $0x28] sm:$0x3f]
      %v673 = vld [vmem:[%s666 + $0x30] sm:$0xff]
      %v674 = vld [vmem:[%s666 + $0x38] sm:$0x3f]
      %v675 = vld [vmem:[%s666 + $0x40] sm:$0xff]
      %v676 = vld [vmem:[%s666 + $0x48] sm:$0x3f]
      %v677 = vld [vmem:[%s666 + $0x50] sm:$0xff]
      %v678 = vld [vmem:[%s666 + $0x58] sm:$0x3f]
      %v679 = vld [vmem:[%s666 + $0x60] sm:$0xff]
      %v680 = vld [vmem:[%s666 + $0x68] sm:$0x3f]
      %v681 = vld [vmem:[%s666 + $0x70] sm:$0xff]
      %v682 = vld [vmem:[%s666 + $0x78] sm:$0x3f]
      %v683 = vld [vmem:[%s666 + $0x80] sm:$0xff]
      %v684 = vld [vmem:[%s666 + $0x88] sm:$0x3f]
      %v685 = vld [vmem:[%s666 + $0x90] sm:$0xff]
      %v686 = vld [vmem:[%s666 + $0x98] sm:$0x3f]
      %v687 = vld [vmem:[%s666 + $0xa0] sm:$0xff]
      %v688 = vld [vmem:[%s666 + $0xa8] sm:$0x3f]
      %v689 = vld [vmem:[%s666 + $0xb0] sm:$0xff]
      %v690 = vld [vmem:[%s666 + $0xb8] sm:$0x3f]
      %v691 = vld [vmem:[%s666 + $0xc0] sm:$0xff]
      %v692 = vld [vmem:[%s666 + $0xc8] sm:$0x3f]
      %v693 = vld [vmem:[%s666 + $0xd0] sm:$0xff]
      %v694 = vld [vmem:[%s666 + $0xd8] sm:$0x3f]
      %s695 = scalar_lea.vmem %s1, 24
      %v696 = vld [vmem:[%s695] sm:$0x1]
      %v697 = vperm.slane %v696, 0
      %v698 = vmul.f32 %v697, %v667
      %v699 = vmul.f32 %v697, %v668
      %v700 = vmul.f32 %v697, %v669
      %v701 = vmul.f32 %v697, %v670
      %v702 = vmul.f32 %v697, %v671
      %v703 = vmul.f32 %v697, %v672
      %v704 = vmul.f32 %v697, %v673
      %v705 = vmul.f32 %v697, %v674
      %v706 = vmul.f32 %v697, %v675
      %v707 = vmul.f32 %v697, %v676
      %v708 = vmul.f32 %v697, %v677
      %v709 = vmul.f32 %v697, %v678
      %v710 = vmul.f32 %v697, %v679
      %v711 = vmul.f32 %v697, %v680
      %v712 = vmul.f32 %v697, %v681
      %v713 = vmul.f32 %v697, %v682
      %v714 = vmul.f32 %v697, %v683
      %v715 = vmul.f32 %v697, %v684
      %v716 = vmul.f32 %v697, %v685
      %v717 = vmul.f32 %v697, %v686
      %v718 = vmul.f32 %v697, %v687
      %v719 = vmul.f32 %v697, %v688
      %v720 = vmul.f32 %v697, %v689
      %v721 = vmul.f32 %v697, %v690
      %v722 = vmul.f32 %v697, %v691
      %v723 = vmul.f32 %v697, %v692
      %v724 = vmul.f32 %v697, %v693
      %v725 = vmul.f32 %v697, %v694
      %v726 = vadd.f32 %v638, %v698
      %v727 = vadd.f32 %v639, %v699
      %v728 = vadd.f32 %v640, %v700
      %v729 = vadd.f32 %v641, %v701
      %v730 = vadd.f32 %v642, %v702
      %v731 = vadd.f32 %v643, %v703
      %v732 = vadd.f32 %v644, %v704
      %v733 = vadd.f32 %v645, %v705
      %v734 = vadd.f32 %v646, %v706
      %v735 = vadd.f32 %v647, %v707
      %v736 = vadd.f32 %v648, %v708
      %v737 = vadd.f32 %v649, %v709
      %v738 = vadd.f32 %v650, %v710
      %v739 = vadd.f32 %v651, %v711
      %v740 = vadd.f32 %v652, %v712
      %v741 = vadd.f32 %v653, %v713
      %v742 = vadd.f32 %v654, %v714
      %v743 = vadd.f32 %v655, %v715
      %v744 = vadd.f32 %v656, %v716
      %v745 = vadd.f32 %v657, %v717
      %v746 = vadd.f32 %v658, %v718
      %v747 = vadd.f32 %v659, %v719
      %v748 = vadd.f32 %v660, %v720
      %v749 = vadd.f32 %v661, %v721
      %v750 = vadd.f32 %v662, %v722
      %v751 = vadd.f32 %v663, %v723
      %v752 = vadd.f32 %v664, %v724
      %v753 = vadd.f32 %v665, %v725
      %v754 = vld [vmem:[%s666 + $0x1] sm:$0xff]
      %v755 = vld [vmem:[%s666 + $0x9] sm:$0x3f]
      %v756 = vld [vmem:[%s666 + $0x11] sm:$0xff]
      %v757 = vld [vmem:[%s666 + $0x19] sm:$0x3f]
      %v758 = vld [vmem:[%s666 + $0x21] sm:$0xff]
      %v759 = vld [vmem:[%s666 + $0x29] sm:$0x3f]
      %v760 = vld [vmem:[%s666 + $0x31] sm:$0xff]
      %v761 = vld [vmem:[%s666 + $0x39] sm:$0x3f]
      %v762 = vld [vmem:[%s666 + $0x41] sm:$0xff]
      %v763 = vld [vmem:[%s666 + $0x49] sm:$0x3f]
      %v764 = vld [vmem:[%s666 + $0x51] sm:$0xff]
      %v765 = vld [vmem:[%s666 + $0x59] sm:$0x3f]
      %v766 = vld [vmem:[%s666 + $0x61] sm:$0xff]
      %v767 = vld [vmem:[%s666 + $0x69] sm:$0x3f]
      %v768 = vld [vmem:[%s666 + $0x71] sm:$0xff]
      %v769 = vld [vmem:[%s666 + $0x79] sm:$0x3f]
      %v770 = vld [vmem:[%s666 + $0x81] sm:$0xff]
      %v771 = vld [vmem:[%s666 + $0x89] sm:$0x3f]
      %v772 = vld [vmem:[%s666 + $0x91] sm:$0xff]
      %v773 = vld [vmem:[%s666 + $0x99] sm:$0x3f]
      %v774 = vld [vmem:[%s666 + $0xa1] sm:$0xff]
      %v775 = vld [vmem:[%s666 + $0xa9] sm:$0x3f]
      %v776 = vld [vmem:[%s666 + $0xb1] sm:$0xff]
      %v777 = vld [vmem:[%s666 + $0xb9] sm:$0x3f]
      %v778 = vld [vmem:[%s666 + $0xc1] sm:$0xff]
      %v779 = vld [vmem:[%s666 + $0xc9] sm:$0x3f]
      %v780 = vld [vmem:[%s666 + $0xd1] sm:$0xff]
      %v781 = vld [vmem:[%s666 + $0xd9] sm:$0x3f]
      %s782 = scalar_lea.vmem %s1, 28
      %v783 = vld [vmem:[%s782] sm:$0x1]
      %v784 = vperm.slane %v783, 0
      %v785 = vmul.f32 %v784, %v754
      %v786 = vmul.f32 %v784, %v755
      %v787 = vmul.f32 %v784, %v756
      %v788 = vmul.f32 %v784, %v757
      %v789 = vmul.f32 %v784, %v758
      %v790 = vmul.f32 %v784, %v759
      %v791 = vmul.f32 %v784, %v760
      %v792 = vmul.f32 %v784, %v761
      %v793 = vmul.f32 %v784, %v762
      %v794 = vmul.f32 %v784, %v763
      %v795 = vmul.f32 %v784, %v764
      %v796 = vmul.f32 %v784, %v765
      %v797 = vmul.f32 %v784, %v766
      %v798 = vmul.f32 %v784, %v767
      %v799 = vmul.f32 %v784, %v768
      %v800 = vmul.f32 %v784, %v769
      %v801 = vmul.f32 %v784, %v770
      %v802 = vmul.f32 %v784, %v771
      %v803 = vmul.f32 %v784, %v772
      %v804 = vmul.f32 %v784, %v773
      %v805 = vmul.f32 %v784, %v774
      %v806 = vmul.f32 %v784, %v775
      %v807 = vmul.f32 %v784, %v776
      %v808 = vmul.f32 %v784, %v777
      %v809 = vmul.f32 %v784, %v778
      %v810 = vmul.f32 %v784, %v779
      %v811 = vmul.f32 %v784, %v780
      %v812 = vmul.f32 %v784, %v781
      %v813 = vadd.f32 %v726, %v785
      %v814 = vadd.f32 %v727, %v786
      %v815 = vadd.f32 %v728, %v787
      %v816 = vadd.f32 %v729, %v788
      %v817 = vadd.f32 %v730, %v789
      %v818 = vadd.f32 %v731, %v790
      %v819 = vadd.f32 %v732, %v791
      %v820 = vadd.f32 %v733, %v792
      %v821 = vadd.f32 %v734, %v793
      %v822 = vadd.f32 %v735, %v794
      %v823 = vadd.f32 %v736, %v795
      %v824 = vadd.f32 %v737, %v796
      %v825 = vadd.f32 %v738, %v797
      %v826 = vadd.f32 %v739, %v798
      %v827 = vadd.f32 %v740, %v799
      %v828 = vadd.f32 %v741, %v800
      %v829 = vadd.f32 %v742, %v801
      %v830 = vadd.f32 %v743, %v802
      %v831 = vadd.f32 %v744, %v803
      %v832 = vadd.f32 %v745, %v804
      %v833 = vadd.f32 %v746, %v805
      %v834 = vadd.f32 %v747, %v806
      %v835 = vadd.f32 %v748, %v807
      %v836 = vadd.f32 %v749, %v808
      %v837 = vadd.f32 %v750, %v809
      %v838 = vadd.f32 %v751, %v810
      %v839 = vadd.f32 %v752, %v811
      %v840 = vadd.f32 %v753, %v812
      %v841 = vld [vmem:[%s666 + $0x2] sm:$0xff]
      %v842 = vld [vmem:[%s666 + $0xa] sm:$0x3f]
      %v843 = vld [vmem:[%s666 + $0x12] sm:$0xff]
      %v844 = vld [vmem:[%s666 + $0x1a] sm:$0x3f]
      %v845 = vld [vmem:[%s666 + $0x22] sm:$0xff]
      %v846 = vld [vmem:[%s666 + $0x2a] sm:$0x3f]
      %v847 = vld [vmem:[%s666 + $0x32] sm:$0xff]
      %v848 = vld [vmem:[%s666 + $0x3a] sm:$0x3f]
      %v849 = vld [vmem:[%s666 + $0x42] sm:$0xff]
      %v850 = vld [vmem:[%s666 + $0x4a] sm:$0x3f]
      %v851 = vld [vmem:[%s666 + $0x52] sm:$0xff]
      %v852 = vld [vmem:[%s666 + $0x5a] sm:$0x3f]
      %v853 = vld [vmem:[%s666 + $0x62] sm:$0xff]
      %v854 = vld [vmem:[%s666 + $0x6a] sm:$0x3f]
      %v855 = vld [vmem:[%s666 + $0x72] sm:$0xff]
      %v856 = vld [vmem:[%s666 + $0x7a] sm:$0x3f]
      %v857 = vld [vmem:[%s666 + $0x82] sm:$0xff]
      %v858 = vld [vmem:[%s666 + $0x8a] sm:$0x3f]
      %v859 = vld [vmem:[%s666 + $0x92] sm:$0xff]
      %v860 = vld [vmem:[%s666 + $0x9a] sm:$0x3f]
      %v861 = vld [vmem:[%s666 + $0xa2] sm:$0xff]
      %v862 = vld [vmem:[%s666 + $0xaa] sm:$0x3f]
      %v863 = vld [vmem:[%s666 + $0xb2] sm:$0xff]
      %v864 = vld [vmem:[%s666 + $0xba] sm:$0x3f]
      %v865 = vld [vmem:[%s666 + $0xc2] sm:$0xff]
      %v866 = vld [vmem:[%s666 + $0xca] sm:$0x3f]
      %v867 = vld [vmem:[%s666 + $0xd2] sm:$0xff]
      %v868 = vld [vmem:[%s666 + $0xda] sm:$0x3f]
      %s869 = scalar_lea.vmem %s1, 32
      %v870 = vld [vmem:[%s869] sm:$0x1]
      %v871 = vperm.slane %v870, 0
      %v872 = vmul.f32 %v871, %v841
      %v873 = vmul.f32 %v871, %v842
      %v874 = vmul.f32 %v871, %v843
      %v875 = vmul.f32 %v871, %v844
      %v876 = vmul.f32 %v871, %v845
      %v877 = vmul.f32 %v871, %v846
      %v878 = vmul.f32 %v871, %v847
      %v879 = vmul.f32 %v871, %v848
      %v880 = vmul.f32 %v871, %v849
      %v881 = vmul.f32 %v871, %v850
      %v882 = vmul.f32 %v871, %v851
      %v883 = vmul.f32 %v871, %v852
      %v884 = vmul.f32 %v871, %v853
      %v885 = vmul.f32 %v871, %v854
      %v886 = vmul.f32 %v871, %v855
      %v887 = vmul.f32 %v871, %v856
      %v888 = vmul.f32 %v871, %v857
      %v889 = vmul.f32 %v871, %v858
      %v890 = vmul.f32 %v871, %v859
      %v891 = vmul.f32 %v871, %v860
      %v892 = vmul.f32 %v871, %v861
      %v893 = vmul.f32 %v871, %v862
      %v894 = vmul.f32 %v871, %v863
      %v895 = vmul.f32 %v871, %v864
      %v896 = vmul.f32 %v871, %v865
      %v897 = vmul.f32 %v871, %v866
      %v898 = vmul.f32 %v871, %v867
      %v899 = vmul.f32 %v871, %v868
      %v900 = vadd.f32 %v813, %v872
      %v901 = vadd.f32 %v814, %v873
      %v902 = vadd.f32 %v815, %v874
      %v903 = vadd.f32 %v816, %v875
      %v904 = vadd.f32 %v817, %v876
      %v905 = vadd.f32 %v818, %v877
      %v906 = vadd.f32 %v819, %v878
      %v907 = vadd.f32 %v820, %v879
      %v908 = vadd.f32 %v821, %v880
      %v909 = vadd.f32 %v822, %v881
      %v910 = vadd.f32 %v823, %v882
      %v911 = vadd.f32 %v824, %v883
      %v912 = vadd.f32 %v825, %v884
      %v913 = vadd.f32 %v826, %v885
      %v914 = vadd.f32 %v827, %v886
      %v915 = vadd.f32 %v828, %v887
      %v916 = vadd.f32 %v829, %v888
      %v917 = vadd.f32 %v830, %v889
      %v918 = vadd.f32 %v831, %v890
      %v919 = vadd.f32 %v832, %v891
      %v920 = vadd.f32 %v833, %v892
      %v921 = vadd.f32 %v834, %v893
      %v922 = vadd.f32 %v835, %v894
      %v923 = vadd.f32 %v836, %v895
      %v924 = vadd.f32 %v837, %v896
      %v925 = vadd.f32 %v838, %v897
      %v926 = vadd.f32 %v839, %v898
      %v927 = vadd.f32 %v840, %v899
      %s928 = scalar_lea.vmem %s138, 256
      %v929 = vld [vmem:[%s928] sm:$0xff]
      %v930 = vld [vmem:[%s928 + $0x8] sm:$0x3f]
      %v931 = vld [vmem:[%s928 + $0x10] sm:$0xff]
      %v932 = vld [vmem:[%s928 + $0x18] sm:$0x3f]
      %v933 = vld [vmem:[%s928 + $0x20] sm:$0xff]
      %v934 = vld [vmem:[%s928 + $0x28] sm:$0x3f]
      %v935 = vld [vmem:[%s928 + $0x30] sm:$0xff]
      %v936 = vld [vmem:[%s928 + $0x38] sm:$0x3f]
      %v937 = vld [vmem:[%s928 + $0x40] sm:$0xff]
      %v938 = vld [vmem:[%s928 + $0x48] sm:$0x3f]
      %v939 = vld [vmem:[%s928 + $0x50] sm:$0xff]
      %v940 = vld [vmem:[%s928 + $0x58] sm:$0x3f]
      %v941 = vld [vmem:[%s928 + $0x60] sm:$0xff]
      %v942 = vld [vmem:[%s928 + $0x68] sm:$0x3f]
      %v943 = vld [vmem:[%s928 + $0x70] sm:$0xff]
      %v944 = vld [vmem:[%s928 + $0x78] sm:$0x3f]
      %v945 = vld [vmem:[%s928 + $0x80] sm:$0xff]
      %v946 = vld [vmem:[%s928 + $0x88] sm:$0x3f]
      %v947 = vld [vmem:[%s928 + $0x90] sm:$0xff]
      %v948 = vld [vmem:[%s928 + $0x98] sm:$0x3f]
      %v949 = vld [vmem:[%s928 + $0xa0] sm:$0xff]
      %v950 = vld [vmem:[%s928 + $0xa8] sm:$0x3f]
      %v951 = vld [vmem:[%s928 + $0xb0] sm:$0xff]
      %v952 = vld [vmem:[%s928 + $0xb8] sm:$0x3f]
      %v953 = vld [vmem:[%s928 + $0xc0] sm:$0xff]
      %v954 = vld [vmem:[%s928 + $0xc8] sm:$0x3f]
      %v955 = vld [vmem:[%s928 + $0xd0] sm:$0xff]
      %v956 = vld [vmem:[%s928 + $0xd8] sm:$0x3f]
      %v957 = vld [vmem:[%s1 + $0x1] sm:$0x1]
      %v958 = vperm.slane %v957, 0
      %v959 = vmul.f32 %v958, %v929
      %v960 = vmul.f32 %v958, %v930
      %v961 = vmul.f32 %v958, %v931
      %v962 = vmul.f32 %v958, %v932
      %v963 = vmul.f32 %v958, %v933
      %v964 = vmul.f32 %v958, %v934
      %v965 = vmul.f32 %v958, %v935
      %v966 = vmul.f32 %v958, %v936
      %v967 = vmul.f32 %v958, %v937
      %v968 = vmul.f32 %v958, %v938
      %v969 = vmul.f32 %v958, %v939
      %v970 = vmul.f32 %v958, %v940
      %v971 = vmul.f32 %v958, %v941
      %v972 = vmul.f32 %v958, %v942
      %v973 = vmul.f32 %v958, %v943
      %v974 = vmul.f32 %v958, %v944
      %v975 = vmul.f32 %v958, %v945
      %v976 = vmul.f32 %v958, %v946
      %v977 = vmul.f32 %v958, %v947
      %v978 = vmul.f32 %v958, %v948
      %v979 = vmul.f32 %v958, %v949
      %v980 = vmul.f32 %v958, %v950
      %v981 = vmul.f32 %v958, %v951
      %v982 = vmul.f32 %v958, %v952
      %v983 = vmul.f32 %v958, %v953
      %v984 = vmul.f32 %v958, %v954
      %v985 = vmul.f32 %v958, %v955
      %v986 = vmul.f32 %v958, %v956
      %v987 = vadd.f32 %v900, %v959
      %v988 = vadd.f32 %v901, %v960
      %v989 = vadd.f32 %v902, %v961
      %v990 = vadd.f32 %v903, %v962
      %v991 = vadd.f32 %v904, %v963
      %v992 = vadd.f32 %v905, %v964
      %v993 = vadd.f32 %v906, %v965
      %v994 = vadd.f32 %v907, %v966
      %v995 = vadd.f32 %v908, %v967
      %v996 = vadd.f32 %v909, %v968
      %v997 = vadd.f32 %v910, %v969
      %v998 = vadd.f32 %v911, %v970
      %v999 = vadd.f32 %v912, %v971
      %v1000 = vadd.f32 %v913, %v972
      %v1001 = vadd.f32 %v914, %v973
      %v1002 = vadd.f32 %v915, %v974
      %v1003 = vadd.f32 %v916, %v975
      %v1004 = vadd.f32 %v917, %v976
      %v1005 = vadd.f32 %v918, %v977
      %v1006 = vadd.f32 %v919, %v978
      %v1007 = vadd.f32 %v920, %v979
      %v1008 = vadd.f32 %v921, %v980
      %v1009 = vadd.f32 %v922, %v981
      %v1010 = vadd.f32 %v923, %v982
      %v1011 = vadd.f32 %v924, %v983
      %v1012 = vadd.f32 %v925, %v984
      %v1013 = vadd.f32 %v926, %v985
      %v1014 = vadd.f32 %v927, %v986
      %v1015 = vld [vmem:[%s928 + $0x1] sm:$0xff]
      %v1016 = vld [vmem:[%s928 + $0x9] sm:$0x3f]
      %v1017 = vld [vmem:[%s928 + $0x11] sm:$0xff]
      %v1018 = vld [vmem:[%s928 + $0x19] sm:$0x3f]
      %v1019 = vld [vmem:[%s928 + $0x21] sm:$0xff]
      %v1020 = vld [vmem:[%s928 + $0x29] sm:$0x3f]
      %v1021 = vld [vmem:[%s928 + $0x31] sm:$0xff]
      %v1022 = vld [vmem:[%s928 + $0x39] sm:$0x3f]
      %v1023 = vld [vmem:[%s928 + $0x41] sm:$0xff]
      %v1024 = vld [vmem:[%s928 + $0x49] sm:$0x3f]
      %v1025 = vld [vmem:[%s928 + $0x51] sm:$0xff]
      %v1026 = vld [vmem:[%s928 + $0x59] sm:$0x3f]
      %v1027 = vld [vmem:[%s928 + $0x61] sm:$0xff]
      %v1028 = vld [vmem:[%s928 + $0x69] sm:$0x3f]
      %v1029 = vld [vmem:[%s928 + $0x71] sm:$0xff]
      %v1030 = vld [vmem:[%s928 + $0x79] sm:$0x3f]
      %v1031 = vld [vmem:[%s928 + $0x81] sm:$0xff]
      %v1032 = vld [vmem:[%s928 + $0x89] sm:$0x3f]
      %v1033 = vld [vmem:[%s928 + $0x91] sm:$0xff]
      %v1034 = vld [vmem:[%s928 + $0x99] sm:$0x3f]
      %v1035 = vld [vmem:[%s928 + $0xa1] sm:$0xff]
      %v1036 = vld [vmem:[%s928 + $0xa9] sm:$0x3f]
      %v1037 = vld [vmem:[%s928 + $0xb1] sm:$0xff]
      %v1038 = vld [vmem:[%s928 + $0xb9] sm:$0x3f]
      %v1039 = vld [vmem:[%s928 + $0xc1] sm:$0xff]
      %v1040 = vld [vmem:[%s928 + $0xc9] sm:$0x3f]
      %v1041 = vld [vmem:[%s928 + $0xd1] sm:$0xff]
      %v1042 = vld [vmem:[%s928 + $0xd9] sm:$0x3f]
      %v1043 = vld [vmem:[%s258 + $0x1] sm:$0x1]
      %v1044 = vperm.slane %v1043, 0
      %v1045 = vmul.f32 %v1044, %v1015
      %v1046 = vmul.f32 %v1044, %v1016
      %v1047 = vmul.f32 %v1044, %v1017
      %v1048 = vmul.f32 %v1044, %v1018
      %v1049 = vmul.f32 %v1044, %v1019
      %v1050 = vmul.f32 %v1044, %v1020
      %v1051 = vmul.f32 %v1044, %v1021
      %v1052 = vmul.f32 %v1044, %v1022
      %v1053 = vmul.f32 %v1044, %v1023
      %v1054 = vmul.f32 %v1044, %v1024
      %v1055 = vmul.f32 %v1044, %v1025
      %v1056 = vmul.f32 %v1044, %v1026
      %v1057 = vmul.f32 %v1044, %v1027
      %v1058 = vmul.f32 %v1044, %v1028
      %v1059 = vmul.f32 %v1044, %v1029
      %v1060 = vmul.f32 %v1044, %v1030
      %v1061 = vmul.f32 %v1044, %v1031
      %v1062 = vmul.f32 %v1044, %v1032
      %v1063 = vmul.f32 %v1044, %v1033
      %v1064 = vmul.f32 %v1044, %v1034
      %v1065 = vmul.f32 %v1044, %v1035
      %v1066 = vmul.f32 %v1044, %v1036
      %v1067 = vmul.f32 %v1044, %v1037
      %v1068 = vmul.f32 %v1044, %v1038
      %v1069 = vmul.f32 %v1044, %v1039
      %v1070 = vmul.f32 %v1044, %v1040
      %v1071 = vmul.f32 %v1044, %v1041
      %v1072 = vmul.f32 %v1044, %v1042
      %v1073 = vadd.f32 %v987, %v1045
      %v1074 = vadd.f32 %v988, %v1046
      %v1075 = vadd.f32 %v989, %v1047
      %v1076 = vadd.f32 %v990, %v1048
      %v1077 = vadd.f32 %v991, %v1049
      %v1078 = vadd.f32 %v992, %v1050
      %v1079 = vadd.f32 %v993, %v1051
      %v1080 = vadd.f32 %v994, %v1052
      %v1081 = vadd.f32 %v995, %v1053
      %v1082 = vadd.f32 %v996, %v1054
      %v1083 = vadd.f32 %v997, %v1055
      %v1084 = vadd.f32 %v998, %v1056
      %v1085 = vadd.f32 %v999, %v1057
      %v1086 = vadd.f32 %v1000, %v1058
      %v1087 = vadd.f32 %v1001, %v1059
      %v1088 = vadd.f32 %v1002, %v1060
      %v1089 = vadd.f32 %v1003, %v1061
      %v1090 = vadd.f32 %v1004, %v1062
      %v1091 = vadd.f32 %v1005, %v1063
      %v1092 = vadd.f32 %v1006, %v1064
      %v1093 = vadd.f32 %v1007, %v1065
      %v1094 = vadd.f32 %v1008, %v1066
      %v1095 = vadd.f32 %v1009, %v1067
      %v1096 = vadd.f32 %v1010, %v1068
      %v1097 = vadd.f32 %v1011, %v1069
      %v1098 = vadd.f32 %v1012, %v1070
      %v1099 = vadd.f32 %v1013, %v1071
      %v1100 = vadd.f32 %v1014, %v1072
      %v1101 = vld [vmem:[%s928 + $0x2] sm:$0xff]
      %v1102 = vld [vmem:[%s928 + $0xa] sm:$0x3f]
      %v1103 = vld [vmem:[%s928 + $0x12] sm:$0xff]
      %v1104 = vld [vmem:[%s928 + $0x1a] sm:$0x3f]
      %v1105 = vld [vmem:[%s928 + $0x22] sm:$0xff]
      %v1106 = vld [vmem:[%s928 + $0x2a] sm:$0x3f]
      %v1107 = vld [vmem:[%s928 + $0x32] sm:$0xff]
      %v1108 = vld [vmem:[%s928 + $0x3a] sm:$0x3f]
      %v1109 = vld [vmem:[%s928 + $0x42] sm:$0xff]
      %v1110 = vld [vmem:[%s928 + $0x4a] sm:$0x3f]
      %v1111 = vld [vmem:[%s928 + $0x52] sm:$0xff]
      %v1112 = vld [vmem:[%s928 + $0x5a] sm:$0x3f]
      %v1113 = vld [vmem:[%s928 + $0x62] sm:$0xff]
      %v1114 = vld [vmem:[%s928 + $0x6a] sm:$0x3f]
      %v1115 = vld [vmem:[%s928 + $0x72] sm:$0xff]
      %v1116 = vld [vmem:[%s928 + $0x7a] sm:$0x3f]
      %v1117 = vld [vmem:[%s928 + $0x82] sm:$0xff]
      %v1118 = vld [vmem:[%s928 + $0x8a] sm:$0x3f]
      %v1119 = vld [vmem:[%s928 + $0x92] sm:$0xff]
      %v1120 = vld [vmem:[%s928 + $0x9a] sm:$0x3f]
      %v1121 = vld [vmem:[%s928 + $0xa2] sm:$0xff]
      %v1122 = vld [vmem:[%s928 + $0xaa] sm:$0x3f]
      %v1123 = vld [vmem:[%s928 + $0xb2] sm:$0xff]
      %v1124 = vld [vmem:[%s928 + $0xba] sm:$0x3f]
      %v1125 = vld [vmem:[%s928 + $0xc2] sm:$0xff]
      %v1126 = vld [vmem:[%s928 + $0xca] sm:$0x3f]
      %v1127 = vld [vmem:[%s928 + $0xd2] sm:$0xff]
      %v1128 = vld [vmem:[%s928 + $0xda] sm:$0x3f]
      %v1129 = vld [vmem:[%s345 + $0x1] sm:$0x1]
      %v1130 = vperm.slane %v1129, 0
      %v1131 = vmul.f32 %v1130, %v1101
      %v1132 = vmul.f32 %v1130, %v1102
      %v1133 = vmul.f32 %v1130, %v1103
      %v1134 = vmul.f32 %v1130, %v1104
      %v1135 = vmul.f32 %v1130, %v1105
      %v1136 = vmul.f32 %v1130, %v1106
      %v1137 = vmul.f32 %v1130, %v1107
      %v1138 = vmul.f32 %v1130, %v1108
      %v1139 = vmul.f32 %v1130, %v1109
      %v1140 = vmul.f32 %v1130, %v1110
      %v1141 = vmul.f32 %v1130, %v1111
      %v1142 = vmul.f32 %v1130, %v1112
      %v1143 = vmul.f32 %v1130, %v1113
      %v1144 = vmul.f32 %v1130, %v1114
      %v1145 = vmul.f32 %v1130, %v1115
      %v1146 = vmul.f32 %v1130, %v1116
      %v1147 = vmul.f32 %v1130, %v1117
      %v1148 = vmul.f32 %v1130, %v1118
      %v1149 = vmul.f32 %v1130, %v1119
      %v1150 = vmul.f32 %v1130, %v1120
      %v1151 = vmul.f32 %v1130, %v1121
      %v1152 = vmul.f32 %v1130, %v1122
      %v1153 = vmul.f32 %v1130, %v1123
      %v1154 = vmul.f32 %v1130, %v1124
      %v1155 = vmul.f32 %v1130, %v1125
      %v1156 = vmul.f32 %v1130, %v1126
      %v1157 = vmul.f32 %v1130, %v1127
      %v1158 = vmul.f32 %v1130, %v1128
      %v1159 = vadd.f32 %v1073, %v1131
      %v1160 = vadd.f32 %v1074, %v1132
      %v1161 = vadd.f32 %v1075, %v1133
      %v1162 = vadd.f32 %v1076, %v1134
      %v1163 = vadd.f32 %v1077, %v1135
      %v1164 = vadd.f32 %v1078, %v1136
      %v1165 = vadd.f32 %v1079, %v1137
      %v1166 = vadd.f32 %v1080, %v1138
      %v1167 = vadd.f32 %v1081, %v1139
      %v1168 = vadd.f32 %v1082, %v1140
      %v1169 = vadd.f32 %v1083, %v1141
      %v1170 = vadd.f32 %v1084, %v1142
      %v1171 = vadd.f32 %v1085, %v1143
      %v1172 = vadd.f32 %v1086, %v1144
      %v1173 = vadd.f32 %v1087, %v1145
      %v1174 = vadd.f32 %v1088, %v1146
      %v1175 = vadd.f32 %v1089, %v1147
      %v1176 = vadd.f32 %v1090, %v1148
      %v1177 = vadd.f32 %v1091, %v1149
      %v1178 = vadd.f32 %v1092, %v1150
      %v1179 = vadd.f32 %v1093, %v1151
      %v1180 = vadd.f32 %v1094, %v1152
      %v1181 = vadd.f32 %v1095, %v1153
      %v1182 = vadd.f32 %v1096, %v1154
      %v1183 = vadd.f32 %v1097, %v1155
      %v1184 = vadd.f32 %v1098, %v1156
      %v1185 = vadd.f32 %v1099, %v1157
      %v1186 = vadd.f32 %v1100, %v1158
      %s1187 = scalar_lea.vmem %s138, 272
      %v1188 = vld [vmem:[%s1187] sm:$0xff]
      %v1189 = vld [vmem:[%s1187 + $0x8] sm:$0x3f]
      %v1190 = vld [vmem:[%s1187 + $0x10] sm:$0xff]
      %v1191 = vld [vmem:[%s1187 + $0x18] sm:$0x3f]
      %v1192 = vld [vmem:[%s1187 + $0x20] sm:$0xff]
      %v1193 = vld [vmem:[%s1187 + $0x28] sm:$0x3f]
      %v1194 = vld [vmem:[%s1187 + $0x30] sm:$0xff]
      %v1195 = vld [vmem:[%s1187 + $0x38] sm:$0x3f]
      %v1196 = vld [vmem:[%s1187 + $0x40] sm:$0xff]
      %v1197 = vld [vmem:[%s1187 + $0x48] sm:$0x3f]
      %v1198 = vld [vmem:[%s1187 + $0x50] sm:$0xff]
      %v1199 = vld [vmem:[%s1187 + $0x58] sm:$0x3f]
      %v1200 = vld [vmem:[%s1187 + $0x60] sm:$0xff]
      %v1201 = vld [vmem:[%s1187 + $0x68] sm:$0x3f]
      %v1202 = vld [vmem:[%s1187 + $0x70] sm:$0xff]
      %v1203 = vld [vmem:[%s1187 + $0x78] sm:$0x3f]
      %v1204 = vld [vmem:[%s1187 + $0x80] sm:$0xff]
      %v1205 = vld [vmem:[%s1187 + $0x88] sm:$0x3f]
      %v1206 = vld [vmem:[%s1187 + $0x90] sm:$0xff]
      %v1207 = vld [vmem:[%s1187 + $0x98] sm:$0x3f]
      %v1208 = vld [vmem:[%s1187 + $0xa0] sm:$0xff]
      %v1209 = vld [vmem:[%s1187 + $0xa8] sm:$0x3f]
      %v1210 = vld [vmem:[%s1187 + $0xb0] sm:$0xff]
      %v1211 = vld [vmem:[%s1187 + $0xb8] sm:$0x3f]
      %v1212 = vld [vmem:[%s1187 + $0xc0] sm:$0xff]
      %v1213 = vld [vmem:[%s1187 + $0xc8] sm:$0x3f]
      %v1214 = vld [vmem:[%s1187 + $0xd0] sm:$0xff]
      %v1215 = vld [vmem:[%s1187 + $0xd8] sm:$0x3f]
      %v1216 = vld [vmem:[%s433 + $0x1] sm:$0x1]
      %v1217 = vperm.slane %v1216, 0
      %v1218 = vmul.f32 %v1217, %v1188
      %v1219 = vmul.f32 %v1217, %v1189
      %v1220 = vmul.f32 %v1217, %v1190
      %v1221 = vmul.f32 %v1217, %v1191
      %v1222 = vmul.f32 %v1217, %v1192
      %v1223 = vmul.f32 %v1217, %v1193
      %v1224 = vmul.f32 %v1217, %v1194
      %v1225 = vmul.f32 %v1217, %v1195
      %v1226 = vmul.f32 %v1217, %v1196
      %v1227 = vmul.f32 %v1217, %v1197
      %v1228 = vmul.f32 %v1217, %v1198
      %v1229 = vmul.f32 %v1217, %v1199
      %v1230 = vmul.f32 %v1217, %v1200
      %v1231 = vmul.f32 %v1217, %v1201
      %v1232 = vmul.f32 %v1217, %v1202
      %v1233 = vmul.f32 %v1217, %v1203
      %v1234 = vmul.f32 %v1217, %v1204
      %v1235 = vmul.f32 %v1217, %v1205
      %v1236 = vmul.f32 %v1217, %v1206
      %v1237 = vmul.f32 %v1217, %v1207
      %v1238 = vmul.f32 %v1217, %v1208
      %v1239 = vmul.f32 %v1217, %v1209
      %v1240 = vmul.f32 %v1217, %v1210
      %v1241 = vmul.f32 %v1217, %v1211
      %v1242 = vmul.f32 %v1217, %v1212
      %v1243 = vmul.f32 %v1217, %v1213
      %v1244 = vmul.f32 %v1217, %v1214
      %v1245 = vmul.f32 %v1217, %v1215
      %v1246 = vadd.f32 %v1159, %v1218
      %v1247 = vadd.f32 %v1160, %v1219
      %v1248 = vadd.f32 %v1161, %v1220
      %v1249 = vadd.f32 %v1162, %v1221
      %v1250 = vadd.f32 %v1163, %v1222
      %v1251 = vadd.f32 %v1164, %v1223
      %v1252 = vadd.f32 %v1165, %v1224
      %v1253 = vadd.f32 %v1166, %v1225
      %v1254 = vadd.f32 %v1167, %v1226
      %v1255 = vadd.f32 %v1168, %v1227
      %v1256 = vadd.f32 %v1169, %v1228
      %v1257 = vadd.f32 %v1170, %v1229
      %v1258 = vadd.f32 %v1171, %v1230
      %v1259 = vadd.f32 %v1172, %v1231
      %v1260 = vadd.f32 %v1173, %v1232
      %v1261 = vadd.f32 %v1174, %v1233
      %v1262 = vadd.f32 %v1175, %v1234
      %v1263 = vadd.f32 %v1176, %v1235
      %v1264 = vadd.f32 %v1177, %v1236
      %v1265 = vadd.f32 %v1178, %v1237
      %v1266 = vadd.f32 %v1179, %v1238
      %v1267 = vadd.f32 %v1180, %v1239
      %v1268 = vadd.f32 %v1181, %v1240
      %v1269 = vadd.f32 %v1182, %v1241
      %v1270 = vadd.f32 %v1183, %v1242
      %v1271 = vadd.f32 %v1184, %v1243
      %v1272 = vadd.f32 %v1185, %v1244
      %v1273 = vadd.f32 %v1186, %v1245
      %v1274 = vld [vmem:[%s1187 + $0x1] sm:$0xff]
      %v1275 = vld [vmem:[%s1187 + $0x9] sm:$0x3f]
      %v1276 = vld [vmem:[%s1187 + $0x11] sm:$0xff]
      %v1277 = vld [vmem:[%s1187 + $0x19] sm:$0x3f]
      %v1278 = vld [vmem:[%s1187 + $0x21] sm:$0xff]
      %v1279 = vld [vmem:[%s1187 + $0x29] sm:$0x3f]
      %v1280 = vld [vmem:[%s1187 + $0x31] sm:$0xff]
      %v1281 = vld [vmem:[%s1187 + $0x39] sm:$0x3f]
      %v1282 = vld [vmem:[%s1187 + $0x41] sm:$0xff]
      %v1283 = vld [vmem:[%s1187 + $0x49] sm:$0x3f]
      %v1284 = vld [vmem:[%s1187 + $0x51] sm:$0xff]
      %v1285 = vld [vmem:[%s1187 + $0x59] sm:$0x3f]
      %v1286 = vld [vmem:[%s1187 + $0x61] sm:$0xff]
      %v1287 = vld [vmem:[%s1187 + $0x69] sm:$0x3f]
      %v1288 = vld [vmem:[%s1187 + $0x71] sm:$0xff]
      %v1289 = vld [vmem:[%s1187 + $0x79] sm:$0x3f]
      %v1290 = vld [vmem:[%s1187 + $0x81] sm:$0xff]
      %v1291 = vld [vmem:[%s1187 + $0x89] sm:$0x3f]
      %v1292 = vld [vmem:[%s1187 + $0x91] sm:$0xff]
      %v1293 = vld [vmem:[%s1187 + $0x99] sm:$0x3f]
      %v1294 = vld [vmem:[%s1187 + $0xa1] sm:$0xff]
      %v1295 = vld [vmem:[%s1187 + $0xa9] sm:$0x3f]
      %v1296 = vld [vmem:[%s1187 + $0xb1] sm:$0xff]
      %v1297 = vld [vmem:[%s1187 + $0xb9] sm:$0x3f]
      %v1298 = vld [vmem:[%s1187 + $0xc1] sm:$0xff]
      %v1299 = vld [vmem:[%s1187 + $0xc9] sm:$0x3f]
      %v1300 = vld [vmem:[%s1187 + $0xd1] sm:$0xff]
      %v1301 = vld [vmem:[%s1187 + $0xd9] sm:$0x3f]
      %v1302 = vld [vmem:[%s520 + $0x1] sm:$0x1]
      %v1303 = vperm.slane %v1302, 0
      %v1304 = vmul.f32 %v1303, %v1274
      %v1305 = vmul.f32 %v1303, %v1275
      %v1306 = vmul.f32 %v1303, %v1276
      %v1307 = vmul.f32 %v1303, %v1277
      %v1308 = vmul.f32 %v1303, %v1278
      %v1309 = vmul.f32 %v1303, %v1279
      %v1310 = vmul.f32 %v1303, %v1280
      %v1311 = vmul.f32 %v1303, %v1281
      %v1312 = vmul.f32 %v1303, %v1282
      %v1313 = vmul.f32 %v1303, %v1283
      %v1314 = vmul.f32 %v1303, %v1284
      %v1315 = vmul.f32 %v1303, %v1285
      %v1316 = vmul.f32 %v1303, %v1286
      %v1317 = vmul.f32 %v1303, %v1287
      %v1318 = vmul.f32 %v1303, %v1288
      %v1319 = vmul.f32 %v1303, %v1289
      %v1320 = vmul.f32 %v1303, %v1290
      %v1321 = vmul.f32 %v1303, %v1291
      %v1322 = vmul.f32 %v1303, %v1292
      %v1323 = vmul.f32 %v1303, %v1293
      %v1324 = vmul.f32 %v1303, %v1294
      %v1325 = vmul.f32 %v1303, %v1295
      %v1326 = vmul.f32 %v1303, %v1296
      %v1327 = vmul.f32 %v1303, %v1297
      %v1328 = vmul.f32 %v1303, %v1298
      %v1329 = vmul.f32 %v1303, %v1299
      %v1330 = vmul.f32 %v1303, %v1300
      %v1331 = vmul.f32 %v1303, %v1301
      %v1332 = vadd.f32 %v1246, %v1304
      %v1333 = vadd.f32 %v1247, %v1305
      %v1334 = vadd.f32 %v1248, %v1306
      %v1335 = vadd.f32 %v1249, %v1307
      %v1336 = vadd.f32 %v1250, %v1308
      %v1337 = vadd.f32 %v1251, %v1309
      %v1338 = vadd.f32 %v1252, %v1310
      %v1339 = vadd.f32 %v1253, %v1311
      %v1340 = vadd.f32 %v1254, %v1312
      %v1341 = vadd.f32 %v1255, %v1313
      %v1342 = vadd.f32 %v1256, %v1314
      %v1343 = vadd.f32 %v1257, %v1315
      %v1344 = vadd.f32 %v1258, %v1316
      %v1345 = vadd.f32 %v1259, %v1317
      %v1346 = vadd.f32 %v1260, %v1318
      %v1347 = vadd.f32 %v1261, %v1319
      %v1348 = vadd.f32 %v1262, %v1320
      %v1349 = vadd.f32 %v1263, %v1321
      %v1350 = vadd.f32 %v1264, %v1322
      %v1351 = vadd.f32 %v1265, %v1323
      %v1352 = vadd.f32 %v1266, %v1324
      %v1353 = vadd.f32 %v1267, %v1325
      %v1354 = vadd.f32 %v1268, %v1326
      %v1355 = vadd.f32 %v1269, %v1327
      %v1356 = vadd.f32 %v1270, %v1328
      %v1357 = vadd.f32 %v1271, %v1329
      %v1358 = vadd.f32 %v1272, %v1330
      %v1359 = vadd.f32 %v1273, %v1331
      %v1360 = vld [vmem:[%s1187 + $0x2] sm:$0xff]
      %v1361 = vld [vmem:[%s1187 + $0xa] sm:$0x3f]
      %v1362 = vld [vmem:[%s1187 + $0x12] sm:$0xff]
      %v1363 = vld [vmem:[%s1187 + $0x1a] sm:$0x3f]
      %v1364 = vld [vmem:[%s1187 + $0x22] sm:$0xff]
      %v1365 = vld [vmem:[%s1187 + $0x2a] sm:$0x3f]
      %v1366 = vld [vmem:[%s1187 + $0x32] sm:$0xff]
      %v1367 = vld [vmem:[%s1187 + $0x3a] sm:$0x3f]
      %v1368 = vld [vmem:[%s1187 + $0x42] sm:$0xff]
      %v1369 = vld [vmem:[%s1187 + $0x4a] sm:$0x3f]
      %v1370 = vld [vmem:[%s1187 + $0x52] sm:$0xff]
      %v1371 = vld [vmem:[%s1187 + $0x5a] sm:$0x3f]
      %v1372 = vld [vmem:[%s1187 + $0x62] sm:$0xff]
      %v1373 = vld [vmem:[%s1187 + $0x6a] sm:$0x3f]
      %v1374 = vld [vmem:[%s1187 + $0x72] sm:$0xff]
      %v1375 = vld [vmem:[%s1187 + $0x7a] sm:$0x3f]
      %v1376 = vld [vmem:[%s1187 + $0x82] sm:$0xff]
      %v1377 = vld [vmem:[%s1187 + $0x8a] sm:$0x3f]
      %v1378 = vld [vmem:[%s1187 + $0x92] sm:$0xff]
      %v1379 = vld [vmem:[%s1187 + $0x9a] sm:$0x3f]
      %v1380 = vld [vmem:[%s1187 + $0xa2] sm:$0xff]
      %v1381 = vld [vmem:[%s1187 + $0xaa] sm:$0x3f]
      %v1382 = vld [vmem:[%s1187 + $0xb2] sm:$0xff]
      %v1383 = vld [vmem:[%s1187 + $0xba] sm:$0x3f]
      %v1384 = vld [vmem:[%s1187 + $0xc2] sm:$0xff]
      %v1385 = vld [vmem:[%s1187 + $0xca] sm:$0x3f]
      %v1386 = vld [vmem:[%s1187 + $0xd2] sm:$0xff]
      %v1387 = vld [vmem:[%s1187 + $0xda] sm:$0x3f]
      %v1388 = vld [vmem:[%s607 + $0x1] sm:$0x1]
      %v1389 = vperm.slane %v1388, 0
      %v1390 = vmul.f32 %v1389, %v1360
      %v1391 = vmul.f32 %v1389, %v1361
      %v1392 = vmul.f32 %v1389, %v1362
      %v1393 = vmul.f32 %v1389, %v1363
      %v1394 = vmul.f32 %v1389, %v1364
      %v1395 = vmul.f32 %v1389, %v1365
      %v1396 = vmul.f32 %v1389, %v1366
      %v1397 = vmul.f32 %v1389, %v1367
      %v1398 = vmul.f32 %v1389, %v1368
      %v1399 = vmul.f32 %v1389, %v1369
      %v1400 = vmul.f32 %v1389, %v1370
      %v1401 = vmul.f32 %v1389, %v1371
      %v1402 = vmul.f32 %v1389, %v1372
      %v1403 = vmul.f32 %v1389, %v1373
      %v1404 = vmul.f32 %v1389, %v1374
      %v1405 = vmul.f32 %v1389, %v1375
      %v1406 = vmul.f32 %v1389, %v1376
      %v1407 = vmul.f32 %v1389, %v1377
      %v1408 = vmul.f32 %v1389, %v1378
      %v1409 = vmul.f32 %v1389, %v1379
      %v1410 = vmul.f32 %v1389, %v1380
      %v1411 = vmul.f32 %v1389, %v1381
      %v1412 = vmul.f32 %v1389, %v1382
      %v1413 = vmul.f32 %v1389, %v1383
      %v1414 = vmul.f32 %v1389, %v1384
      %v1415 = vmul.f32 %v1389, %v1385
      %v1416 = vmul.f32 %v1389, %v1386
      %v1417 = vmul.f32 %v1389, %v1387
      %v1418 = vadd.f32 %v1332, %v1390
      %v1419 = vadd.f32 %v1333, %v1391
      %v1420 = vadd.f32 %v1334, %v1392
      %v1421 = vadd.f32 %v1335, %v1393
      %v1422 = vadd.f32 %v1336, %v1394
      %v1423 = vadd.f32 %v1337, %v1395
      %v1424 = vadd.f32 %v1338, %v1396
      %v1425 = vadd.f32 %v1339, %v1397
      %v1426 = vadd.f32 %v1340, %v1398
      %v1427 = vadd.f32 %v1341, %v1399
      %v1428 = vadd.f32 %v1342, %v1400
      %v1429 = vadd.f32 %v1343, %v1401
      %v1430 = vadd.f32 %v1344, %v1402
      %v1431 = vadd.f32 %v1345, %v1403
      %v1432 = vadd.f32 %v1346, %v1404
      %v1433 = vadd.f32 %v1347, %v1405
      %v1434 = vadd.f32 %v1348, %v1406
      %v1435 = vadd.f32 %v1349, %v1407
      %v1436 = vadd.f32 %v1350, %v1408
      %v1437 = vadd.f32 %v1351, %v1409
      %v1438 = vadd.f32 %v1352, %v1410
      %v1439 = vadd.f32 %v1353, %v1411
      %v1440 = vadd.f32 %v1354, %v1412
      %v1441 = vadd.f32 %v1355, %v1413
      %v1442 = vadd.f32 %v1356, %v1414
      %v1443 = vadd.f32 %v1357, %v1415
      %v1444 = vadd.f32 %v1358, %v1416
      %v1445 = vadd.f32 %v1359, %v1417
      %s1446 = scalar_lea.vmem %s138, 288
      %v1447 = vld [vmem:[%s1446] sm:$0xff]
      %v1448 = vld [vmem:[%s1446 + $0x8] sm:$0x3f]
      %v1449 = vld [vmem:[%s1446 + $0x10] sm:$0xff]
      %v1450 = vld [vmem:[%s1446 + $0x18] sm:$0x3f]
      %v1451 = vld [vmem:[%s1446 + $0x20] sm:$0xff]
      %v1452 = vld [vmem:[%s1446 + $0x28] sm:$0x3f]
      %v1453 = vld [vmem:[%s1446 + $0x30] sm:$0xff]
      %v1454 = vld [vmem:[%s1446 + $0x38] sm:$0x3f]
      %v1455 = vld [vmem:[%s1446 + $0x40] sm:$0xff]
      %v1456 = vld [vmem:[%s1446 + $0x48] sm:$0x3f]
      %v1457 = vld [vmem:[%s1446 + $0x50] sm:$0xff]
      %v1458 = vld [vmem:[%s1446 + $0x58] sm:$0x3f]
      %v1459 = vld [vmem:[%s1446 + $0x60] sm:$0xff]
      %v1460 = vld [vmem:[%s1446 + $0x68] sm:$0x3f]
      %v1461 = vld [vmem:[%s1446 + $0x70] sm:$0xff]
      %v1462 = vld [vmem:[%s1446 + $0x78] sm:$0x3f]
      %v1463 = vld [vmem:[%s1446 + $0x80] sm:$0xff]
      %v1464 = vld [vmem:[%s1446 + $0x88] sm:$0x3f]
      %v1465 = vld [vmem:[%s1446 + $0x90] sm:$0xff]
      %v1466 = vld [vmem:[%s1446 + $0x98] sm:$0x3f]
      %v1467 = vld [vmem:[%s1446 + $0xa0] sm:$0xff]
      %v1468 = vld [vmem:[%s1446 + $0xa8] sm:$0x3f]
      %v1469 = vld [vmem:[%s1446 + $0xb0] sm:$0xff]
      %v1470 = vld [vmem:[%s1446 + $0xb8] sm:$0x3f]
      %v1471 = vld [vmem:[%s1446 + $0xc0] sm:$0xff]
      %v1472 = vld [vmem:[%s1446 + $0xc8] sm:$0x3f]
      %v1473 = vld [vmem:[%s1446 + $0xd0] sm:$0xff]
      %v1474 = vld [vmem:[%s1446 + $0xd8] sm:$0x3f]
      %v1475 = vld [vmem:[%s695 + $0x1] sm:$0x1]
      %v1476 = vperm.slane %v1475, 0
      %v1477 = vmul.f32 %v1476, %v1447
      %v1478 = vmul.f32 %v1476, %v1448
      %v1479 = vmul.f32 %v1476, %v1449
      %v1480 = vmul.f32 %v1476, %v1450
      %v1481 = vmul.f32 %v1476, %v1451
      %v1482 = vmul.f32 %v1476, %v1452
      %v1483 = vmul.f32 %v1476, %v1453
      %v1484 = vmul.f32 %v1476, %v1454
      %v1485 = vmul.f32 %v1476, %v1455
      %v1486 = vmul.f32 %v1476, %v1456
      %v1487 = vmul.f32 %v1476, %v1457
      %v1488 = vmul.f32 %v1476, %v1458
      %v1489 = vmul.f32 %v1476, %v1459
      %v1490 = vmul.f32 %v1476, %v1460
      %v1491 = vmul.f32 %v1476, %v1461
      %v1492 = vmul.f32 %v1476, %v1462
      %v1493 = vmul.f32 %v1476, %v1463
      %v1494 = vmul.f32 %v1476, %v1464
      %v1495 = vmul.f32 %v1476, %v1465
      %v1496 = vmul.f32 %v1476, %v1466
      %v1497 = vmul.f32 %v1476, %v1467
      %v1498 = vmul.f32 %v1476, %v1468
      %v1499 = vmul.f32 %v1476, %v1469
      %v1500 = vmul.f32 %v1476, %v1470
      %v1501 = vmul.f32 %v1476, %v1471
      %v1502 = vmul.f32 %v1476, %v1472
      %v1503 = vmul.f32 %v1476, %v1473
      %v1504 = vmul.f32 %v1476, %v1474
      %v1505 = vadd.f32 %v1418, %v1477
      %v1506 = vadd.f32 %v1419, %v1478
      %v1507 = vadd.f32 %v1420, %v1479
      %v1508 = vadd.f32 %v1421, %v1480
      %v1509 = vadd.f32 %v1422, %v1481
      %v1510 = vadd.f32 %v1423, %v1482
      %v1511 = vadd.f32 %v1424, %v1483
      %v1512 = vadd.f32 %v1425, %v1484
      %v1513 = vadd.f32 %v1426, %v1485
      %v1514 = vadd.f32 %v1427, %v1486
      %v1515 = vadd.f32 %v1428, %v1487
      %v1516 = vadd.f32 %v1429, %v1488
      %v1517 = vadd.f32 %v1430, %v1489
      %v1518 = vadd.f32 %v1431, %v1490
      %v1519 = vadd.f32 %v1432, %v1491
      %v1520 = vadd.f32 %v1433, %v1492
      %v1521 = vadd.f32 %v1434, %v1493
      %v1522 = vadd.f32 %v1435, %v1494
      %v1523 = vadd.f32 %v1436, %v1495
      %v1524 = vadd.f32 %v1437, %v1496
      %v1525 = vadd.f32 %v1438, %v1497
      %v1526 = vadd.f32 %v1439, %v1498
      %v1527 = vadd.f32 %v1440, %v1499
      %v1528 = vadd.f32 %v1441, %v1500
      %v1529 = vadd.f32 %v1442, %v1501
      %v1530 = vadd.f32 %v1443, %v1502
      %v1531 = vadd.f32 %v1444, %v1503
      %v1532 = vadd.f32 %v1445, %v1504
      %v1533 = vld [vmem:[%s1446 + $0x1] sm:$0xff]
      %v1534 = vld [vmem:[%s1446 + $0x9] sm:$0x3f]
      %v1535 = vld [vmem:[%s1446 + $0x11] sm:$0xff]
      %v1536 = vld [vmem:[%s1446 + $0x19] sm:$0x3f]
      %v1537 = vld [vmem:[%s1446 + $0x21] sm:$0xff]
      %v1538 = vld [vmem:[%s1446 + $0x29] sm:$0x3f]
      %v1539 = vld [vmem:[%s1446 + $0x31] sm:$0xff]
      %v1540 = vld [vmem:[%s1446 + $0x39] sm:$0x3f]
      %v1541 = vld [vmem:[%s1446 + $0x41] sm:$0xff]
      %v1542 = vld [vmem:[%s1446 + $0x49] sm:$0x3f]
      %v1543 = vld [vmem:[%s1446 + $0x51] sm:$0xff]
      %v1544 = vld [vmem:[%s1446 + $0x59] sm:$0x3f]
      %v1545 = vld [vmem:[%s1446 + $0x61] sm:$0xff]
      %v1546 = vld [vmem:[%s1446 + $0x69] sm:$0x3f]
      %v1547 = vld [vmem:[%s1446 + $0x71] sm:$0xff]
      %v1548 = vld [vmem:[%s1446 + $0x79] sm:$0x3f]
      %v1549 = vld [vmem:[%s1446 + $0x81] sm:$0xff]
      %v1550 = vld [vmem:[%s1446 + $0x89] sm:$0x3f]
      %v1551 = vld [vmem:[%s1446 + $0x91] sm:$0xff]
      %v1552 = vld [vmem:[%s1446 + $0x99] sm:$0x3f]
      %v1553 = vld [vmem:[%s1446 + $0xa1] sm:$0xff]
      %v1554 = vld [vmem:[%s1446 + $0xa9] sm:$0x3f]
      %v1555 = vld [vmem:[%s1446 + $0xb1] sm:$0xff]
      %v1556 = vld [vmem:[%s1446 + $0xb9] sm:$0x3f]
      %v1557 = vld [vmem:[%s1446 + $0xc1] sm:$0xff]
      %v1558 = vld [vmem:[%s1446 + $0xc9] sm:$0x3f]
      %v1559 = vld [vmem:[%s1446 + $0xd1] sm:$0xff]
      %v1560 = vld [vmem:[%s1446 + $0xd9] sm:$0x3f]
      %v1561 = vld [vmem:[%s782 + $0x1] sm:$0x1]
      %v1562 = vperm.slane %v1561, 0
      %v1563 = vmul.f32 %v1562, %v1533
      %v1564 = vmul.f32 %v1562, %v1534
      %v1565 = vmul.f32 %v1562, %v1535
      %v1566 = vmul.f32 %v1562, %v1536
      %v1567 = vmul.f32 %v1562, %v1537
      %v1568 = vmul.f32 %v1562, %v1538
      %v1569 = vmul.f32 %v1562, %v1539
      %v1570 = vmul.f32 %v1562, %v1540
      %v1571 = vmul.f32 %v1562, %v1541
      %v1572 = vmul.f32 %v1562, %v1542
      %v1573 = vmul.f32 %v1562, %v1543
      %v1574 = vmul.f32 %v1562, %v1544
      %v1575 = vmul.f32 %v1562, %v1545
      %v1576 = vmul.f32 %v1562, %v1546
      %v1577 = vmul.f32 %v1562, %v1547
      %v1578 = vmul.f32 %v1562, %v1548
      %v1579 = vmul.f32 %v1562, %v1549
      %v1580 = vmul.f32 %v1562, %v1550
      %v1581 = vmul.f32 %v1562, %v1551
      %v1582 = vmul.f32 %v1562, %v1552
      %v1583 = vmul.f32 %v1562, %v1553
      %v1584 = vmul.f32 %v1562, %v1554
      %v1585 = vmul.f32 %v1562, %v1555
      %v1586 = vmul.f32 %v1562, %v1556
      %v1587 = vmul.f32 %v1562, %v1557
      %v1588 = vmul.f32 %v1562, %v1558
      %v1589 = vmul.f32 %v1562, %v1559
      %v1590 = vmul.f32 %v1562, %v1560
      %v1591 = vadd.f32 %v1505, %v1563
      %v1592 = vadd.f32 %v1506, %v1564
      %v1593 = vadd.f32 %v1507, %v1565
      %v1594 = vadd.f32 %v1508, %v1566
      %v1595 = vadd.f32 %v1509, %v1567
      %v1596 = vadd.f32 %v1510, %v1568
      %v1597 = vadd.f32 %v1511, %v1569
      %v1598 = vadd.f32 %v1512, %v1570
      %v1599 = vadd.f32 %v1513, %v1571
      %v1600 = vadd.f32 %v1514, %v1572
      %v1601 = vadd.f32 %v1515, %v1573
      %v1602 = vadd.f32 %v1516, %v1574
      %v1603 = vadd.f32 %v1517, %v1575
      %v1604 = vadd.f32 %v1518, %v1576
      %v1605 = vadd.f32 %v1519, %v1577
      %v1606 = vadd.f32 %v1520, %v1578
      %v1607 = vadd.f32 %v1521, %v1579
      %v1608 = vadd.f32 %v1522, %v1580
      %v1609 = vadd.f32 %v1523, %v1581
      %v1610 = vadd.f32 %v1524, %v1582
      %v1611 = vadd.f32 %v1525, %v1583
      %v1612 = vadd.f32 %v1526, %v1584
      %v1613 = vadd.f32 %v1527, %v1585
      %v1614 = vadd.f32 %v1528, %v1586
      %v1615 = vadd.f32 %v1529, %v1587
      %v1616 = vadd.f32 %v1530, %v1588
      %v1617 = vadd.f32 %v1531, %v1589
      %v1618 = vadd.f32 %v1532, %v1590
      %v1619 = vld [vmem:[%s1446 + $0x2] sm:$0xff]
      %v1620 = vld [vmem:[%s1446 + $0xa] sm:$0x3f]
      %v1621 = vld [vmem:[%s1446 + $0x12] sm:$0xff]
      %v1622 = vld [vmem:[%s1446 + $0x1a] sm:$0x3f]
      %v1623 = vld [vmem:[%s1446 + $0x22] sm:$0xff]
      %v1624 = vld [vmem:[%s1446 + $0x2a] sm:$0x3f]
      %v1625 = vld [vmem:[%s1446 + $0x32] sm:$0xff]
      %v1626 = vld [vmem:[%s1446 + $0x3a] sm:$0x3f]
      %v1627 = vld [vmem:[%s1446 + $0x42] sm:$0xff]
      %v1628 = vld [vmem:[%s1446 + $0x4a] sm:$0x3f]
      %v1629 = vld [vmem:[%s1446 + $0x52] sm:$0xff]
      %v1630 = vld [vmem:[%s1446 + $0x5a] sm:$0x3f]
      %v1631 = vld [vmem:[%s1446 + $0x62] sm:$0xff]
      %v1632 = vld [vmem:[%s1446 + $0x6a] sm:$0x3f]
      %v1633 = vld [vmem:[%s1446 + $0x72] sm:$0xff]
      %v1634 = vld [vmem:[%s1446 + $0x7a] sm:$0x3f]
      %v1635 = vld [vmem:[%s1446 + $0x82] sm:$0xff]
      %v1636 = vld [vmem:[%s1446 + $0x8a] sm:$0x3f]
      %v1637 = vld [vmem:[%s1446 + $0x92] sm:$0xff]
      %v1638 = vld [vmem:[%s1446 + $0x9a] sm:$0x3f]
      %v1639 = vld [vmem:[%s1446 + $0xa2] sm:$0xff]
      %v1640 = vld [vmem:[%s1446 + $0xaa] sm:$0x3f]
      %v1641 = vld [vmem:[%s1446 + $0xb2] sm:$0xff]
      %v1642 = vld [vmem:[%s1446 + $0xba] sm:$0x3f]
      %v1643 = vld [vmem:[%s1446 + $0xc2] sm:$0xff]
      %v1644 = vld [vmem:[%s1446 + $0xca] sm:$0x3f]
      %v1645 = vld [vmem:[%s1446 + $0xd2] sm:$0xff]
      %v1646 = vld [vmem:[%s1446 + $0xda] sm:$0x3f]
      %v1647 = vld [vmem:[%s869 + $0x1] sm:$0x1]
      %v1648 = vperm.slane %v1647, 0
      %v1649 = vmul.f32 %v1648, %v1619
      %v1650 = vmul.f32 %v1648, %v1620
      %v1651 = vmul.f32 %v1648, %v1621
      %v1652 = vmul.f32 %v1648, %v1622
      %v1653 = vmul.f32 %v1648, %v1623
      %v1654 = vmul.f32 %v1648, %v1624
      %v1655 = vmul.f32 %v1648, %v1625
      %v1656 = vmul.f32 %v1648, %v1626
      %v1657 = vmul.f32 %v1648, %v1627
      %v1658 = vmul.f32 %v1648, %v1628
      %v1659 = vmul.f32 %v1648, %v1629
      %v1660 = vmul.f32 %v1648, %v1630
      %v1661 = vmul.f32 %v1648, %v1631
      %v1662 = vmul.f32 %v1648, %v1632
      %v1663 = vmul.f32 %v1648, %v1633
      %v1664 = vmul.f32 %v1648, %v1634
      %v1665 = vmul.f32 %v1648, %v1635
      %v1666 = vmul.f32 %v1648, %v1636
      %v1667 = vmul.f32 %v1648, %v1637
      %v1668 = vmul.f32 %v1648, %v1638
      %v1669 = vmul.f32 %v1648, %v1639
      %v1670 = vmul.f32 %v1648, %v1640
      %v1671 = vmul.f32 %v1648, %v1641
      %v1672 = vmul.f32 %v1648, %v1642
      %v1673 = vmul.f32 %v1648, %v1643
      %v1674 = vmul.f32 %v1648, %v1644
      %v1675 = vmul.f32 %v1648, %v1645
      %v1676 = vmul.f32 %v1648, %v1646
      %v1677 = vadd.f32 %v1591, %v1649
      %v1678 = vadd.f32 %v1592, %v1650
      %v1679 = vadd.f32 %v1593, %v1651
      %v1680 = vadd.f32 %v1594, %v1652
      %v1681 = vadd.f32 %v1595, %v1653
      %v1682 = vadd.f32 %v1596, %v1654
      %v1683 = vadd.f32 %v1597, %v1655
      %v1684 = vadd.f32 %v1598, %v1656
      %v1685 = vadd.f32 %v1599, %v1657
      %v1686 = vadd.f32 %v1600, %v1658
      %v1687 = vadd.f32 %v1601, %v1659
      %v1688 = vadd.f32 %v1602, %v1660
      %v1689 = vadd.f32 %v1603, %v1661
      %v1690 = vadd.f32 %v1604, %v1662
      %v1691 = vadd.f32 %v1605, %v1663
      %v1692 = vadd.f32 %v1606, %v1664
      %v1693 = vadd.f32 %v1607, %v1665
      %v1694 = vadd.f32 %v1608, %v1666
      %v1695 = vadd.f32 %v1609, %v1667
      %v1696 = vadd.f32 %v1610, %v1668
      %v1697 = vadd.f32 %v1611, %v1669
      %v1698 = vadd.f32 %v1612, %v1670
      %v1699 = vadd.f32 %v1613, %v1671
      %v1700 = vadd.f32 %v1614, %v1672
      %v1701 = vadd.f32 %v1615, %v1673
      %v1702 = vadd.f32 %v1616, %v1674
      %v1703 = vadd.f32 %v1617, %v1675
      %v1704 = vadd.f32 %v1618, %v1676
      %1705 = vst [vmem:[%s143] sm:$0xff] %v1677
      %1706 = vst [vmem:[%s143 + $0x8] sm:$0x3f] %v1678
      %1707 = vst [vmem:[%s143 + $0x10] sm:$0xff] %v1679
      %1708 = vst [vmem:[%s143 + $0x18] sm:$0x3f] %v1680
      %1709 = vst [vmem:[%s143 + $0x20] sm:$0xff] %v1681
      %1710 = vst [vmem:[%s143 + $0x28] sm:$0x3f] %v1682
      %1711 = vst [vmem:[%s143 + $0x30] sm:$0xff] %v1683
      %1712 = vst [vmem:[%s143 + $0x38] sm:$0x3f] %v1684
      %1713 = vst [vmem:[%s143 + $0x40] sm:$0xff] %v1685
      %1714 = vst [vmem:[%s143 + $0x48] sm:$0x3f] %v1686
      %1715 = vst [vmem:[%s143 + $0x50] sm:$0xff] %v1687
      %1716 = vst [vmem:[%s143 + $0x58] sm:$0x3f] %v1688
      %1717 = vst [vmem:[%s143 + $0x60] sm:$0xff] %v1689
      %1718 = vst [vmem:[%s143 + $0x68] sm:$0x3f] %v1690
      %1719 = vst [vmem:[%s143 + $0x70] sm:$0xff] %v1691
      %1720 = vst [vmem:[%s143 + $0x78] sm:$0x3f] %v1692
      %1721 = vst [vmem:[%s143 + $0x80] sm:$0xff] %v1693
      %1722 = vst [vmem:[%s143 + $0x88] sm:$0x3f] %v1694
      %1723 = vst [vmem:[%s143 + $0x90] sm:$0xff] %v1695
      %1724 = vst [vmem:[%s143 + $0x98] sm:$0x3f] %v1696
      %1725 = vst [vmem:[%s143 + $0xa0] sm:$0xff] %v1697
      %1726 = vst [vmem:[%s143 + $0xa8] sm:$0x3f] %v1698
      %1727 = vst [vmem:[%s143 + $0xb0] sm:$0xff] %v1699
      %1728 = vst [vmem:[%s143 + $0xb8] sm:$0x3f] %v1700
      %1729 = vst [vmem:[%s143 + $0xc0] sm:$0xff] %v1701
      %1730 = vst [vmem:[%s143 + $0xc8] sm:$0x3f] %v1702
      %1731 = vst [vmem:[%s143 + $0xd0] sm:$0xff] %v1703
      %1732 = vst [vmem:[%s143 + $0xd8] sm:$0x3f] %v1704
      %v1733 = vld [vmem:[%s138] sm:$0xff]
      %v1734 = vld [vmem:[%s138 + $0x8] sm:$0x3f]
      %v1735 = vld [vmem:[%s138 + $0x10] sm:$0xff]
      %v1736 = vld [vmem:[%s138 + $0x18] sm:$0x3f]
      %v1737 = vld [vmem:[%s138 + $0x20] sm:$0xff]
      %v1738 = vld [vmem:[%s138 + $0x28] sm:$0x3f]
      %v1739 = vld [vmem:[%s138 + $0x30] sm:$0xff]
      %v1740 = vld [vmem:[%s138 + $0x38] sm:$0x3f]
      %v1741 = vld [vmem:[%s138 + $0x40] sm:$0xff]
      %v1742 = vld [vmem:[%s138 + $0x48] sm:$0x3f]
      %v1743 = vld [vmem:[%s138 + $0x50] sm:$0xff]
      %v1744 = vld [vmem:[%s138 + $0x58] sm:$0x3f]
      %v1745 = vld [vmem:[%s138 + $0x60] sm:$0xff]
      %v1746 = vld [vmem:[%s138 + $0x68] sm:$0x3f]
      %v1747 = vld [vmem:[%s138 + $0x70] sm:$0xff]
      %v1748 = vld [vmem:[%s138 + $0x78] sm:$0x3f]
      %v1749 = vld [vmem:[%s138 + $0x80] sm:$0xff]
      %v1750 = vld [vmem:[%s138 + $0x88] sm:$0x3f]
      %v1751 = vld [vmem:[%s138 + $0x90] sm:$0xff]
      %v1752 = vld [vmem:[%s138 + $0x98] sm:$0x3f]
      %v1753 = vld [vmem:[%s138 + $0xa0] sm:$0xff]
      %v1754 = vld [vmem:[%s138 + $0xa8] sm:$0x3f]
      %v1755 = vld [vmem:[%s138 + $0xb0] sm:$0xff]
      %v1756 = vld [vmem:[%s138 + $0xb8] sm:$0x3f]
      %v1757 = vld [vmem:[%s138 + $0xc0] sm:$0xff]
      %v1758 = vld [vmem:[%s138 + $0xc8] sm:$0x3f]
      %v1759 = vld [vmem:[%s138 + $0xd0] sm:$0xff]
      %v1760 = vld [vmem:[%s138 + $0xd8] sm:$0x3f]
      %s1761 = scalar_lea.vmem %s1, 2
      %v1762 = vld [vmem:[%s1761] sm:$0x1]
      %v1763 = vperm.slane %v1762, 0
      %v1764 = vmul.f32 %v1763, %v1733
      %v1765 = vmul.f32 %v1763, %v1734
      %v1766 = vmul.f32 %v1763, %v1735
      %v1767 = vmul.f32 %v1763, %v1736
      %v1768 = vmul.f32 %v1763, %v1737
      %v1769 = vmul.f32 %v1763, %v1738
      %v1770 = vmul.f32 %v1763, %v1739
      %v1771 = vmul.f32 %v1763, %v1740
      %v1772 = vmul.f32 %v1763, %v1741
      %v1773 = vmul.f32 %v1763, %v1742
      %v1774 = vmul.f32 %v1763, %v1743
      %v1775 = vmul.f32 %v1763, %v1744
      %v1776 = vmul.f32 %v1763, %v1745
      %v1777 = vmul.f32 %v1763, %v1746
      %v1778 = vmul.f32 %v1763, %v1747
      %v1779 = vmul.f32 %v1763, %v1748
      %v1780 = vmul.f32 %v1763, %v1749
      %v1781 = vmul.f32 %v1763, %v1750
      %v1782 = vmul.f32 %v1763, %v1751
      %v1783 = vmul.f32 %v1763, %v1752
      %v1784 = vmul.f32 %v1763, %v1753
      %v1785 = vmul.f32 %v1763, %v1754
      %v1786 = vmul.f32 %v1763, %v1755
      %v1787 = vmul.f32 %v1763, %v1756
      %v1788 = vmul.f32 %v1763, %v1757
      %v1789 = vmul.f32 %v1763, %v1758
      %v1790 = vmul.f32 %v1763, %v1759
      %v1791 = vmul.f32 %v1763, %v1760
      %v1792 = vadd.f32 %v1764, 0.0
      %v1793 = vadd.f32 %v1765, 0.0
      %v1794 = vadd.f32 %v1766, 0.0
      %v1795 = vadd.f32 %v1767, 0.0
      %v1796 = vadd.f32 %v1768, 0.0
      %v1797 = vadd.f32 %v1769, 0.0
      %v1798 = vadd.f32 %v1770, 0.0
      %v1799 = vadd.f32 %v1771, 0.0
      %v1800 = vadd.f32 %v1772, 0.0
      %v1801 = vadd.f32 %v1773, 0.0
      %v1802 = vadd.f32 %v1774, 0.0
      %v1803 = vadd.f32 %v1775, 0.0
      %v1804 = vadd.f32 %v1776, 0.0
      %v1805 = vadd.f32 %v1777, 0.0
      %v1806 = vadd.f32 %v1778, 0.0
      %v1807 = vadd.f32 %v1779, 0.0
      %v1808 = vadd.f32 %v1780, 0.0
      %v1809 = vadd.f32 %v1781, 0.0
      %v1810 = vadd.f32 %v1782, 0.0
      %v1811 = vadd.f32 %v1783, 0.0
      %v1812 = vadd.f32 %v1784, 0.0
      %v1813 = vadd.f32 %v1785, 0.0
      %v1814 = vadd.f32 %v1786, 0.0
      %v1815 = vadd.f32 %v1787, 0.0
      %v1816 = vadd.f32 %v1788, 0.0
      %v1817 = vadd.f32 %v1789, 0.0
      %v1818 = vadd.f32 %v1790, 0.0
      %v1819 = vadd.f32 %v1791, 0.0
      %v1820 = vld [vmem:[%s138 + $0x1] sm:$0xff]
      %v1821 = vld [vmem:[%s138 + $0x9] sm:$0x3f]
      %v1822 = vld [vmem:[%s138 + $0x11] sm:$0xff]
      %v1823 = vld [vmem:[%s138 + $0x19] sm:$0x3f]
      %v1824 = vld [vmem:[%s138 + $0x21] sm:$0xff]
      %v1825 = vld [vmem:[%s138 + $0x29] sm:$0x3f]
      %v1826 = vld [vmem:[%s138 + $0x31] sm:$0xff]
      %v1827 = vld [vmem:[%s138 + $0x39] sm:$0x3f]
      %v1828 = vld [vmem:[%s138 + $0x41] sm:$0xff]
      %v1829 = vld [vmem:[%s138 + $0x49] sm:$0x3f]
      %v1830 = vld [vmem:[%s138 + $0x51] sm:$0xff]
      %v1831 = vld [vmem:[%s138 + $0x59] sm:$0x3f]
      %v1832 = vld [vmem:[%s138 + $0x61] sm:$0xff]
      %v1833 = vld [vmem:[%s138 + $0x69] sm:$0x3f]
      %v1834 = vld [vmem:[%s138 + $0x71] sm:$0xff]
      %v1835 = vld [vmem:[%s138 + $0x79] sm:$0x3f]
      %v1836 = vld [vmem:[%s138 + $0x81] sm:$0xff]
      %v1837 = vld [vmem:[%s138 + $0x89] sm:$0x3f]
      %v1838 = vld [vmem:[%s138 + $0x91] sm:$0xff]
      %v1839 = vld [vmem:[%s138 + $0x99] sm:$0x3f]
      %v1840 = vld [vmem:[%s138 + $0xa1] sm:$0xff]
      %v1841 = vld [vmem:[%s138 + $0xa9] sm:$0x3f]
      %v1842 = vld [vmem:[%s138 + $0xb1] sm:$0xff]
      %v1843 = vld [vmem:[%s138 + $0xb9] sm:$0x3f]
      %v1844 = vld [vmem:[%s138 + $0xc1] sm:$0xff]
      %v1845 = vld [vmem:[%s138 + $0xc9] sm:$0x3f]
      %v1846 = vld [vmem:[%s138 + $0xd1] sm:$0xff]
      %v1847 = vld [vmem:[%s138 + $0xd9] sm:$0x3f]
      %s1848 = scalar_lea.vmem %s1, 6
      %v1849 = vld [vmem:[%s1848] sm:$0x1]
      %v1850 = vperm.slane %v1849, 0
      %v1851 = vmul.f32 %v1850, %v1820
      %v1852 = vmul.f32 %v1850, %v1821
      %v1853 = vmul.f32 %v1850, %v1822
      %v1854 = vmul.f32 %v1850, %v1823
      %v1855 = vmul.f32 %v1850, %v1824
      %v1856 = vmul.f32 %v1850, %v1825
      %v1857 = vmul.f32 %v1850, %v1826
      %v1858 = vmul.f32 %v1850, %v1827
      %v1859 = vmul.f32 %v1850, %v1828
      %v1860 = vmul.f32 %v1850, %v1829
      %v1861 = vmul.f32 %v1850, %v1830
      %v1862 = vmul.f32 %v1850, %v1831
      %v1863 = vmul.f32 %v1850, %v1832
      %v1864 = vmul.f32 %v1850, %v1833
      %v1865 = vmul.f32 %v1850, %v1834
      %v1866 = vmul.f32 %v1850, %v1835
      %v1867 = vmul.f32 %v1850, %v1836
      %v1868 = vmul.f32 %v1850, %v1837
      %v1869 = vmul.f32 %v1850, %v1838
      %v1870 = vmul.f32 %v1850, %v1839
      %v1871 = vmul.f32 %v1850, %v1840
      %v1872 = vmul.f32 %v1850, %v1841
      %v1873 = vmul.f32 %v1850, %v1842
      %v1874 = vmul.f32 %v1850, %v1843
      %v1875 = vmul.f32 %v1850, %v1844
      %v1876 = vmul.f32 %v1850, %v1845
      %v1877 = vmul.f32 %v1850, %v1846
      %v1878 = vmul.f32 %v1850, %v1847
      %v1879 = vadd.f32 %v1792, %v1851
      %v1880 = vadd.f32 %v1793, %v1852
      %v1881 = vadd.f32 %v1794, %v1853
      %v1882 = vadd.f32 %v1795, %v1854
      %v1883 = vadd.f32 %v1796, %v1855
      %v1884 = vadd.f32 %v1797, %v1856
      %v1885 = vadd.f32 %v1798, %v1857
      %v1886 = vadd.f32 %v1799, %v1858
      %v1887 = vadd.f32 %v1800, %v1859
      %v1888 = vadd.f32 %v1801, %v1860
      %v1889 = vadd.f32 %v1802, %v1861
      %v1890 = vadd.f32 %v1803, %v1862
      %v1891 = vadd.f32 %v1804, %v1863
      %v1892 = vadd.f32 %v1805, %v1864
      %v1893 = vadd.f32 %v1806, %v1865
      %v1894 = vadd.f32 %v1807, %v1866
      %v1895 = vadd.f32 %v1808, %v1867
      %v1896 = vadd.f32 %v1809, %v1868
      %v1897 = vadd.f32 %v1810, %v1869
      %v1898 = vadd.f32 %v1811, %v1870
      %v1899 = vadd.f32 %v1812, %v1871
      %v1900 = vadd.f32 %v1813, %v1872
      %v1901 = vadd.f32 %v1814, %v1873
      %v1902 = vadd.f32 %v1815, %v1874
      %v1903 = vadd.f32 %v1816, %v1875
      %v1904 = vadd.f32 %v1817, %v1876
      %v1905 = vadd.f32 %v1818, %v1877
      %v1906 = vadd.f32 %v1819, %v1878
      %v1907 = vld [vmem:[%s138 + $0x2] sm:$0xff]
      %v1908 = vld [vmem:[%s138 + $0xa] sm:$0x3f]
      %v1909 = vld [vmem:[%s138 + $0x12] sm:$0xff]
      %v1910 = vld [vmem:[%s138 + $0x1a] sm:$0x3f]
      %v1911 = vld [vmem:[%s138 + $0x22] sm:$0xff]
      %v1912 = vld [vmem:[%s138 + $0x2a] sm:$0x3f]
      %v1913 = vld [vmem:[%s138 + $0x32] sm:$0xff]
      %v1914 = vld [vmem:[%s138 + $0x3a] sm:$0x3f]
      %v1915 = vld [vmem:[%s138 + $0x42] sm:$0xff]
      %v1916 = vld [vmem:[%s138 + $0x4a] sm:$0x3f]
      %v1917 = vld [vmem:[%s138 + $0x52] sm:$0xff]
      %v1918 = vld [vmem:[%s138 + $0x5a] sm:$0x3f]
      %v1919 = vld [vmem:[%s138 + $0x62] sm:$0xff]
      %v1920 = vld [vmem:[%s138 + $0x6a] sm:$0x3f]
      %v1921 = vld [vmem:[%s138 + $0x72] sm:$0xff]
      %v1922 = vld [vmem:[%s138 + $0x7a] sm:$0x3f]
      %v1923 = vld [vmem:[%s138 + $0x82] sm:$0xff]
      %v1924 = vld [vmem:[%s138 + $0x8a] sm:$0x3f]
      %v1925 = vld [vmem:[%s138 + $0x92] sm:$0xff]
      %v1926 = vld [vmem:[%s138 + $0x9a] sm:$0x3f]
      %v1927 = vld [vmem:[%s138 + $0xa2] sm:$0xff]
      %v1928 = vld [vmem:[%s138 + $0xaa] sm:$0x3f]
      %v1929 = vld [vmem:[%s138 + $0xb2] sm:$0xff]
      %v1930 = vld [vmem:[%s138 + $0xba] sm:$0x3f]
      %v1931 = vld [vmem:[%s138 + $0xc2] sm:$0xff]
      %v1932 = vld [vmem:[%s138 + $0xca] sm:$0x3f]
      %v1933 = vld [vmem:[%s138 + $0xd2] sm:$0xff]
      %v1934 = vld [vmem:[%s138 + $0xda] sm:$0x3f]
      %s1935 = scalar_lea.vmem %s1, 10
      %v1936 = vld [vmem:[%s1935] sm:$0x1]
      %v1937 = vperm.slane %v1936, 0
      %v1938 = vmul.f32 %v1937, %v1907
      %v1939 = vmul.f32 %v1937, %v1908
      %v1940 = vmul.f32 %v1937, %v1909
      %v1941 = vmul.f32 %v1937, %v1910
      %v1942 = vmul.f32 %v1937, %v1911
      %v1943 = vmul.f32 %v1937, %v1912
      %v1944 = vmul.f32 %v1937, %v1913
      %v1945 = vmul.f32 %v1937, %v1914
      %v1946 = vmul.f32 %v1937, %v1915
      %v1947 = vmul.f32 %v1937, %v1916
      %v1948 = vmul.f32 %v1937, %v1917
      %v1949 = vmul.f32 %v1937, %v1918
      %v1950 = vmul.f32 %v1937, %v1919
      %v1951 = vmul.f32 %v1937, %v1920
      %v1952 = vmul.f32 %v1937, %v1921
      %v1953 = vmul.f32 %v1937, %v1922
      %v1954 = vmul.f32 %v1937, %v1923
      %v1955 = vmul.f32 %v1937, %v1924
      %v1956 = vmul.f32 %v1937, %v1925
      %v1957 = vmul.f32 %v1937, %v1926
      %v1958 = vmul.f32 %v1937, %v1927
      %v1959 = vmul.f32 %v1937, %v1928
      %v1960 = vmul.f32 %v1937, %v1929
      %v1961 = vmul.f32 %v1937, %v1930
      %v1962 = vmul.f32 %v1937, %v1931
      %v1963 = vmul.f32 %v1937, %v1932
      %v1964 = vmul.f32 %v1937, %v1933
      %v1965 = vmul.f32 %v1937, %v1934
      %v1966 = vadd.f32 %v1879, %v1938
      %v1967 = vadd.f32 %v1880, %v1939
      %v1968 = vadd.f32 %v1881, %v1940
      %v1969 = vadd.f32 %v1882, %v1941
      %v1970 = vadd.f32 %v1883, %v1942
      %v1971 = vadd.f32 %v1884, %v1943
      %v1972 = vadd.f32 %v1885, %v1944
      %v1973 = vadd.f32 %v1886, %v1945
      %v1974 = vadd.f32 %v1887, %v1946
      %v1975 = vadd.f32 %v1888, %v1947
      %v1976 = vadd.f32 %v1889, %v1948
      %v1977 = vadd.f32 %v1890, %v1949
      %v1978 = vadd.f32 %v1891, %v1950
      %v1979 = vadd.f32 %v1892, %v1951
      %v1980 = vadd.f32 %v1893, %v1952
      %v1981 = vadd.f32 %v1894, %v1953
      %v1982 = vadd.f32 %v1895, %v1954
      %v1983 = vadd.f32 %v1896, %v1955
      %v1984 = vadd.f32 %v1897, %v1956
      %v1985 = vadd.f32 %v1898, %v1957
      %v1986 = vadd.f32 %v1899, %v1958
      %v1987 = vadd.f32 %v1900, %v1959
      %v1988 = vadd.f32 %v1901, %v1960
      %v1989 = vadd.f32 %v1902, %v1961
      %v1990 = vadd.f32 %v1903, %v1962
      %v1991 = vadd.f32 %v1904, %v1963
      %v1992 = vadd.f32 %v1905, %v1964
      %v1993 = vadd.f32 %v1906, %v1965
      %v1994 = vld [vmem:[%s404] sm:$0xff]
      %v1995 = vld [vmem:[%s404 + $0x8] sm:$0x3f]
      %v1996 = vld [vmem:[%s404 + $0x10] sm:$0xff]
      %v1997 = vld [vmem:[%s404 + $0x18] sm:$0x3f]
      %v1998 = vld [vmem:[%s404 + $0x20] sm:$0xff]
      %v1999 = vld [vmem:[%s404 + $0x28] sm:$0x3f]
      %v2000 = vld [vmem:[%s404 + $0x30] sm:$0xff]
      %v2001 = vld [vmem:[%s404 + $0x38] sm:$0x3f]
      %v2002 = vld [vmem:[%s404 + $0x40] sm:$0xff]
      %v2003 = vld [vmem:[%s404 + $0x48] sm:$0x3f]
      %v2004 = vld [vmem:[%s404 + $0x50] sm:$0xff]
      %v2005 = vld [vmem:[%s404 + $0x58] sm:$0x3f]
      %v2006 = vld [vmem:[%s404 + $0x60] sm:$0xff]
      %v2007 = vld [vmem:[%s404 + $0x68] sm:$0x3f]
      %v2008 = vld [vmem:[%s404 + $0x70] sm:$0xff]
      %v2009 = vld [vmem:[%s404 + $0x78] sm:$0x3f]
      %v2010 = vld [vmem:[%s404 + $0x80] sm:$0xff]
      %v2011 = vld [vmem:[%s404 + $0x88] sm:$0x3f]
      %v2012 = vld [vmem:[%s404 + $0x90] sm:$0xff]
      %v2013 = vld [vmem:[%s404 + $0x98] sm:$0x3f]
      %v2014 = vld [vmem:[%s404 + $0xa0] sm:$0xff]
      %v2015 = vld [vmem:[%s404 + $0xa8] sm:$0x3f]
      %v2016 = vld [vmem:[%s404 + $0xb0] sm:$0xff]
      %v2017 = vld [vmem:[%s404 + $0xb8] sm:$0x3f]
      %v2018 = vld [vmem:[%s404 + $0xc0] sm:$0xff]
      %v2019 = vld [vmem:[%s404 + $0xc8] sm:$0x3f]
      %v2020 = vld [vmem:[%s404 + $0xd0] sm:$0xff]
      %v2021 = vld [vmem:[%s404 + $0xd8] sm:$0x3f]
      %s2022 = scalar_lea.vmem %s1, 14
      %v2023 = vld [vmem:[%s2022] sm:$0x1]
      %v2024 = vperm.slane %v2023, 0
      %v2025 = vmul.f32 %v2024, %v1994
      %v2026 = vmul.f32 %v2024, %v1995
      %v2027 = vmul.f32 %v2024, %v1996
      %v2028 = vmul.f32 %v2024, %v1997
      %v2029 = vmul.f32 %v2024, %v1998
      %v2030 = vmul.f32 %v2024, %v1999
      %v2031 = vmul.f32 %v2024, %v2000
      %v2032 = vmul.f32 %v2024, %v2001
      %v2033 = vmul.f32 %v2024, %v2002
      %v2034 = vmul.f32 %v2024, %v2003
      %v2035 = vmul.f32 %v2024, %v2004
      %v2036 = vmul.f32 %v2024, %v2005
      %v2037 = vmul.f32 %v2024, %v2006
      %v2038 = vmul.f32 %v2024, %v2007
      %v2039 = vmul.f32 %v2024, %v2008
      %v2040 = vmul.f32 %v2024, %v2009
      %v2041 = vmul.f32 %v2024, %v2010
      %v2042 = vmul.f32 %v2024, %v2011
      %v2043 = vmul.f32 %v2024, %v2012
      %v2044 = vmul.f32 %v2024, %v2013
      %v2045 = vmul.f32 %v2024, %v2014
      %v2046 = vmul.f32 %v2024, %v2015
      %v2047 = vmul.f32 %v2024, %v2016
      %v2048 = vmul.f32 %v2024, %v2017
      %v2049 = vmul.f32 %v2024, %v2018
      %v2050 = vmul.f32 %v2024, %v2019
      %v2051 = vmul.f32 %v2024, %v2020
      %v2052 = vmul.f32 %v2024, %v2021
      %v2053 = vadd.f32 %v1966, %v2025
      %v2054 = vadd.f32 %v1967, %v2026
      %v2055 = vadd.f32 %v1968, %v2027
      %v2056 = vadd.f32 %v1969, %v2028
      %v2057 = vadd.f32 %v1970, %v2029
      %v2058 = vadd.f32 %v1971, %v2030
      %v2059 = vadd.f32 %v1972, %v2031
      %v2060 = vadd.f32 %v1973, %v2032
      %v2061 = vadd.f32 %v1974, %v2033
      %v2062 = vadd.f32 %v1975, %v2034
      %v2063 = vadd.f32 %v1976, %v2035
      %v2064 = vadd.f32 %v1977, %v2036
      %v2065 = vadd.f32 %v1978, %v2037
      %v2066 = vadd.f32 %v1979, %v2038
      %v2067 = vadd.f32 %v1980, %v2039
      %v2068 = vadd.f32 %v1981, %v2040
      %v2069 = vadd.f32 %v1982, %v2041
      %v2070 = vadd.f32 %v1983, %v2042
      %v2071 = vadd.f32 %v1984, %v2043
      %v2072 = vadd.f32 %v1985, %v2044
      %v2073 = vadd.f32 %v1986, %v2045
      %v2074 = vadd.f32 %v1987, %v2046
      %v2075 = vadd.f32 %v1988, %v2047
      %v2076 = vadd.f32 %v1989, %v2048
      %v2077 = vadd.f32 %v1990, %v2049
      %v2078 = vadd.f32 %v1991, %v2050
      %v2079 = vadd.f32 %v1992, %v2051
      %v2080 = vadd.f32 %v1993, %v2052
      %v2081 = vld [vmem:[%s404 + $0x1] sm:$0xff]
      %v2082 = vld [vmem:[%s404 + $0x9] sm:$0x3f]
      %v2083 = vld [vmem:[%s404 + $0x11] sm:$0xff]
      %v2084 = vld [vmem:[%s404 + $0x19] sm:$0x3f]
      %v2085 = vld [vmem:[%s404 + $0x21] sm:$0xff]
      %v2086 = vld [vmem:[%s404 + $0x29] sm:$0x3f]
      %v2087 = vld [vmem:[%s404 + $0x31] sm:$0xff]
      %v2088 = vld [vmem:[%s404 + $0x39] sm:$0x3f]
      %v2089 = vld [vmem:[%s404 + $0x41] sm:$0xff]
      %v2090 = vld [vmem:[%s404 + $0x49] sm:$0x3f]
      %v2091 = vld [vmem:[%s404 + $0x51] sm:$0xff]
      %v2092 = vld [vmem:[%s404 + $0x59] sm:$0x3f]
      %v2093 = vld [vmem:[%s404 + $0x61] sm:$0xff]
      %v2094 = vld [vmem:[%s404 + $0x69] sm:$0x3f]
      %v2095 = vld [vmem:[%s404 + $0x71] sm:$0xff]
      %v2096 = vld [vmem:[%s404 + $0x79] sm:$0x3f]
      %v2097 = vld [vmem:[%s404 + $0x81] sm:$0xff]
      %v2098 = vld [vmem:[%s404 + $0x89] sm:$0x3f]
      %v2099 = vld [vmem:[%s404 + $0x91] sm:$0xff]
      %v2100 = vld [vmem:[%s404 + $0x99] sm:$0x3f]
      %v2101 = vld [vmem:[%s404 + $0xa1] sm:$0xff]
      %v2102 = vld [vmem:[%s404 + $0xa9] sm:$0x3f]
      %v2103 = vld [vmem:[%s404 + $0xb1] sm:$0xff]
      %v2104 = vld [vmem:[%s404 + $0xb9] sm:$0x3f]
      %v2105 = vld [vmem:[%s404 + $0xc1] sm:$0xff]
      %v2106 = vld [vmem:[%s404 + $0xc9] sm:$0x3f]
      %v2107 = vld [vmem:[%s404 + $0xd1] sm:$0xff]
      %v2108 = vld [vmem:[%s404 + $0xd9] sm:$0x3f]
      %s2109 = scalar_lea.vmem %s1, 18
      %v2110 = vld [vmem:[%s2109] sm:$0x1]
      %v2111 = vperm.slane %v2110, 0
      %v2112 = vmul.f32 %v2111, %v2081
      %v2113 = vmul.f32 %v2111, %v2082
      %v2114 = vmul.f32 %v2111, %v2083
      %v2115 = vmul.f32 %v2111, %v2084
      %v2116 = vmul.f32 %v2111, %v2085
      %v2117 = vmul.f32 %v2111, %v2086
      %v2118 = vmul.f32 %v2111, %v2087
      %v2119 = vmul.f32 %v2111, %v2088
      %v2120 = vmul.f32 %v2111, %v2089
      %v2121 = vmul.f32 %v2111, %v2090
      %v2122 = vmul.f32 %v2111, %v2091
      %v2123 = vmul.f32 %v2111, %v2092
      %v2124 = vmul.f32 %v2111, %v2093
      %v2125 = vmul.f32 %v2111, %v2094
      %v2126 = vmul.f32 %v2111, %v2095
      %v2127 = vmul.f32 %v2111, %v2096
      %v2128 = vmul.f32 %v2111, %v2097
      %v2129 = vmul.f32 %v2111, %v2098
      %v2130 = vmul.f32 %v2111, %v2099
      %v2131 = vmul.f32 %v2111, %v2100
      %v2132 = vmul.f32 %v2111, %v2101
      %v2133 = vmul.f32 %v2111, %v2102
      %v2134 = vmul.f32 %v2111, %v2103
      %v2135 = vmul.f32 %v2111, %v2104
      %v2136 = vmul.f32 %v2111, %v2105
      %v2137 = vmul.f32 %v2111, %v2106
      %v2138 = vmul.f32 %v2111, %v2107
      %v2139 = vmul.f32 %v2111, %v2108
      %v2140 = vadd.f32 %v2053, %v2112
      %v2141 = vadd.f32 %v2054, %v2113
      %v2142 = vadd.f32 %v2055, %v2114
      %v2143 = vadd.f32 %v2056, %v2115
      %v2144 = vadd.f32 %v2057, %v2116
      %v2145 = vadd.f32 %v2058, %v2117
      %v2146 = vadd.f32 %v2059, %v2118
      %v2147 = vadd.f32 %v2060, %v2119
      %v2148 = vadd.f32 %v2061, %v2120
      %v2149 = vadd.f32 %v2062, %v2121
      %v2150 = vadd.f32 %v2063, %v2122
      %v2151 = vadd.f32 %v2064, %v2123
      %v2152 = vadd.f32 %v2065, %v2124
      %v2153 = vadd.f32 %v2066, %v2125
      %v2154 = vadd.f32 %v2067, %v2126
      %v2155 = vadd.f32 %v2068, %v2127
      %v2156 = vadd.f32 %v2069, %v2128
      %v2157 = vadd.f32 %v2070, %v2129
      %v2158 = vadd.f32 %v2071, %v2130
      %v2159 = vadd.f32 %v2072, %v2131
      %v2160 = vadd.f32 %v2073, %v2132
      %v2161 = vadd.f32 %v2074, %v2133
      %v2162 = vadd.f32 %v2075, %v2134
      %v2163 = vadd.f32 %v2076, %v2135
      %v2164 = vadd.f32 %v2077, %v2136
      %v2165 = vadd.f32 %v2078, %v2137
      %v2166 = vadd.f32 %v2079, %v2138
      %v2167 = vadd.f32 %v2080, %v2139
      %v2168 = vld [vmem:[%s404 + $0x2] sm:$0xff]
      %v2169 = vld [vmem:[%s404 + $0xa] sm:$0x3f]
      %v2170 = vld [vmem:[%s404 + $0x12] sm:$0xff]
      %v2171 = vld [vmem:[%s404 + $0x1a] sm:$0x3f]
      %v2172 = vld [vmem:[%s404 + $0x22] sm:$0xff]
      %v2173 = vld [vmem:[%s404 + $0x2a] sm:$0x3f]
      %v2174 = vld [vmem:[%s404 + $0x32] sm:$0xff]
      %v2175 = vld [vmem:[%s404 + $0x3a] sm:$0x3f]
      %v2176 = vld [vmem:[%s404 + $0x42] sm:$0xff]
      %v2177 = vld [vmem:[%s404 + $0x4a] sm:$0x3f]
      %v2178 = vld [vmem:[%s404 + $0x52] sm:$0xff]
      %v2179 = vld [vmem:[%s404 + $0x5a] sm:$0x3f]
      %v2180 = vld [vmem:[%s404 + $0x62] sm:$0xff]
      %v2181 = vld [vmem:[%s404 + $0x6a] sm:$0x3f]
      %v2182 = vld [vmem:[%s404 + $0x72] sm:$0xff]
      %v2183 = vld [vmem:[%s404 + $0x7a] sm:$0x3f]
      %v2184 = vld [vmem:[%s404 + $0x82] sm:$0xff]
      %v2185 = vld [vmem:[%s404 + $0x8a] sm:$0x3f]
      %v2186 = vld [vmem:[%s404 + $0x92] sm:$0xff]
      %v2187 = vld [vmem:[%s404 + $0x9a] sm:$0x3f]
      %v2188 = vld [vmem:[%s404 + $0xa2] sm:$0xff]
      %v2189 = vld [vmem:[%s404 + $0xaa] sm:$0x3f]
      %v2190 = vld [vmem:[%s404 + $0xb2] sm:$0xff]
      %v2191 = vld [vmem:[%s404 + $0xba] sm:$0x3f]
      %v2192 = vld [vmem:[%s404 + $0xc2] sm:$0xff]
      %v2193 = vld [vmem:[%s404 + $0xca] sm:$0x3f]
      %v2194 = vld [vmem:[%s404 + $0xd2] sm:$0xff]
      %v2195 = vld [vmem:[%s404 + $0xda] sm:$0x3f]
      %s2196 = scalar_lea.vmem %s1, 22
      %v2197 = vld [vmem:[%s2196] sm:$0x1]
      %v2198 = vperm.slane %v2197, 0
      %v2199 = vmul.f32 %v2198, %v2168
      %v2200 = vmul.f32 %v2198, %v2169
      %v2201 = vmul.f32 %v2198, %v2170
      %v2202 = vmul.f32 %v2198, %v2171
      %v2203 = vmul.f32 %v2198, %v2172
      %v2204 = vmul.f32 %v2198, %v2173
      %v2205 = vmul.f32 %v2198, %v2174
      %v2206 = vmul.f32 %v2198, %v2175
      %v2207 = vmul.f32 %v2198, %v2176
      %v2208 = vmul.f32 %v2198, %v2177
      %v2209 = vmul.f32 %v2198, %v2178
      %v2210 = vmul.f32 %v2198, %v2179
      %v2211 = vmul.f32 %v2198, %v2180
      %v2212 = vmul.f32 %v2198, %v2181
      %v2213 = vmul.f32 %v2198, %v2182
      %v2214 = vmul.f32 %v2198, %v2183
      %v2215 = vmul.f32 %v2198, %v2184
      %v2216 = vmul.f32 %v2198, %v2185
      %v2217 = vmul.f32 %v2198, %v2186
      %v2218 = vmul.f32 %v2198, %v2187
      %v2219 = vmul.f32 %v2198, %v2188
      %v2220 = vmul.f32 %v2198, %v2189
      %v2221 = vmul.f32 %v2198, %v2190
      %v2222 = vmul.f32 %v2198, %v2191
      %v2223 = vmul.f32 %v2198, %v2192
      %v2224 = vmul.f32 %v2198, %v2193
      %v2225 = vmul.f32 %v2198, %v2194
      %v2226 = vmul.f32 %v2198, %v2195
      %v2227 = vadd.f32 %v2140, %v2199
      %v2228 = vadd.f32 %v2141, %v2200
      %v2229 = vadd.f32 %v2142, %v2201
      %v2230 = vadd.f32 %v2143, %v2202
      %v2231 = vadd.f32 %v2144, %v2203
      %v2232 = vadd.f32 %v2145, %v2204
      %v2233 = vadd.f32 %v2146, %v2205
      %v2234 = vadd.f32 %v2147, %v2206
      %v2235 = vadd.f32 %v2148, %v2207
      %v2236 = vadd.f32 %v2149, %v2208
      %v2237 = vadd.f32 %v2150, %v2209
      %v2238 = vadd.f32 %v2151, %v2210
      %v2239 = vadd.f32 %v2152, %v2211
      %v2240 = vadd.f32 %v2153, %v2212
      %v2241 = vadd.f32 %v2154, %v2213
      %v2242 = vadd.f32 %v2155, %v2214
      %v2243 = vadd.f32 %v2156, %v2215
      %v2244 = vadd.f32 %v2157, %v2216
      %v2245 = vadd.f32 %v2158, %v2217
      %v2246 = vadd.f32 %v2159, %v2218
      %v2247 = vadd.f32 %v2160, %v2219
      %v2248 = vadd.f32 %v2161, %v2220
      %v2249 = vadd.f32 %v2162, %v2221
      %v2250 = vadd.f32 %v2163, %v2222
      %v2251 = vadd.f32 %v2164, %v2223
      %v2252 = vadd.f32 %v2165, %v2224
      %v2253 = vadd.f32 %v2166, %v2225
      %v2254 = vadd.f32 %v2167, %v2226
      %v2255 = vld [vmem:[%s666] sm:$0xff]
      %v2256 = vld [vmem:[%s666 + $0x8] sm:$0x3f]
      %v2257 = vld [vmem:[%s666 + $0x10] sm:$0xff]
      %v2258 = vld [vmem:[%s666 + $0x18] sm:$0x3f]
      %v2259 = vld [vmem:[%s666 + $0x20] sm:$0xff]
      %v2260 = vld [vmem:[%s666 + $0x28] sm:$0x3f]
      %v2261 = vld [vmem:[%s666 + $0x30] sm:$0xff]
      %v2262 = vld [vmem:[%s666 + $0x38] sm:$0x3f]
      %v2263 = vld [vmem:[%s666 + $0x40] sm:$0xff]
      %v2264 = vld [vmem:[%s666 + $0x48] sm:$0x3f]
      %v2265 = vld [vmem:[%s666 + $0x50] sm:$0xff]
      %v2266 = vld [vmem:[%s666 + $0x58] sm:$0x3f]
      %v2267 = vld [vmem:[%s666 + $0x60] sm:$0xff]
      %v2268 = vld [vmem:[%s666 + $0x68] sm:$0x3f]
      %v2269 = vld [vmem:[%s666 + $0x70] sm:$0xff]
      %v2270 = vld [vmem:[%s666 + $0x78] sm:$0x3f]
      %v2271 = vld [vmem:[%s666 + $0x80] sm:$0xff]
      %v2272 = vld [vmem:[%s666 + $0x88] sm:$0x3f]
      %v2273 = vld [vmem:[%s666 + $0x90] sm:$0xff]
      %v2274 = vld [vmem:[%s666 + $0x98] sm:$0x3f]
      %v2275 = vld [vmem:[%s666 + $0xa0] sm:$0xff]
      %v2276 = vld [vmem:[%s666 + $0xa8] sm:$0x3f]
      %v2277 = vld [vmem:[%s666 + $0xb0] sm:$0xff]
      %v2278 = vld [vmem:[%s666 + $0xb8] sm:$0x3f]
      %v2279 = vld [vmem:[%s666 + $0xc0] sm:$0xff]
      %v2280 = vld [vmem:[%s666 + $0xc8] sm:$0x3f]
      %v2281 = vld [vmem:[%s666 + $0xd0] sm:$0xff]
      %v2282 = vld [vmem:[%s666 + $0xd8] sm:$0x3f]
      %s2283 = scalar_lea.vmem %s1, 26
      %v2284 = vld [vmem:[%s2283] sm:$0x1]
      %v2285 = vperm.slane %v2284, 0
      %v2286 = vmul.f32 %v2285, %v2255
      %v2287 = vmul.f32 %v2285, %v2256
      %v2288 = vmul.f32 %v2285, %v2257
      %v2289 = vmul.f32 %v2285, %v2258
      %v2290 = vmul.f32 %v2285, %v2259
      %v2291 = vmul.f32 %v2285, %v2260
      %v2292 = vmul.f32 %v2285, %v2261
      %v2293 = vmul.f32 %v2285, %v2262
      %v2294 = vmul.f32 %v2285, %v2263
      %v2295 = vmul.f32 %v2285, %v2264
      %v2296 = vmul.f32 %v2285, %v2265
      %v2297 = vmul.f32 %v2285, %v2266
      %v2298 = vmul.f32 %v2285, %v2267
      %v2299 = vmul.f32 %v2285, %v2268
      %v2300 = vmul.f32 %v2285, %v2269
      %v2301 = vmul.f32 %v2285, %v2270
      %v2302 = vmul.f32 %v2285, %v2271
      %v2303 = vmul.f32 %v2285, %v2272
      %v2304 = vmul.f32 %v2285, %v2273
      %v2305 = vmul.f32 %v2285, %v2274
      %v2306 = vmul.f32 %v2285, %v2275
      %v2307 = vmul.f32 %v2285, %v2276
      %v2308 = vmul.f32 %v2285, %v2277
      %v2309 = vmul.f32 %v2285, %v2278
      %v2310 = vmul.f32 %v2285, %v2279
      %v2311 = vmul.f32 %v2285, %v2280
      %v2312 = vmul.f32 %v2285, %v2281
      %v2313 = vmul.f32 %v2285, %v2282
      %v2314 = vadd.f32 %v2227, %v2286
      %v2315 = vadd.f32 %v2228, %v2287
      %v2316 = vadd.f32 %v2229, %v2288
      %v2317 = vadd.f32 %v2230, %v2289
      %v2318 = vadd.f32 %v2231, %v2290
      %v2319 = vadd.f32 %v2232, %v2291
      %v2320 = vadd.f32 %v2233, %v2292
      %v2321 = vadd.f32 %v2234, %v2293
      %v2322 = vadd.f32 %v2235, %v2294
      %v2323 = vadd.f32 %v2236, %v2295
      %v2324 = vadd.f32 %v2237, %v2296
      %v2325 = vadd.f32 %v2238, %v2297
      %v2326 = vadd.f32 %v2239, %v2298
      %v2327 = vadd.f32 %v2240, %v2299
      %v2328 = vadd.f32 %v2241, %v2300
      %v2329 = vadd.f32 %v2242, %v2301
      %v2330 = vadd.f32 %v2243, %v2302
      %v2331 = vadd.f32 %v2244, %v2303
      %v2332 = vadd.f32 %v2245, %v2304
      %v2333 = vadd.f32 %v2246, %v2305
      %v2334 = vadd.f32 %v2247, %v2306
      %v2335 = vadd.f32 %v2248, %v2307
      %v2336 = vadd.f32 %v2249, %v2308
      %v2337 = vadd.f32 %v2250, %v2309
      %v2338 = vadd.f32 %v2251, %v2310
      %v2339 = vadd.f32 %v2252, %v2311
      %v2340 = vadd.f32 %v2253, %v2312
      %v2341 = vadd.f32 %v2254, %v2313
      %v2342 = vld [vmem:[%s666 + $0x1] sm:$0xff]
      %v2343 = vld [vmem:[%s666 + $0x9] sm:$0x3f]
      %v2344 = vld [vmem:[%s666 + $0x11] sm:$0xff]
      %v2345 = vld [vmem:[%s666 + $0x19] sm:$0x3f]
      %v2346 = vld [vmem:[%s666 + $0x21] sm:$0xff]
      %v2347 = vld [vmem:[%s666 + $0x29] sm:$0x3f]
      %v2348 = vld [vmem:[%s666 + $0x31] sm:$0xff]
      %v2349 = vld [vmem:[%s666 + $0x39] sm:$0x3f]
      %v2350 = vld [vmem:[%s666 + $0x41] sm:$0xff]
      %v2351 = vld [vmem:[%s666 + $0x49] sm:$0x3f]
      %v2352 = vld [vmem:[%s666 + $0x51] sm:$0xff]
      %v2353 = vld [vmem:[%s666 + $0x59] sm:$0x3f]
      %v2354 = vld [vmem:[%s666 + $0x61] sm:$0xff]
      %v2355 = vld [vmem:[%s666 + $0x69] sm:$0x3f]
      %v2356 = vld [vmem:[%s666 + $0x71] sm:$0xff]
      %v2357 = vld [vmem:[%s666 + $0x79] sm:$0x3f]
      %v2358 = vld [vmem:[%s666 + $0x81] sm:$0xff]
      %v2359 = vld [vmem:[%s666 + $0x89] sm:$0x3f]
      %v2360 = vld [vmem:[%s666 + $0x91] sm:$0xff]
      %v2361 = vld [vmem:[%s666 + $0x99] sm:$0x3f]
      %v2362 = vld [vmem:[%s666 + $0xa1] sm:$0xff]
      %v2363 = vld [vmem:[%s666 + $0xa9] sm:$0x3f]
      %v2364 = vld [vmem:[%s666 + $0xb1] sm:$0xff]
      %v2365 = vld [vmem:[%s666 + $0xb9] sm:$0x3f]
      %v2366 = vld [vmem:[%s666 + $0xc1] sm:$0xff]
      %v2367 = vld [vmem:[%s666 + $0xc9] sm:$0x3f]
      %v2368 = vld [vmem:[%s666 + $0xd1] sm:$0xff]
      %v2369 = vld [vmem:[%s666 + $0xd9] sm:$0x3f]
      %s2370 = scalar_lea.vmem %s1, 30
      %v2371 = vld [vmem:[%s2370] sm:$0x1]
      %v2372 = vperm.slane %v2371, 0
      %v2373 = vmul.f32 %v2372, %v2342
      %v2374 = vmul.f32 %v2372, %v2343
      %v2375 = vmul.f32 %v2372, %v2344
      %v2376 = vmul.f32 %v2372, %v2345
      %v2377 = vmul.f32 %v2372, %v2346
      %v2378 = vmul.f32 %v2372, %v2347
      %v2379 = vmul.f32 %v2372, %v2348
      %v2380 = vmul.f32 %v2372, %v2349
      %v2381 = vmul.f32 %v2372, %v2350
      %v2382 = vmul.f32 %v2372, %v2351
      %v2383 = vmul.f32 %v2372, %v2352
      %v2384 = vmul.f32 %v2372, %v2353
      %v2385 = vmul.f32 %v2372, %v2354
      %v2386 = vmul.f32 %v2372, %v2355
      %v2387 = vmul.f32 %v2372, %v2356
      %v2388 = vmul.f32 %v2372, %v2357
      %v2389 = vmul.f32 %v2372, %v2358
      %v2390 = vmul.f32 %v2372, %v2359
      %v2391 = vmul.f32 %v2372, %v2360
      %v2392 = vmul.f32 %v2372, %v2361
      %v2393 = vmul.f32 %v2372, %v2362
      %v2394 = vmul.f32 %v2372, %v2363
      %v2395 = vmul.f32 %v2372, %v2364
      %v2396 = vmul.f32 %v2372, %v2365
      %v2397 = vmul.f32 %v2372, %v2366
      %v2398 = vmul.f32 %v2372, %v2367
      %v2399 = vmul.f32 %v2372, %v2368
      %v2400 = vmul.f32 %v2372, %v2369
      %v2401 = vadd.f32 %v2314, %v2373
      %v2402 = vadd.f32 %v2315, %v2374
      %v2403 = vadd.f32 %v2316, %v2375
      %v2404 = vadd.f32 %v2317, %v2376
      %v2405 = vadd.f32 %v2318, %v2377
      %v2406 = vadd.f32 %v2319, %v2378
      %v2407 = vadd.f32 %v2320, %v2379
      %v2408 = vadd.f32 %v2321, %v2380
      %v2409 = vadd.f32 %v2322, %v2381
      %v2410 = vadd.f32 %v2323, %v2382
      %v2411 = vadd.f32 %v2324, %v2383
      %v2412 = vadd.f32 %v2325, %v2384
      %v2413 = vadd.f32 %v2326, %v2385
      %v2414 = vadd.f32 %v2327, %v2386
      %v2415 = vadd.f32 %v2328, %v2387
      %v2416 = vadd.f32 %v2329, %v2388
      %v2417 = vadd.f32 %v2330, %v2389
      %v2418 = vadd.f32 %v2331, %v2390
      %v2419 = vadd.f32 %v2332, %v2391
      %v2420 = vadd.f32 %v2333, %v2392
      %v2421 = vadd.f32 %v2334, %v2393
      %v2422 = vadd.f32 %v2335, %v2394
      %v2423 = vadd.f32 %v2336, %v2395
      %v2424 = vadd.f32 %v2337, %v2396
      %v2425 = vadd.f32 %v2338, %v2397
      %v2426 = vadd.f32 %v2339, %v2398
      %v2427 = vadd.f32 %v2340, %v2399
      %v2428 = vadd.f32 %v2341, %v2400
      %v2429 = vld [vmem:[%s666 + $0x2] sm:$0xff]
      %v2430 = vld [vmem:[%s666 + $0xa] sm:$0x3f]
      %v2431 = vld [vmem:[%s666 + $0x12] sm:$0xff]
      %v2432 = vld [vmem:[%s666 + $0x1a] sm:$0x3f]
      %v2433 = vld [vmem:[%s666 + $0x22] sm:$0xff]
      %v2434 = vld [vmem:[%s666 + $0x2a] sm:$0x3f]
      %v2435 = vld [vmem:[%s666 + $0x32] sm:$0xff]
      %v2436 = vld [vmem:[%s666 + $0x3a] sm:$0x3f]
      %v2437 = vld [vmem:[%s666 + $0x42] sm:$0xff]
      %v2438 = vld [vmem:[%s666 + $0x4a] sm:$0x3f]
      %v2439 = vld [vmem:[%s666 + $0x52] sm:$0xff]
      %v2440 = vld [vmem:[%s666 + $0x5a] sm:$0x3f]
      %v2441 = vld [vmem:[%s666 + $0x62] sm:$0xff]
      %v2442 = vld [vmem:[%s666 + $0x6a] sm:$0x3f]
      %v2443 = vld [vmem:[%s666 + $0x72] sm:$0xff]
      %v2444 = vld [vmem:[%s666 + $0x7a] sm:$0x3f]
      %v2445 = vld [vmem:[%s666 + $0x82] sm:$0xff]
      %v2446 = vld [vmem:[%s666 + $0x8a] sm:$0x3f]
      %v2447 = vld [vmem:[%s666 + $0x92] sm:$0xff]
      %v2448 = vld [vmem:[%s666 + $0x9a] sm:$0x3f]
      %v2449 = vld [vmem:[%s666 + $0xa2] sm:$0xff]
      %v2450 = vld [vmem:[%s666 + $0xaa] sm:$0x3f]
      %v2451 = vld [vmem:[%s666 + $0xb2] sm:$0xff]
      %v2452 = vld [vmem:[%s666 + $0xba] sm:$0x3f]
      %v2453 = vld [vmem:[%s666 + $0xc2] sm:$0xff]
      %v2454 = vld [vmem:[%s666 + $0xca] sm:$0x3f]
      %v2455 = vld [vmem:[%s666 + $0xd2] sm:$0xff]
      %v2456 = vld [vmem:[%s666 + $0xda] sm:$0x3f]
      %s2457 = scalar_lea.vmem %s1, 34
      %v2458 = vld [vmem:[%s2457] sm:$0x1]
      %v2459 = vperm.slane %v2458, 0
      %v2460 = vmul.f32 %v2459, %v2429
      %v2461 = vmul.f32 %v2459, %v2430
      %v2462 = vmul.f32 %v2459, %v2431
      %v2463 = vmul.f32 %v2459, %v2432
      %v2464 = vmul.f32 %v2459, %v2433
      %v2465 = vmul.f32 %v2459, %v2434
      %v2466 = vmul.f32 %v2459, %v2435
      %v2467 = vmul.f32 %v2459, %v2436
      %v2468 = vmul.f32 %v2459, %v2437
      %v2469 = vmul.f32 %v2459, %v2438
      %v2470 = vmul.f32 %v2459, %v2439
      %v2471 = vmul.f32 %v2459, %v2440
      %v2472 = vmul.f32 %v2459, %v2441
      %v2473 = vmul.f32 %v2459, %v2442
      %v2474 = vmul.f32 %v2459, %v2443
      %v2475 = vmul.f32 %v2459, %v2444
      %v2476 = vmul.f32 %v2459, %v2445
      %v2477 = vmul.f32 %v2459, %v2446
      %v2478 = vmul.f32 %v2459, %v2447
      %v2479 = vmul.f32 %v2459, %v2448
      %v2480 = vmul.f32 %v2459, %v2449
      %v2481 = vmul.f32 %v2459, %v2450
      %v2482 = vmul.f32 %v2459, %v2451
      %v2483 = vmul.f32 %v2459, %v2452
      %v2484 = vmul.f32 %v2459, %v2453
      %v2485 = vmul.f32 %v2459, %v2454
      %v2486 = vmul.f32 %v2459, %v2455
      %v2487 = vmul.f32 %v2459, %v2456
      %v2488 = vadd.f32 %v2401, %v2460
      %v2489 = vadd.f32 %v2402, %v2461
      %v2490 = vadd.f32 %v2403, %v2462
      %v2491 = vadd.f32 %v2404, %v2463
      %v2492 = vadd.f32 %v2405, %v2464
      %v2493 = vadd.f32 %v2406, %v2465
      %v2494 = vadd.f32 %v2407, %v2466
      %v2495 = vadd.f32 %v2408, %v2467
      %v2496 = vadd.f32 %v2409, %v2468
      %v2497 = vadd.f32 %v2410, %v2469
      %v2498 = vadd.f32 %v2411, %v2470
      %v2499 = vadd.f32 %v2412, %v2471
      %v2500 = vadd.f32 %v2413, %v2472
      %v2501 = vadd.f32 %v2414, %v2473
      %v2502 = vadd.f32 %v2415, %v2474
      %v2503 = vadd.f32 %v2416, %v2475
      %v2504 = vadd.f32 %v2417, %v2476
      %v2505 = vadd.f32 %v2418, %v2477
      %v2506 = vadd.f32 %v2419, %v2478
      %v2507 = vadd.f32 %v2420, %v2479
      %v2508 = vadd.f32 %v2421, %v2480
      %v2509 = vadd.f32 %v2422, %v2481
      %v2510 = vadd.f32 %v2423, %v2482
      %v2511 = vadd.f32 %v2424, %v2483
      %v2512 = vadd.f32 %v2425, %v2484
      %v2513 = vadd.f32 %v2426, %v2485
      %v2514 = vadd.f32 %v2427, %v2486
      %v2515 = vadd.f32 %v2428, %v2487
      %v2516 = vld [vmem:[%s928] sm:$0xff]
      %v2517 = vld [vmem:[%s928 + $0x8] sm:$0x3f]
      %v2518 = vld [vmem:[%s928 + $0x10] sm:$0xff]
      %v2519 = vld [vmem:[%s928 + $0x18] sm:$0x3f]
      %v2520 = vld [vmem:[%s928 + $0x20] sm:$0xff]
      %v2521 = vld [vmem:[%s928 + $0x28] sm:$0x3f]
      %v2522 = vld [vmem:[%s928 + $0x30] sm:$0xff]
      %v2523 = vld [vmem:[%s928 + $0x38] sm:$0x3f]
      %v2524 = vld [vmem:[%s928 + $0x40] sm:$0xff]
      %v2525 = vld [vmem:[%s928 + $0x48] sm:$0x3f]
      %v2526 = vld [vmem:[%s928 + $0x50] sm:$0xff]
      %v2527 = vld [vmem:[%s928 + $0x58] sm:$0x3f]
      %v2528 = vld [vmem:[%s928 + $0x60] sm:$0xff]
      %v2529 = vld [vmem:[%s928 + $0x68] sm:$0x3f]
      %v2530 = vld [vmem:[%s928 + $0x70] sm:$0xff]
      %v2531 = vld [vmem:[%s928 + $0x78] sm:$0x3f]
      %v2532 = vld [vmem:[%s928 + $0x80] sm:$0xff]
      %v2533 = vld [vmem:[%s928 + $0x88] sm:$0x3f]
      %v2534 = vld [vmem:[%s928 + $0x90] sm:$0xff]
      %v2535 = vld [vmem:[%s928 + $0x98] sm:$0x3f]
      %v2536 = vld [vmem:[%s928 + $0xa0] sm:$0xff]
      %v2537 = vld [vmem:[%s928 + $0xa8] sm:$0x3f]
      %v2538 = vld [vmem:[%s928 + $0xb0] sm:$0xff]
      %v2539 = vld [vmem:[%s928 + $0xb8] sm:$0x3f]
      %v2540 = vld [vmem:[%s928 + $0xc0] sm:$0xff]
      %v2541 = vld [vmem:[%s928 + $0xc8] sm:$0x3f]
      %v2542 = vld [vmem:[%s928 + $0xd0] sm:$0xff]
      %v2543 = vld [vmem:[%s928 + $0xd8] sm:$0x3f]
      %v2544 = vld [vmem:[%s1761 + $0x1] sm:$0x1]
      %v2545 = vperm.slane %v2544, 0
      %v2546 = vmul.f32 %v2545, %v2516
      %v2547 = vmul.f32 %v2545, %v2517
      %v2548 = vmul.f32 %v2545, %v2518
      %v2549 = vmul.f32 %v2545, %v2519
      %v2550 = vmul.f32 %v2545, %v2520
      %v2551 = vmul.f32 %v2545, %v2521
      %v2552 = vmul.f32 %v2545, %v2522
      %v2553 = vmul.f32 %v2545, %v2523
      %v2554 = vmul.f32 %v2545, %v2524
      %v2555 = vmul.f32 %v2545, %v2525
      %v2556 = vmul.f32 %v2545, %v2526
      %v2557 = vmul.f32 %v2545, %v2527
      %v2558 = vmul.f32 %v2545, %v2528
      %v2559 = vmul.f32 %v2545, %v2529
      %v2560 = vmul.f32 %v2545, %v2530
      %v2561 = vmul.f32 %v2545, %v2531
      %v2562 = vmul.f32 %v2545, %v2532
      %v2563 = vmul.f32 %v2545, %v2533
      %v2564 = vmul.f32 %v2545, %v2534
      %v2565 = vmul.f32 %v2545, %v2535
      %v2566 = vmul.f32 %v2545, %v2536
      %v2567 = vmul.f32 %v2545, %v2537
      %v2568 = vmul.f32 %v2545, %v2538
      %v2569 = vmul.f32 %v2545, %v2539
      %v2570 = vmul.f32 %v2545, %v2540
      %v2571 = vmul.f32 %v2545, %v2541
      %v2572 = vmul.f32 %v2545, %v2542
      %v2573 = vmul.f32 %v2545, %v2543
      %v2574 = vadd.f32 %v2488, %v2546
      %v2575 = vadd.f32 %v2489, %v2547
      %v2576 = vadd.f32 %v2490, %v2548
      %v2577 = vadd.f32 %v2491, %v2549
      %v2578 = vadd.f32 %v2492, %v2550
      %v2579 = vadd.f32 %v2493, %v2551
      %v2580 = vadd.f32 %v2494, %v2552
      %v2581 = vadd.f32 %v2495, %v2553
      %v2582 = vadd.f32 %v2496, %v2554
      %v2583 = vadd.f32 %v2497, %v2555
      %v2584 = vadd.f32 %v2498, %v2556
      %v2585 = vadd.f32 %v2499, %v2557
      %v2586 = vadd.f32 %v2500, %v2558
      %v2587 = vadd.f32 %v2501, %v2559
      %v2588 = vadd.f32 %v2502, %v2560
      %v2589 = vadd.f32 %v2503, %v2561
      %v2590 = vadd.f32 %v2504, %v2562
      %v2591 = vadd.f32 %v2505, %v2563
      %v2592 = vadd.f32 %v2506, %v2564
      %v2593 = vadd.f32 %v2507, %v2565
      %v2594 = vadd.f32 %v2508, %v2566
      %v2595 = vadd.f32 %v2509, %v2567
      %v2596 = vadd.f32 %v2510, %v2568
      %v2597 = vadd.f32 %v2511, %v2569
      %v2598 = vadd.f32 %v2512, %v2570
      %v2599 = vadd.f32 %v2513, %v2571
      %v2600 = vadd.f32 %v2514, %v2572
      %v2601 = vadd.f32 %v2515, %v2573
      %v2602 = vld [vmem:[%s928 + $0x1] sm:$0xff]
      %v2603 = vld [vmem:[%s928 + $0x9] sm:$0x3f]
      %v2604 = vld [vmem:[%s928 + $0x11] sm:$0xff]
      %v2605 = vld [vmem:[%s928 + $0x19] sm:$0x3f]
      %v2606 = vld [vmem:[%s928 + $0x21] sm:$0xff]
      %v2607 = vld [vmem:[%s928 + $0x29] sm:$0x3f]
      %v2608 = vld [vmem:[%s928 + $0x31] sm:$0xff]
      %v2609 = vld [vmem:[%s928 + $0x39] sm:$0x3f]
      %v2610 = vld [vmem:[%s928 + $0x41] sm:$0xff]
      %v2611 = vld [vmem:[%s928 + $0x49] sm:$0x3f]
      %v2612 = vld [vmem:[%s928 + $0x51] sm:$0xff]
      %v2613 = vld [vmem:[%s928 + $0x59] sm:$0x3f]
      %v2614 = vld [vmem:[%s928 + $0x61] sm:$0xff]
      %v2615 = vld [vmem:[%s928 + $0x69] sm:$0x3f]
      %v2616 = vld [vmem:[%s928 + $0x71] sm:$0xff]
      %v2617 = vld [vmem:[%s928 + $0x79] sm:$0x3f]
      %v2618 = vld [vmem:[%s928 + $0x81] sm:$0xff]
      %v2619 = vld [vmem:[%s928 + $0x89] sm:$0x3f]
      %v2620 = vld [vmem:[%s928 + $0x91] sm:$0xff]
      %v2621 = vld [vmem:[%s928 + $0x99] sm:$0x3f]
      %v2622 = vld [vmem:[%s928 + $0xa1] sm:$0xff]
      %v2623 = vld [vmem:[%s928 + $0xa9] sm:$0x3f]
      %v2624 = vld [vmem:[%s928 + $0xb1] sm:$0xff]
      %v2625 = vld [vmem:[%s928 + $0xb9] sm:$0x3f]
      %v2626 = vld [vmem:[%s928 + $0xc1] sm:$0xff]
      %v2627 = vld [vmem:[%s928 + $0xc9] sm:$0x3f]
      %v2628 = vld [vmem:[%s928 + $0xd1] sm:$0xff]
      %v2629 = vld [vmem:[%s928 + $0xd9] sm:$0x3f]
      %v2630 = vld [vmem:[%s1848 + $0x1] sm:$0x1]
      %v2631 = vperm.slane %v2630, 0
      %v2632 = vmul.f32 %v2631, %v2602
      %v2633 = vmul.f32 %v2631, %v2603
      %v2634 = vmul.f32 %v2631, %v2604
      %v2635 = vmul.f32 %v2631, %v2605
      %v2636 = vmul.f32 %v2631, %v2606
      %v2637 = vmul.f32 %v2631, %v2607
      %v2638 = vmul.f32 %v2631, %v2608
      %v2639 = vmul.f32 %v2631, %v2609
      %v2640 = vmul.f32 %v2631, %v2610
      %v2641 = vmul.f32 %v2631, %v2611
      %v2642 = vmul.f32 %v2631, %v2612
      %v2643 = vmul.f32 %v2631, %v2613
      %v2644 = vmul.f32 %v2631, %v2614
      %v2645 = vmul.f32 %v2631, %v2615
      %v2646 = vmul.f32 %v2631, %v2616
      %v2647 = vmul.f32 %v2631, %v2617
      %v2648 = vmul.f32 %v2631, %v2618
      %v2649 = vmul.f32 %v2631, %v2619
      %v2650 = vmul.f32 %v2631, %v2620
      %v2651 = vmul.f32 %v2631, %v2621
      %v2652 = vmul.f32 %v2631, %v2622
      %v2653 = vmul.f32 %v2631, %v2623
      %v2654 = vmul.f32 %v2631, %v2624
      %v2655 = vmul.f32 %v2631, %v2625
      %v2656 = vmul.f32 %v2631, %v2626
      %v2657 = vmul.f32 %v2631, %v2627
      %v2658 = vmul.f32 %v2631, %v2628
      %v2659 = vmul.f32 %v2631, %v2629
      %v2660 = vadd.f32 %v2574, %v2632
      %v2661 = vadd.f32 %v2575, %v2633
      %v2662 = vadd.f32 %v2576, %v2634
      %v2663 = vadd.f32 %v2577, %v2635
      %v2664 = vadd.f32 %v2578, %v2636
      %v2665 = vadd.f32 %v2579, %v2637
      %v2666 = vadd.f32 %v2580, %v2638
      %v2667 = vadd.f32 %v2581, %v2639
      %v2668 = vadd.f32 %v2582, %v2640
      %v2669 = vadd.f32 %v2583, %v2641
      %v2670 = vadd.f32 %v2584, %v2642
      %v2671 = vadd.f32 %v2585, %v2643
      %v2672 = vadd.f32 %v2586, %v2644
      %v2673 = vadd.f32 %v2587, %v2645
      %v2674 = vadd.f32 %v2588, %v2646
      %v2675 = vadd.f32 %v2589, %v2647
      %v2676 = vadd.f32 %v2590, %v2648
      %v2677 = vadd.f32 %v2591, %v2649
      %v2678 = vadd.f32 %v2592, %v2650
      %v2679 = vadd.f32 %v2593, %v2651
      %v2680 = vadd.f32 %v2594, %v2652
      %v2681 = vadd.f32 %v2595, %v2653
      %v2682 = vadd.f32 %v2596, %v2654
      %v2683 = vadd.f32 %v2597, %v2655
      %v2684 = vadd.f32 %v2598, %v2656
      %v2685 = vadd.f32 %v2599, %v2657
      %v2686 = vadd.f32 %v2600, %v2658
      %v2687 = vadd.f32 %v2601, %v2659
      %v2688 = vld [vmem:[%s928 + $0x2] sm:$0xff]
      %v2689 = vld [vmem:[%s928 + $0xa] sm:$0x3f]
      %v2690 = vld [vmem:[%s928 + $0x12] sm:$0xff]
      %v2691 = vld [vmem:[%s928 + $0x1a] sm:$0x3f]
      %v2692 = vld [vmem:[%s928 + $0x22] sm:$0xff]
      %v2693 = vld [vmem:[%s928 + $0x2a] sm:$0x3f]
      %v2694 = vld [vmem:[%s928 + $0x32] sm:$0xff]
      %v2695 = vld [vmem:[%s928 + $0x3a] sm:$0x3f]
      %v2696 = vld [vmem:[%s928 + $0x42] sm:$0xff]
      %v2697 = vld [vmem:[%s928 + $0x4a] sm:$0x3f]
      %v2698 = vld [vmem:[%s928 + $0x52] sm:$0xff]
      %v2699 = vld [vmem:[%s928 + $0x5a] sm:$0x3f]
      %v2700 = vld [vmem:[%s928 + $0x62] sm:$0xff]
      %v2701 = vld [vmem:[%s928 + $0x6a] sm:$0x3f]
      %v2702 = vld [vmem:[%s928 + $0x72] sm:$0xff]
      %v2703 = vld [vmem:[%s928 + $0x7a] sm:$0x3f]
      %v2704 = vld [vmem:[%s928 + $0x82] sm:$0xff]
      %v2705 = vld [vmem:[%s928 + $0x8a] sm:$0x3f]
      %v2706 = vld [vmem:[%s928 + $0x92] sm:$0xff]
      %v2707 = vld [vmem:[%s928 + $0x9a] sm:$0x3f]
      %v2708 = vld [vmem:[%s928 + $0xa2] sm:$0xff]
      %v2709 = vld [vmem:[%s928 + $0xaa] sm:$0x3f]
      %v2710 = vld [vmem:[%s928 + $0xb2] sm:$0xff]
      %v2711 = vld [vmem:[%s928 + $0xba] sm:$0x3f]
      %v2712 = vld [vmem:[%s928 + $0xc2] sm:$0xff]
      %v2713 = vld [vmem:[%s928 + $0xca] sm:$0x3f]
      %v2714 = vld [vmem:[%s928 + $0xd2] sm:$0xff]
      %v2715 = vld [vmem:[%s928 + $0xda] sm:$0x3f]
      %v2716 = vld [vmem:[%s1935 + $0x1] sm:$0x1]
      %v2717 = vperm.slane %v2716, 0
      %v2718 = vmul.f32 %v2717, %v2688
      %v2719 = vmul.f32 %v2717, %v2689
      %v2720 = vmul.f32 %v2717, %v2690
      %v2721 = vmul.f32 %v2717, %v2691
      %v2722 = vmul.f32 %v2717, %v2692
      %v2723 = vmul.f32 %v2717, %v2693
      %v2724 = vmul.f32 %v2717, %v2694
      %v2725 = vmul.f32 %v2717, %v2695
      %v2726 = vmul.f32 %v2717, %v2696
      %v2727 = vmul.f32 %v2717, %v2697
      %v2728 = vmul.f32 %v2717, %v2698
      %v2729 = vmul.f32 %v2717, %v2699
      %v2730 = vmul.f32 %v2717, %v2700
      %v2731 = vmul.f32 %v2717, %v2701
      %v2732 = vmul.f32 %v2717, %v2702
      %v2733 = vmul.f32 %v2717, %v2703
      %v2734 = vmul.f32 %v2717, %v2704
      %v2735 = vmul.f32 %v2717, %v2705
      %v2736 = vmul.f32 %v2717, %v2706
      %v2737 = vmul.f32 %v2717, %v2707
      %v2738 = vmul.f32 %v2717, %v2708
      %v2739 = vmul.f32 %v2717, %v2709
      %v2740 = vmul.f32 %v2717, %v2710
      %v2741 = vmul.f32 %v2717, %v2711
      %v2742 = vmul.f32 %v2717, %v2712
      %v2743 = vmul.f32 %v2717, %v2713
      %v2744 = vmul.f32 %v2717, %v2714
      %v2745 = vmul.f32 %v2717, %v2715
      %v2746 = vadd.f32 %v2660, %v2718
      %v2747 = vadd.f32 %v2661, %v2719
      %v2748 = vadd.f32 %v2662, %v2720
      %v2749 = vadd.f32 %v2663, %v2721
      %v2750 = vadd.f32 %v2664, %v2722
      %v2751 = vadd.f32 %v2665, %v2723
      %v2752 = vadd.f32 %v2666, %v2724
      %v2753 = vadd.f32 %v2667, %v2725
      %v2754 = vadd.f32 %v2668, %v2726
      %v2755 = vadd.f32 %v2669, %v2727
      %v2756 = vadd.f32 %v2670, %v2728
      %v2757 = vadd.f32 %v2671, %v2729
      %v2758 = vadd.f32 %v2672, %v2730
      %v2759 = vadd.f32 %v2673, %v2731
      %v2760 = vadd.f32 %v2674, %v2732
      %v2761 = vadd.f32 %v2675, %v2733
      %v2762 = vadd.f32 %v2676, %v2734
      %v2763 = vadd.f32 %v2677, %v2735
      %v2764 = vadd.f32 %v2678, %v2736
      %v2765 = vadd.f32 %v2679, %v2737
      %v2766 = vadd.f32 %v2680, %v2738
      %v2767 = vadd.f32 %v2681, %v2739
      %v2768 = vadd.f32 %v2682, %v2740
      %v2769 = vadd.f32 %v2683, %v2741
      %v2770 = vadd.f32 %v2684, %v2742
      %v2771 = vadd.f32 %v2685, %v2743
      %v2772 = vadd.f32 %v2686, %v2744
      %v2773 = vadd.f32 %v2687, %v2745
      %v2774 = vld [vmem:[%s1187] sm:$0xff]
      %v2775 = vld [vmem:[%s1187 + $0x8] sm:$0x3f]
      %v2776 = vld [vmem:[%s1187 + $0x10] sm:$0xff]
      %v2777 = vld [vmem:[%s1187 + $0x18] sm:$0x3f]
      %v2778 = vld [vmem:[%s1187 + $0x20] sm:$0xff]
      %v2779 = vld [vmem:[%s1187 + $0x28] sm:$0x3f]
      %v2780 = vld [vmem:[%s1187 + $0x30] sm:$0xff]
      %v2781 = vld [vmem:[%s1187 + $0x38] sm:$0x3f]
      %v2782 = vld [vmem:[%s1187 + $0x40] sm:$0xff]
      %v2783 = vld [vmem:[%s1187 + $0x48] sm:$0x3f]
      %v2784 = vld [vmem:[%s1187 + $0x50] sm:$0xff]
      %v2785 = vld [vmem:[%s1187 + $0x58] sm:$0x3f]
      %v2786 = vld [vmem:[%s1187 + $0x60] sm:$0xff]
      %v2787 = vld [vmem:[%s1187 + $0x68] sm:$0x3f]
      %v2788 = vld [vmem:[%s1187 + $0x70] sm:$0xff]
      %v2789 = vld [vmem:[%s1187 + $0x78] sm:$0x3f]
      %v2790 = vld [vmem:[%s1187 + $0x80] sm:$0xff]
      %v2791 = vld [vmem:[%s1187 + $0x88] sm:$0x3f]
      %v2792 = vld [vmem:[%s1187 + $0x90] sm:$0xff]
      %v2793 = vld [vmem:[%s1187 + $0x98] sm:$0x3f]
      %v2794 = vld [vmem:[%s1187 + $0xa0] sm:$0xff]
      %v2795 = vld [vmem:[%s1187 + $0xa8] sm:$0x3f]
      %v2796 = vld [vmem:[%s1187 + $0xb0] sm:$0xff]
      %v2797 = vld [vmem:[%s1187 + $0xb8] sm:$0x3f]
      %v2798 = vld [vmem:[%s1187 + $0xc0] sm:$0xff]
      %v2799 = vld [vmem:[%s1187 + $0xc8] sm:$0x3f]
      %v2800 = vld [vmem:[%s1187 + $0xd0] sm:$0xff]
      %v2801 = vld [vmem:[%s1187 + $0xd8] sm:$0x3f]
      %v2802 = vld [vmem:[%s2022 + $0x1] sm:$0x1]
      %v2803 = vperm.slane %v2802, 0
      %v2804 = vmul.f32 %v2803, %v2774
      %v2805 = vmul.f32 %v2803, %v2775
      %v2806 = vmul.f32 %v2803, %v2776
      %v2807 = vmul.f32 %v2803, %v2777
      %v2808 = vmul.f32 %v2803, %v2778
      %v2809 = vmul.f32 %v2803, %v2779
      %v2810 = vmul.f32 %v2803, %v2780
      %v2811 = vmul.f32 %v2803, %v2781
      %v2812 = vmul.f32 %v2803, %v2782
      %v2813 = vmul.f32 %v2803, %v2783
      %v2814 = vmul.f32 %v2803, %v2784
      %v2815 = vmul.f32 %v2803, %v2785
      %v2816 = vmul.f32 %v2803, %v2786
      %v2817 = vmul.f32 %v2803, %v2787
      %v2818 = vmul.f32 %v2803, %v2788
      %v2819 = vmul.f32 %v2803, %v2789
      %v2820 = vmul.f32 %v2803, %v2790
      %v2821 = vmul.f32 %v2803, %v2791
      %v2822 = vmul.f32 %v2803, %v2792
      %v2823 = vmul.f32 %v2803, %v2793
      %v2824 = vmul.f32 %v2803, %v2794
      %v2825 = vmul.f32 %v2803, %v2795
      %v2826 = vmul.f32 %v2803, %v2796
      %v2827 = vmul.f32 %v2803, %v2797
      %v2828 = vmul.f32 %v2803, %v2798
      %v2829 = vmul.f32 %v2803, %v2799
      %v2830 = vmul.f32 %v2803, %v2800
      %v2831 = vmul.f32 %v2803, %v2801
      %v2832 = vadd.f32 %v2746, %v2804
      %v2833 = vadd.f32 %v2747, %v2805
      %v2834 = vadd.f32 %v2748, %v2806
      %v2835 = vadd.f32 %v2749, %v2807
      %v2836 = vadd.f32 %v2750, %v2808
      %v2837 = vadd.f32 %v2751, %v2809
      %v2838 = vadd.f32 %v2752, %v2810
      %v2839 = vadd.f32 %v2753, %v2811
      %v2840 = vadd.f32 %v2754, %v2812
      %v2841 = vadd.f32 %v2755, %v2813
      %v2842 = vadd.f32 %v2756, %v2814
      %v2843 = vadd.f32 %v2757, %v2815
      %v2844 = vadd.f32 %v2758, %v2816
      %v2845 = vadd.f32 %v2759, %v2817
      %v2846 = vadd.f32 %v2760, %v2818
      %v2847 = vadd.f32 %v2761, %v2819
      %v2848 = vadd.f32 %v2762, %v2820
      %v2849 = vadd.f32 %v2763, %v2821
      %v2850 = vadd.f32 %v2764, %v2822
      %v2851 = vadd.f32 %v2765, %v2823
      %v2852 = vadd.f32 %v2766, %v2824
      %v2853 = vadd.f32 %v2767, %v2825
      %v2854 = vadd.f32 %v2768, %v2826
      %v2855 = vadd.f32 %v2769, %v2827
      %v2856 = vadd.f32 %v2770, %v2828
      %v2857 = vadd.f32 %v2771, %v2829
      %v2858 = vadd.f32 %v2772, %v2830
      %v2859 = vadd.f32 %v2773, %v2831
      %v2860 = vld [vmem:[%s1187 + $0x1] sm:$0xff]
      %v2861 = vld [vmem:[%s1187 + $0x9] sm:$0x3f]
      %v2862 = vld [vmem:[%s1187 + $0x11] sm:$0xff]
      %v2863 = vld [vmem:[%s1187 + $0x19] sm:$0x3f]
      %v2864 = vld [vmem:[%s1187 + $0x21] sm:$0xff]
      %v2865 = vld [vmem:[%s1187 + $0x29] sm:$0x3f]
      %v2866 = vld [vmem:[%s1187 + $0x31] sm:$0xff]
      %v2867 = vld [vmem:[%s1187 + $0x39] sm:$0x3f]
      %v2868 = vld [vmem:[%s1187 + $0x41] sm:$0xff]
      %v2869 = vld [vmem:[%s1187 + $0x49] sm:$0x3f]
      %v2870 = vld [vmem:[%s1187 + $0x51] sm:$0xff]
      %v2871 = vld [vmem:[%s1187 + $0x59] sm:$0x3f]
      %v2872 = vld [vmem:[%s1187 + $0x61] sm:$0xff]
      %v2873 = vld [vmem:[%s1187 + $0x69] sm:$0x3f]
      %v2874 = vld [vmem:[%s1187 + $0x71] sm:$0xff]
      %v2875 = vld [vmem:[%s1187 + $0x79] sm:$0x3f]
      %v2876 = vld [vmem:[%s1187 + $0x81] sm:$0xff]
      %v2877 = vld [vmem:[%s1187 + $0x89] sm:$0x3f]
      %v2878 = vld [vmem:[%s1187 + $0x91] sm:$0xff]
      %v2879 = vld [vmem:[%s1187 + $0x99] sm:$0x3f]
      %v2880 = vld [vmem:[%s1187 + $0xa1] sm:$0xff]
      %v2881 = vld [vmem:[%s1187 + $0xa9] sm:$0x3f]
      %v2882 = vld [vmem:[%s1187 + $0xb1] sm:$0xff]
      %v2883 = vld [vmem:[%s1187 + $0xb9] sm:$0x3f]
      %v2884 = vld [vmem:[%s1187 + $0xc1] sm:$0xff]
      %v2885 = vld [vmem:[%s1187 + $0xc9] sm:$0x3f]
      %v2886 = vld [vmem:[%s1187 + $0xd1] sm:$0xff]
      %v2887 = vld [vmem:[%s1187 + $0xd9] sm:$0x3f]
      %v2888 = vld [vmem:[%s2109 + $0x1] sm:$0x1]
      %v2889 = vperm.slane %v2888, 0
      %v2890 = vmul.f32 %v2889, %v2860
      %v2891 = vmul.f32 %v2889, %v2861
      %v2892 = vmul.f32 %v2889, %v2862
      %v2893 = vmul.f32 %v2889, %v2863
      %v2894 = vmul.f32 %v2889, %v2864
      %v2895 = vmul.f32 %v2889, %v2865
      %v2896 = vmul.f32 %v2889, %v2866
      %v2897 = vmul.f32 %v2889, %v2867
      %v2898 = vmul.f32 %v2889, %v2868
      %v2899 = vmul.f32 %v2889, %v2869
      %v2900 = vmul.f32 %v2889, %v2870
      %v2901 = vmul.f32 %v2889, %v2871
      %v2902 = vmul.f32 %v2889, %v2872
      %v2903 = vmul.f32 %v2889, %v2873
      %v2904 = vmul.f32 %v2889, %v2874
      %v2905 = vmul.f32 %v2889, %v2875
      %v2906 = vmul.f32 %v2889, %v2876
      %v2907 = vmul.f32 %v2889, %v2877
      %v2908 = vmul.f32 %v2889, %v2878
      %v2909 = vmul.f32 %v2889, %v2879
      %v2910 = vmul.f32 %v2889, %v2880
      %v2911 = vmul.f32 %v2889, %v2881
      %v2912 = vmul.f32 %v2889, %v2882
      %v2913 = vmul.f32 %v2889, %v2883
      %v2914 = vmul.f32 %v2889, %v2884
      %v2915 = vmul.f32 %v2889, %v2885
      %v2916 = vmul.f32 %v2889, %v2886
      %v2917 = vmul.f32 %v2889, %v2887
      %v2918 = vadd.f32 %v2832, %v2890
      %v2919 = vadd.f32 %v2833, %v2891
      %v2920 = vadd.f32 %v2834, %v2892
      %v2921 = vadd.f32 %v2835, %v2893
      %v2922 = vadd.f32 %v2836, %v2894
      %v2923 = vadd.f32 %v2837, %v2895
      %v2924 = vadd.f32 %v2838, %v2896
      %v2925 = vadd.f32 %v2839, %v2897
      %v2926 = vadd.f32 %v2840, %v2898
      %v2927 = vadd.f32 %v2841, %v2899
      %v2928 = vadd.f32 %v2842, %v2900
      %v2929 = vadd.f32 %v2843, %v2901
      %v2930 = vadd.f32 %v2844, %v2902
      %v2931 = vadd.f32 %v2845, %v2903
      %v2932 = vadd.f32 %v2846, %v2904
      %v2933 = vadd.f32 %v2847, %v2905
      %v2934 = vadd.f32 %v2848, %v2906
      %v2935 = vadd.f32 %v2849, %v2907
      %v2936 = vadd.f32 %v2850, %v2908
      %v2937 = vadd.f32 %v2851, %v2909
      %v2938 = vadd.f32 %v2852, %v2910
      %v2939 = vadd.f32 %v2853, %v2911
      %v2940 = vadd.f32 %v2854, %v2912
      %v2941 = vadd.f32 %v2855, %v2913
      %v2942 = vadd.f32 %v2856, %v2914
      %v2943 = vadd.f32 %v2857, %v2915
      %v2944 = vadd.f32 %v2858, %v2916
      %v2945 = vadd.f32 %v2859, %v2917
      %v2946 = vld [vmem:[%s1187 + $0x2] sm:$0xff]
      %v2947 = vld [vmem:[%s1187 + $0xa] sm:$0x3f]
      %v2948 = vld [vmem:[%s1187 + $0x12] sm:$0xff]
      %v2949 = vld [vmem:[%s1187 + $0x1a] sm:$0x3f]
      %v2950 = vld [vmem:[%s1187 + $0x22] sm:$0xff]
      %v2951 = vld [vmem:[%s1187 + $0x2a] sm:$0x3f]
      %v2952 = vld [vmem:[%s1187 + $0x32] sm:$0xff]
      %v2953 = vld [vmem:[%s1187 + $0x3a] sm:$0x3f]
      %v2954 = vld [vmem:[%s1187 + $0x42] sm:$0xff]
      %v2955 = vld [vmem:[%s1187 + $0x4a] sm:$0x3f]
      %v2956 = vld [vmem:[%s1187 + $0x52] sm:$0xff]
      %v2957 = vld [vmem:[%s1187 + $0x5a] sm:$0x3f]
      %v2958 = vld [vmem:[%s1187 + $0x62] sm:$0xff]
      %v2959 = vld [vmem:[%s1187 + $0x6a] sm:$0x3f]
      %v2960 = vld [vmem:[%s1187 + $0x72] sm:$0xff]
      %v2961 = vld [vmem:[%s1187 + $0x7a] sm:$0x3f]
      %v2962 = vld [vmem:[%s1187 + $0x82] sm:$0xff]
      %v2963 = vld [vmem:[%s1187 + $0x8a] sm:$0x3f]
      %v2964 = vld [vmem:[%s1187 + $0x92] sm:$0xff]
      %v2965 = vld [vmem:[%s1187 + $0x9a] sm:$0x3f]
      %v2966 = vld [vmem:[%s1187 + $0xa2] sm:$0xff]
      %v2967 = vld [vmem:[%s1187 + $0xaa] sm:$0x3f]
      %v2968 = vld [vmem:[%s1187 + $0xb2] sm:$0xff]
      %v2969 = vld [vmem:[%s1187 + $0xba] sm:$0x3f]
      %v2970 = vld [vmem:[%s1187 + $0xc2] sm:$0xff]
      %v2971 = vld [vmem:[%s1187 + $0xca] sm:$0x3f]
      %v2972 = vld [vmem:[%s1187 + $0xd2] sm:$0xff]
      %v2973 = vld [vmem:[%s1187 + $0xda] sm:$0x3f]
      %v2974 = vld [vmem:[%s2196 + $0x1] sm:$0x1]
      %v2975 = vperm.slane %v2974, 0
      %v2976 = vmul.f32 %v2975, %v2946
      %v2977 = vmul.f32 %v2975, %v2947
      %v2978 = vmul.f32 %v2975, %v2948
      %v2979 = vmul.f32 %v2975, %v2949
      %v2980 = vmul.f32 %v2975, %v2950
      %v2981 = vmul.f32 %v2975, %v2951
      %v2982 = vmul.f32 %v2975, %v2952
      %v2983 = vmul.f32 %v2975, %v2953
      %v2984 = vmul.f32 %v2975, %v2954
      %v2985 = vmul.f32 %v2975, %v2955
      %v2986 = vmul.f32 %v2975, %v2956
      %v2987 = vmul.f32 %v2975, %v2957
      %v2988 = vmul.f32 %v2975, %v2958
      %v2989 = vmul.f32 %v2975, %v2959
      %v2990 = vmul.f32 %v2975, %v2960
      %v2991 = vmul.f32 %v2975, %v2961
      %v2992 = vmul.f32 %v2975, %v2962
      %v2993 = vmul.f32 %v2975, %v2963
      %v2994 = vmul.f32 %v2975, %v2964
      %v2995 = vmul.f32 %v2975, %v2965
      %v2996 = vmul.f32 %v2975, %v2966
      %v2997 = vmul.f32 %v2975, %v2967
      %v2998 = vmul.f32 %v2975, %v2968
      %v2999 = vmul.f32 %v2975, %v2969
      %v3000 = vmul.f32 %v2975, %v2970
      %v3001 = vmul.f32 %v2975, %v2971
      %v3002 = vmul.f32 %v2975, %v2972
      %v3003 = vmul.f32 %v2975, %v2973
      %v3004 = vadd.f32 %v2918, %v2976
      %v3005 = vadd.f32 %v2919, %v2977
      %v3006 = vadd.f32 %v2920, %v2978
      %v3007 = vadd.f32 %v2921, %v2979
      %v3008 = vadd.f32 %v2922, %v2980
      %v3009 = vadd.f32 %v2923, %v2981
      %v3010 = vadd.f32 %v2924, %v2982
      %v3011 = vadd.f32 %v2925, %v2983
      %v3012 = vadd.f32 %v2926, %v2984
      %v3013 = vadd.f32 %v2927, %v2985
      %v3014 = vadd.f32 %v2928, %v2986
      %v3015 = vadd.f32 %v2929, %v2987
      %v3016 = vadd.f32 %v2930, %v2988
      %v3017 = vadd.f32 %v2931, %v2989
      %v3018 = vadd.f32 %v2932, %v2990
      %v3019 = vadd.f32 %v2933, %v2991
      %v3020 = vadd.f32 %v2934, %v2992
      %v3021 = vadd.f32 %v2935, %v2993
      %v3022 = vadd.f32 %v2936, %v2994
      %v3023 = vadd.f32 %v2937, %v2995
      %v3024 = vadd.f32 %v2938, %v2996
      %v3025 = vadd.f32 %v2939, %v2997
      %v3026 = vadd.f32 %v2940, %v2998
      %v3027 = vadd.f32 %v2941, %v2999
      %v3028 = vadd.f32 %v2942, %v3000
      %v3029 = vadd.f32 %v2943, %v3001
      %v3030 = vadd.f32 %v2944, %v3002
      %v3031 = vadd.f32 %v2945, %v3003
      %v3032 = vld [vmem:[%s1446] sm:$0xff]
      %v3033 = vld [vmem:[%s1446 + $0x8] sm:$0x3f]
      %v3034 = vld [vmem:[%s1446 + $0x10] sm:$0xff]
      %v3035 = vld [vmem:[%s1446 + $0x18] sm:$0x3f]
      %v3036 = vld [vmem:[%s1446 + $0x20] sm:$0xff]
      %v3037 = vld [vmem:[%s1446 + $0x28] sm:$0x3f]
      %v3038 = vld [vmem:[%s1446 + $0x30] sm:$0xff]
      %v3039 = vld [vmem:[%s1446 + $0x38] sm:$0x3f]
      %v3040 = vld [vmem:[%s1446 + $0x40] sm:$0xff]
      %v3041 = vld [vmem:[%s1446 + $0x48] sm:$0x3f]
      %v3042 = vld [vmem:[%s1446 + $0x50] sm:$0xff]
      %v3043 = vld [vmem:[%s1446 + $0x58] sm:$0x3f]
      %v3044 = vld [vmem:[%s1446 + $0x60] sm:$0xff]
      %v3045 = vld [vmem:[%s1446 + $0x68] sm:$0x3f]
      %v3046 = vld [vmem:[%s1446 + $0x70] sm:$0xff]
      %v3047 = vld [vmem:[%s1446 + $0x78] sm:$0x3f]
      %v3048 = vld [vmem:[%s1446 + $0x80] sm:$0xff]
      %v3049 = vld [vmem:[%s1446 + $0x88] sm:$0x3f]
      %v3050 = vld [vmem:[%s1446 + $0x90] sm:$0xff]
      %v3051 = vld [vmem:[%s1446 + $0x98] sm:$0x3f]
      %v3052 = vld [vmem:[%s1446 + $0xa0] sm:$0xff]
      %v3053 = vld [vmem:[%s1446 + $0xa8] sm:$0x3f]
      %v3054 = vld [vmem:[%s1446 + $0xb0] sm:$0xff]
      %v3055 = vld [vmem:[%s1446 + $0xb8] sm:$0x3f]
      %v3056 = vld [vmem:[%s1446 + $0xc0] sm:$0xff]
      %v3057 = vld [vmem:[%s1446 + $0xc8] sm:$0x3f]
      %v3058 = vld [vmem:[%s1446 + $0xd0] sm:$0xff]
      %v3059 = vld [vmem:[%s1446 + $0xd8] sm:$0x3f]
      %v3060 = vld [vmem:[%s2283 + $0x1] sm:$0x1]
      %v3061 = vperm.slane %v3060, 0
      %v3062 = vmul.f32 %v3061, %v3032
      %v3063 = vmul.f32 %v3061, %v3033
      %v3064 = vmul.f32 %v3061, %v3034
      %v3065 = vmul.f32 %v3061, %v3035
      %v3066 = vmul.f32 %v3061, %v3036
      %v3067 = vmul.f32 %v3061, %v3037
      %v3068 = vmul.f32 %v3061, %v3038
      %v3069 = vmul.f32 %v3061, %v3039
      %v3070 = vmul.f32 %v3061, %v3040
      %v3071 = vmul.f32 %v3061, %v3041
      %v3072 = vmul.f32 %v3061, %v3042
      %v3073 = vmul.f32 %v3061, %v3043
      %v3074 = vmul.f32 %v3061, %v3044
      %v3075 = vmul.f32 %v3061, %v3045
      %v3076 = vmul.f32 %v3061, %v3046
      %v3077 = vmul.f32 %v3061, %v3047
      %v3078 = vmul.f32 %v3061, %v3048
      %v3079 = vmul.f32 %v3061, %v3049
      %v3080 = vmul.f32 %v3061, %v3050
      %v3081 = vmul.f32 %v3061, %v3051
      %v3082 = vmul.f32 %v3061, %v3052
      %v3083 = vmul.f32 %v3061, %v3053
      %v3084 = vmul.f32 %v3061, %v3054
      %v3085 = vmul.f32 %v3061, %v3055
      %v3086 = vmul.f32 %v3061, %v3056
      %v3087 = vmul.f32 %v3061, %v3057
      %v3088 = vmul.f32 %v3061, %v3058
      %v3089 = vmul.f32 %v3061, %v3059
      %v3090 = vadd.f32 %v3004, %v3062
      %v3091 = vadd.f32 %v3005, %v3063
      %v3092 = vadd.f32 %v3006, %v3064
      %v3093 = vadd.f32 %v3007, %v3065
      %v3094 = vadd.f32 %v3008, %v3066
      %v3095 = vadd.f32 %v3009, %v3067
      %v3096 = vadd.f32 %v3010, %v3068
      %v3097 = vadd.f32 %v3011, %v3069
      %v3098 = vadd.f32 %v3012, %v3070
      %v3099 = vadd.f32 %v3013, %v3071
      %v3100 = vadd.f32 %v3014, %v3072
      %v3101 = vadd.f32 %v3015, %v3073
      %v3102 = vadd.f32 %v3016, %v3074
      %v3103 = vadd.f32 %v3017, %v3075
      %v3104 = vadd.f32 %v3018, %v3076
      %v3105 = vadd.f32 %v3019, %v3077
      %v3106 = vadd.f32 %v3020, %v3078
      %v3107 = vadd.f32 %v3021, %v3079
      %v3108 = vadd.f32 %v3022, %v3080
      %v3109 = vadd.f32 %v3023, %v3081
      %v3110 = vadd.f32 %v3024, %v3082
      %v3111 = vadd.f32 %v3025, %v3083
      %v3112 = vadd.f32 %v3026, %v3084
      %v3113 = vadd.f32 %v3027, %v3085
      %v3114 = vadd.f32 %v3028, %v3086
      %v3115 = vadd.f32 %v3029, %v3087
      %v3116 = vadd.f32 %v3030, %v3088
      %v3117 = vadd.f32 %v3031, %v3089
      %v3118 = vld [vmem:[%s1446 + $0x1] sm:$0xff]
      %v3119 = vld [vmem:[%s1446 + $0x9] sm:$0x3f]
      %v3120 = vld [vmem:[%s1446 + $0x11] sm:$0xff]
      %v3121 = vld [vmem:[%s1446 + $0x19] sm:$0x3f]
      %v3122 = vld [vmem:[%s1446 + $0x21] sm:$0xff]
      %v3123 = vld [vmem:[%s1446 + $0x29] sm:$0x3f]
      %v3124 = vld [vmem:[%s1446 + $0x31] sm:$0xff]
      %v3125 = vld [vmem:[%s1446 + $0x39] sm:$0x3f]
      %v3126 = vld [vmem:[%s1446 + $0x41] sm:$0xff]
      %v3127 = vld [vmem:[%s1446 + $0x49] sm:$0x3f]
      %v3128 = vld [vmem:[%s1446 + $0x51] sm:$0xff]
      %v3129 = vld [vmem:[%s1446 + $0x59] sm:$0x3f]
      %v3130 = vld [vmem:[%s1446 + $0x61] sm:$0xff]
      %v3131 = vld [vmem:[%s1446 + $0x69] sm:$0x3f]
      %v3132 = vld [vmem:[%s1446 + $0x71] sm:$0xff]
      %v3133 = vld [vmem:[%s1446 + $0x79] sm:$0x3f]
      %v3134 = vld [vmem:[%s1446 + $0x81] sm:$0xff]
      %v3135 = vld [vmem:[%s1446 + $0x89] sm:$0x3f]
      %v3136 = vld [vmem:[%s1446 + $0x91] sm:$0xff]
      %v3137 = vld [vmem:[%s1446 + $0x99] sm:$0x3f]
      %v3138 = vld [vmem:[%s1446 + $0xa1] sm:$0xff]
      %v3139 = vld [vmem:[%s1446 + $0xa9] sm:$0x3f]
      %v3140 = vld [vmem:[%s1446 + $0xb1] sm:$0xff]
      %v3141 = vld [vmem:[%s1446 + $0xb9] sm:$0x3f]
      %v3142 = vld [vmem:[%s1446 + $0xc1] sm:$0xff]
      %v3143 = vld [vmem:[%s1446 + $0xc9] sm:$0x3f]
      %v3144 = vld [vmem:[%s1446 + $0xd1] sm:$0xff]
      %v3145 = vld [vmem:[%s1446 + $0xd9] sm:$0x3f]
      %v3146 = vld [vmem:[%s2370 + $0x1] sm:$0x1]
      %v3147 = vperm.slane %v3146, 0
      %v3148 = vmul.f32 %v3147, %v3118
      %v3149 = vmul.f32 %v3147, %v3119
      %v3150 = vmul.f32 %v3147, %v3120
      %v3151 = vmul.f32 %v3147, %v3121
      %v3152 = vmul.f32 %v3147, %v3122
      %v3153 = vmul.f32 %v3147, %v3123
      %v3154 = vmul.f32 %v3147, %v3124
      %v3155 = vmul.f32 %v3147, %v3125
      %v3156 = vmul.f32 %v3147, %v3126
      %v3157 = vmul.f32 %v3147, %v3127
      %v3158 = vmul.f32 %v3147, %v3128
      %v3159 = vmul.f32 %v3147, %v3129
      %v3160 = vmul.f32 %v3147, %v3130
      %v3161 = vmul.f32 %v3147, %v3131
      %v3162 = vmul.f32 %v3147, %v3132
      %v3163 = vmul.f32 %v3147, %v3133
      %v3164 = vmul.f32 %v3147, %v3134
      %v3165 = vmul.f32 %v3147, %v3135
      %v3166 = vmul.f32 %v3147, %v3136
      %v3167 = vmul.f32 %v3147, %v3137
      %v3168 = vmul.f32 %v3147, %v3138
      %v3169 = vmul.f32 %v3147, %v3139
      %v3170 = vmul.f32 %v3147, %v3140
      %v3171 = vmul.f32 %v3147, %v3141
      %v3172 = vmul.f32 %v3147, %v3142
      %v3173 = vmul.f32 %v3147, %v3143
      %v3174 = vmul.f32 %v3147, %v3144
      %v3175 = vmul.f32 %v3147, %v3145
      %v3176 = vadd.f32 %v3090, %v3148
      %v3177 = vadd.f32 %v3091, %v3149
      %v3178 = vadd.f32 %v3092, %v3150
      %v3179 = vadd.f32 %v3093, %v3151
      %v3180 = vadd.f32 %v3094, %v3152
      %v3181 = vadd.f32 %v3095, %v3153
      %v3182 = vadd.f32 %v3096, %v3154
      %v3183 = vadd.f32 %v3097, %v3155
      %v3184 = vadd.f32 %v3098, %v3156
      %v3185 = vadd.f32 %v3099, %v3157
      %v3186 = vadd.f32 %v3100, %v3158
      %v3187 = vadd.f32 %v3101, %v3159
      %v3188 = vadd.f32 %v3102, %v3160
      %v3189 = vadd.f32 %v3103, %v3161
      %v3190 = vadd.f32 %v3104, %v3162
      %v3191 = vadd.f32 %v3105, %v3163
      %v3192 = vadd.f32 %v3106, %v3164
      %v3193 = vadd.f32 %v3107, %v3165
      %v3194 = vadd.f32 %v3108, %v3166
      %v3195 = vadd.f32 %v3109, %v3167
      %v3196 = vadd.f32 %v3110, %v3168
      %v3197 = vadd.f32 %v3111, %v3169
      %v3198 = vadd.f32 %v3112, %v3170
      %v3199 = vadd.f32 %v3113, %v3171
      %v3200 = vadd.f32 %v3114, %v3172
      %v3201 = vadd.f32 %v3115, %v3173
      %v3202 = vadd.f32 %v3116, %v3174
      %v3203 = vadd.f32 %v3117, %v3175
      %v3204 = vld [vmem:[%s1446 + $0x2] sm:$0xff]
      %v3205 = vld [vmem:[%s1446 + $0xa] sm:$0x3f]
      %v3206 = vld [vmem:[%s1446 + $0x12] sm:$0xff]
      %v3207 = vld [vmem:[%s1446 + $0x1a] sm:$0x3f]
      %v3208 = vld [vmem:[%s1446 + $0x22] sm:$0xff]
      %v3209 = vld [vmem:[%s1446 + $0x2a] sm:$0x3f]
      %v3210 = vld [vmem:[%s1446 + $0x32] sm:$0xff]
      %v3211 = vld [vmem:[%s1446 + $0x3a] sm:$0x3f]
      %v3212 = vld [vmem:[%s1446 + $0x42] sm:$0xff]
      %v3213 = vld [vmem:[%s1446 + $0x4a] sm:$0x3f]
      %v3214 = vld [vmem:[%s1446 + $0x52] sm:$0xff]
      %v3215 = vld [vmem:[%s1446 + $0x5a] sm:$0x3f]
      %v3216 = vld [vmem:[%s1446 + $0x62] sm:$0xff]
      %v3217 = vld [vmem:[%s1446 + $0x6a] sm:$0x3f]
      %v3218 = vld [vmem:[%s1446 + $0x72] sm:$0xff]
      %v3219 = vld [vmem:[%s1446 + $0x7a] sm:$0x3f]
      %v3220 = vld [vmem:[%s1446 + $0x82] sm:$0xff]
      %v3221 = vld [vmem:[%s1446 + $0x8a] sm:$0x3f]
      %v3222 = vld [vmem:[%s1446 + $0x92] sm:$0xff]
      %v3223 = vld [vmem:[%s1446 + $0x9a] sm:$0x3f]
      %v3224 = vld [vmem:[%s1446 + $0xa2] sm:$0xff]
      %v3225 = vld [vmem:[%s1446 + $0xaa] sm:$0x3f]
      %v3226 = vld [vmem:[%s1446 + $0xb2] sm:$0xff]
      %v3227 = vld [vmem:[%s1446 + $0xba] sm:$0x3f]
      %v3228 = vld [vmem:[%s1446 + $0xc2] sm:$0xff]
      %v3229 = vld [vmem:[%s1446 + $0xca] sm:$0x3f]
      %v3230 = vld [vmem:[%s1446 + $0xd2] sm:$0xff]
      %v3231 = vld [vmem:[%s1446 + $0xda] sm:$0x3f]
      %v3232 = vld [vmem:[%s2457 + $0x1] sm:$0x1]
      %v3233 = vperm.slane %v3232, 0
      %v3234 = vmul.f32 %v3233, %v3204
      %v3235 = vmul.f32 %v3233, %v3205
      %v3236 = vmul.f32 %v3233, %v3206
      %v3237 = vmul.f32 %v3233, %v3207
      %v3238 = vmul.f32 %v3233, %v3208
      %v3239 = vmul.f32 %v3233, %v3209
      %v3240 = vmul.f32 %v3233, %v3210
      %v3241 = vmul.f32 %v3233, %v3211
      %v3242 = vmul.f32 %v3233, %v3212
      %v3243 = vmul.f32 %v3233, %v3213
      %v3244 = vmul.f32 %v3233, %v3214
      %v3245 = vmul.f32 %v3233, %v3215
      %v3246 = vmul.f32 %v3233, %v3216
      %v3247 = vmul.f32 %v3233, %v3217
      %v3248 = vmul.f32 %v3233, %v3218
      %v3249 = vmul.f32 %v3233, %v3219
      %v3250 = vmul.f32 %v3233, %v3220
      %v3251 = vmul.f32 %v3233, %v3221
      %v3252 = vmul.f32 %v3233, %v3222
      %v3253 = vmul.f32 %v3233, %v3223
      %v3254 = vmul.f32 %v3233, %v3224
      %v3255 = vmul.f32 %v3233, %v3225
      %v3256 = vmul.f32 %v3233, %v3226
      %v3257 = vmul.f32 %v3233, %v3227
      %v3258 = vmul.f32 %v3233, %v3228
      %v3259 = vmul.f32 %v3233, %v3229
      %v3260 = vmul.f32 %v3233, %v3230
      %v3261 = vmul.f32 %v3233, %v3231
      %v3262 = vadd.f32 %v3176, %v3234
      %v3263 = vadd.f32 %v3177, %v3235
      %v3264 = vadd.f32 %v3178, %v3236
      %v3265 = vadd.f32 %v3179, %v3237
      %v3266 = vadd.f32 %v3180, %v3238
      %v3267 = vadd.f32 %v3181, %v3239
      %v3268 = vadd.f32 %v3182, %v3240
      %v3269 = vadd.f32 %v3183, %v3241
      %v3270 = vadd.f32 %v3184, %v3242
      %v3271 = vadd.f32 %v3185, %v3243
      %v3272 = vadd.f32 %v3186, %v3244
      %v3273 = vadd.f32 %v3187, %v3245
      %v3274 = vadd.f32 %v3188, %v3246
      %v3275 = vadd.f32 %v3189, %v3247
      %v3276 = vadd.f32 %v3190, %v3248
      %v3277 = vadd.f32 %v3191, %v3249
      %v3278 = vadd.f32 %v3192, %v3250
      %v3279 = vadd.f32 %v3193, %v3251
      %v3280 = vadd.f32 %v3194, %v3252
      %v3281 = vadd.f32 %v3195, %v3253
      %v3282 = vadd.f32 %v3196, %v3254
      %v3283 = vadd.f32 %v3197, %v3255
      %v3284 = vadd.f32 %v3198, %v3256
      %v3285 = vadd.f32 %v3199, %v3257
      %v3286 = vadd.f32 %v3200, %v3258
      %v3287 = vadd.f32 %v3201, %v3259
      %v3288 = vadd.f32 %v3202, %v3260
      %v3289 = vadd.f32 %v3203, %v3261
      %s3290 = scalar_lea.vmem %s143, 224
      %3291 = vst [vmem:[%s3290] sm:$0xff] %v3262
      %3292 = vst [vmem:[%s3290 + $0x8] sm:$0x3f] %v3263
      %3293 = vst [vmem:[%s3290 + $0x10] sm:$0xff] %v3264
      %3294 = vst [vmem:[%s3290 + $0x18] sm:$0x3f] %v3265
      %3295 = vst [vmem:[%s3290 + $0x20] sm:$0xff] %v3266
      %3296 = vst [vmem:[%s3290 + $0x28] sm:$0x3f] %v3267
      %3297 = vst [vmem:[%s3290 + $0x30] sm:$0xff] %v3268
      %3298 = vst [vmem:[%s3290 + $0x38] sm:$0x3f] %v3269
      %3299 = vst [vmem:[%s3290 + $0x40] sm:$0xff] %v3270
      %3300 = vst [vmem:[%s3290 + $0x48] sm:$0x3f] %v3271
      %3301 = vst [vmem:[%s3290 + $0x50] sm:$0xff] %v3272
      %3302 = vst [vmem:[%s3290 + $0x58] sm:$0x3f] %v3273
      %3303 = vst [vmem:[%s3290 + $0x60] sm:$0xff] %v3274
      %3304 = vst [vmem:[%s3290 + $0x68] sm:$0x3f] %v3275
      %3305 = vst [vmem:[%s3290 + $0x70] sm:$0xff] %v3276
      %3306 = vst [vmem:[%s3290 + $0x78] sm:$0x3f] %v3277
      %3307 = vst [vmem:[%s3290 + $0x80] sm:$0xff] %v3278
      %3308 = vst [vmem:[%s3290 + $0x88] sm:$0x3f] %v3279
      %3309 = vst [vmem:[%s3290 + $0x90] sm:$0xff] %v3280
      %3310 = vst [vmem:[%s3290 + $0x98] sm:$0x3f] %v3281
      %3311 = vst [vmem:[%s3290 + $0xa0] sm:$0xff] %v3282
      %3312 = vst [vmem:[%s3290 + $0xa8] sm:$0x3f] %v3283
      %3313 = vst [vmem:[%s3290 + $0xb0] sm:$0xff] %v3284
      %3314 = vst [vmem:[%s3290 + $0xb8] sm:$0x3f] %v3285
      %3315 = vst [vmem:[%s3290 + $0xc0] sm:$0xff] %v3286
      %3316 = vst [vmem:[%s3290 + $0xc8] sm:$0x3f] %v3287
      %3317 = vst [vmem:[%s3290 + $0xd0] sm:$0xff] %v3288
      %3318 = vst [vmem:[%s3290 + $0xd8] sm:$0x3f] %v3289
      %p3319 = scmp.lt.s32.totalorder %s13, 1
      %s3320 = scalar_select %p3319, %s13, 1
      %s3321 = smul.addr %s3320, 56
      %s3322 = smul.addr %s3321, 8
      %s3323 = scalar_lea.vmem %s2, %s3322
      // Predicated region
      $region29: #{group_conv2d_forward.1} parent=27 // pred_check
        %p3324 = pneg %p78
      $region30: #{group_conv2d_forward.1} parent=27 // pred_check_branch
        %3326 = sbr.rel (%p3324) target = $region32
      $region31: #{group_conv2d_forward.1} parent=27 // pred_region
        _
      $region32: #{group_conv2d_forward.1} parent=27 // pred_fallthru
        _
    $region28: #{group_conv2d_forward.1} parent=5 // pred_fallthru
      _
    %p3327 = scmp.le.s32.totalorder 2, %s8
    // Predicated region
    $region33: #{group_conv2d_forward.1} parent=5 // pred_check
      %p3328 = pneg %p3327
    $region34: #{group_conv2d_forward.1} parent=5 // pred_check_branch
      %3330 = sbr.rel (%p3328) target = $region36
    $region35: #{group_conv2d_forward.1} parent=5 // pred_region
      %s3331 = ssub.s32 %s8, 2
      // Predicated region
      $region37: #{group_conv2d_forward.1} parent=35 // pred_check
        %p3332 = pneg %p84
      $region38: #{group_conv2d_forward.1} parent=35 // pred_check_branch
        %3334 = sbr.rel (%p3332) target = $region40
      $region39: #{group_conv2d_forward.1} parent=35 // pred_region
        %p3335 = scmp.lt.s32.totalorder %s14, 1
        %s3336 = scalar_select %p3335, %s14, 1
        %s3337 = smul.addr %s3336, 56
        %s3338 = smul.addr %s3337, 8
        %s3339 = scalar_lea.vmem %s2, %s3338
      $region40: #{group_conv2d_forward.1} parent=35 // pred_fallthru
        _
    $region36: #{group_conv2d_forward.1} parent=5 // pred_fallthru
      _
  $region6: #{group_conv2d_forward.1} parent=0 // loop_footer
    %s12 = sadd.s32 1, %s8
  $region7: #{group_conv2d_forward.1} parent=0 // loop_footer_branch
    %7 = sbr.rel target = $region3
  $region8: #{group_conv2d_forward.1} parent=0 // loop_exit
    _

</llo_original>
